<compile_context>
chip_gen: v6e
topology: v6e:2x2x1
jax: 0.10.0
libtpu: 0.0.40
codegen_flags: <defaults>
</compile_context>

<pallas_src>
import jax
import jax.numpy as jnp
import numpy as np
from jax.experimental import pallas as pl
from jax.experimental.pallas import tpu as pltpu

HIDDEN_DIM = 256      # C
NUM_PROPOSALS = 100   # N
KERNEL_SIZE = 3       # K
PADDED_OUT = 128      # N + K = 103 padded up to a full lane group
LN_EPS = 1e-5


def dysepconv_kernel(q_ref, v_ref, w_ref, b_ref, gamma_ref, beta_ref, out_ref):
    """TB batch elements per grid step.

    q_ref:     (TB, N, C)   query block
    v_ref:     (TB, N, C)   value block (NOT padded)
    w_ref:     (C, P=128)   linear weight, columns reordered:
                              [0:N)   pointwise weights
                              [N:N+K) depthwise taps
                              [N+K:P) zero padding
    b_ref:     (1, P)       linear bias (same column order, zero padded)
    gamma_ref: (1, C)       LayerNorm scale
    beta_ref:  (1, C)       LayerNorm shift
    out_ref:   (TB, N, C)
    """
    N, C, K = NUM_PROPOSALS, HIDDEN_DIM, KERNEL_SIZE
    TB = q_ref.shape[0]

    # Hoisted loop-invariants (weights, bias, LN params, edge masks).
    w_bf = w_ref[...].astype(jnp.bfloat16)          # (C, P) bf16 MXU operand
    bias = b_ref[...]                               # (1, P) f32
    gamma = gamma_ref[...]                          # (1, C)
    beta = beta_ref[...]                            # (1, C)
    lane = jax.lax.broadcasted_iota(jnp.int32, (N, C), 1)
    left_valid = lane > 0          # position c has a valid c-1 neighbor
    right_valid = lane < C - 1     # position c has a valid c+1 neighbor

    # Static (unrolled) loop over the TB batch elements of this grid step.
    for b in range(TB):
        # --- dynamic conv weights: Linear(hidden -> N + K), bf16 MXU / f32 acc
        q = q_ref[b].astype(jnp.bfloat16)                            # (N, C)
        dyw = jnp.dot(q, w_bf, preferred_element_type=jnp.float32)   # (N, P)
        dyw = dyw + bias

        # --- depthwise conv1d along C (cross-correlation, padding='same',
        #     groups=N); taps live in lanes [N, N+K).  Shifts via XLU roll
        #     + edge masks replace the old zero-padded 258-lane value.
        v = v_ref[b].astype(jnp.float32)                             # (N, C)
        w0 = dyw[:, N + 0:N + 1]       # multiplies v[:, c-1]
        w1 = dyw[:, N + 1:N + 2]       # multiplies v[:, c]
        w2 = dyw[:, N + 2:N + 3]       # multiplies v[:, c+1]
        v_left = jnp.where(left_valid, pltpu.roll(v, 1, axis=1), 0.0)
        v_right = jnp.where(right_valid, pltpu.roll(v, C - 1, axis=1), 0.0)
        depth = jnp.maximum(w1 * v + w0 * v_left + w2 * v_right, 0.0)  # ReLU

        # --- pointwise conv1d (kernel_size=1) == matmul over proposal axis.
        #     pw is a lane-aligned slice starting at lane 0.
        pw = dyw[:, :N].astype(jnp.bfloat16)                         # (N, N)
        point = jnp.dot(pw, depth.astype(jnp.bfloat16),
                        preferred_element_type=jnp.float32)          # (N, C)

        # --- LayerNorm over C (biased variance), single fused-stats pass.
        s1 = jnp.sum(point, axis=-1, keepdims=True)
        s2 = jnp.sum(point * point, axis=-1, keepdims=True)
        mean = s1 * (1.0 / C)
        var = s2 * (1.0 / C) - mean * mean
        inv = jax.lax.rsqrt(var + LN_EPS)
        y = (point - mean) * inv * gamma + beta

        out_ref[b] = y.astype(out_ref.dtype)


def _pick_tb(batch, tb_max=8):
    """Largest divisor of `batch` <= tb_max, preferring a grid length >= 2."""
    divs = [d for d in range(1, min(batch, tb_max) + 1) if batch % d == 0]
    tb = divs[-1]
    if batch // tb < 2:
        smaller = [d for d in divs if batch // d >= 2]
        if smaller:
            tb = smaller[-1]
    return tb


def dysep_conv_atten(query, value, w_lin, b_lin, gamma, beta):
    """query, value: (B, N, C) float32. Returns (B, N, C) float32.

    w_lin: (C, N+K) (already transposed for x @ W), b_lin: (N+K,).
    """
    B, N, C = query.shape
    K, P = KERNEL_SIZE, PADDED_OUT
    assert (N, C) == (NUM_PROPOSALS, HIDDEN_DIM)

    TB = _pick_tb(B)
    grid = (B // TB,)

    # Reorder linear columns: pointwise weights first (lanes 0:N, aligned),
    # depthwise taps next (lanes N:N+K), then zero-pad to 128 lanes.
    w_re = jnp.concatenate([w_lin[:, K:], w_lin[:, :K]], axis=1)      # (C, N+K)
    w_p = jnp.pad(w_re, ((0, 0), (0, P - (N + K))))                   # (C, P)
    b_re = jnp.concatenate([b_lin[K:], b_lin[:K]])                    # (N+K,)
    b_p = jnp.pad(b_re, (0, P - (N + K))).reshape(1, P)               # (1, P)
    g2 = gamma.reshape(1, C)
    be2 = beta.reshape(1, C)

    grid_spec = pltpu.PrefetchScalarGridSpec(
        num_scalar_prefetch=0,
        grid=grid,
        in_specs=[
            pl.BlockSpec((TB, N, C), lambda i: (i, 0, 0)),   # query
            pl.BlockSpec((TB, N, C), lambda i: (i, 0, 0)),   # value
            pl.BlockSpec((C, P), lambda i: (0, 0)),          # linear W (reordered)
            pl.BlockSpec((1, P), lambda i: (0, 0)),          # linear b
            pl.BlockSpec((1, C), lambda i: (0, 0)),          # ln gamma
            pl.BlockSpec((1, C), lambda i: (0, 0)),          # ln beta
        ],
        out_specs=pl.BlockSpec((TB, N, C), lambda i: (i, 0, 0)),
    )

    return pl.pallas_call(
        dysepconv_kernel,
        out_shape=jax.ShapeDtypeStruct((B, N, C), jnp.float32),
        grid_spec=grid_spec,
        compiler_params=pltpu.CompilerParams(
            dimension_semantics=("parallel",),
            vmem_limit_bytes=32 * 1024 * 1024,
        ),
    )(query, value, w_p, b_p, g2, be2)


def reference(query, value, w_lin, b_lin, gamma, beta):
    """Pure-JAX fp32 reference mirroring the PyTorch forward."""
    B, N, C = query.shape
    K = KERNEL_SIZE
    hp = jax.lax.Precision.HIGHEST
    dyw = jnp.einsum("bnc,ck->bnk", query, w_lin, precision=hp) + b_lin
    dw = dyw[:, :, :K]                                   # (B, N, K)
    pw = dyw[:, :, K:]                                   # (B, N, N)
    vpad = jnp.pad(value, ((0, 0), (0, 0), (1, 1)))
    depth = jnp.zeros((B, N, C), jnp.float32)
    for k in range(K):
        depth = depth + dw[:, :, k:k + 1] * vpad[:, :, k:k + C]
    depth = jnp.maximum(depth, 0.0)
    point = jnp.einsum("bmn,bnc->bmc", pw, depth, precision=hp)
    mean = jnp.mean(point, axis=-1, keepdims=True)
    xc = point - mean
    var = jnp.mean(xc * xc, axis=-1, keepdims=True)
    return xc * jax.lax.rsqrt(var + LN_EPS) * gamma + beta


if __name__ == "__main__":
    B, N, C, K = 8, NUM_PROPOSALS, HIDDEN_DIM, KERNEL_SIZE

    key = jax.random.PRNGKey(0)
    kq, kv, kw, kb = jax.random.split(key, 4)

    # deterministic parameter init (PyTorch Linear-style uniform bounds)
    bound = 1.0 / np.sqrt(C)
    w_lin = jax.random.uniform(kw, (C, N + K), jnp.float32, -bound, bound)
    b_lin = jax.random.uniform(kb, (N + K,), jnp.float32, -bound, bound)
    gamma = jnp.ones((C,), jnp.float32)   # LayerNorm default init
    beta = jnp.zeros((C,), jnp.float32)

    query = jax.random.normal(kq, (B, N, C), jnp.float32)
    value = jax.random.normal(kv, (B, N, C), jnp.float32)

    out = dysep_conv_atten(query, value, w_lin, b_lin, gamma, beta)
    out = jax.block_until_ready(out)

    ref = reference(query, value, w_lin, b_lin, gamma, beta)
    # Tolerance reflects the intentional bf16 MXU operands (fp32 accumulation)
    # in the kernel vs. the fp32 reference; structural errors would be O(1).
    np.testing.assert_allclose(np.asarray(out), np.asarray(ref),
                               rtol=5e-2, atol=5e-2)

    print("KERNEL_OK")
</pallas_src>

<mosaic_0001>
module attributes {stable_mosaic.version = 11 : i64} {
  func.func @dysepconv_kernel(%arg0: i32, %arg1: memref<4x100x256xf32, #tpu.memory_space<vmem>>, %arg2: memref<4x100x256xf32, #tpu.memory_space<vmem>>, %arg3: memref<256x128xf32, #tpu.memory_space<vmem>>, %arg4: memref<1x128xf32, #tpu.memory_space<vmem>>, %arg5: memref<1x256xf32, #tpu.memory_space<vmem>>, %arg6: memref<1x256xf32, #tpu.memory_space<vmem>>, %arg7: memref<4x100x256xf32, #tpu.memory_space<vmem>>) attributes {dimension_semantics = [#tpu.dimension_semantics<parallel>], iteration_bounds = array<i64: 2>, scalar_prefetch = 0 : i64, scratch_operands = 0 : i64, tpu.core_type = #tpu.core_type<tc>, window_params = [{transform_indices = @transform_0, window_bounds = array<i64: 4, 100, 256>}, {transform_indices = @transform_1, window_bounds = array<i64: 4, 100, 256>}, {pipeline_mode = #tpu.pipeline_mode<synchronous>, transform_indices = @transform_2, window_bounds = array<i64: 256, 128>}, {pipeline_mode = #tpu.pipeline_mode<synchronous>, transform_indices = @transform_3, window_bounds = array<i64: 1, 128>}, {pipeline_mode = #tpu.pipeline_mode<synchronous>, transform_indices = @transform_4, window_bounds = array<i64: 1, 256>}, {pipeline_mode = #tpu.pipeline_mode<synchronous>, transform_indices = @transform_5, window_bounds = array<i64: 1, 256>}, {transform_indices = @transform_6, window_bounds = array<i64: 4, 100, 256>}]} {
    %c0 = arith.constant 0 : index
    %c0_0 = arith.constant 0 : index
    %0 = vector.load %arg3[%c0, %c0_0] : memref<256x128xf32, #tpu.memory_space<vmem>>, vector<256x128xf32>
    %1 = arith.truncf %0 : vector<256x128xf32> to vector<256x128xbf16>
    %c0_1 = arith.constant 0 : index
    %c0_2 = arith.constant 0 : index
    %2 = vector.load %arg4[%c0_1, %c0_2] : memref<1x128xf32, #tpu.memory_space<vmem>>, vector<1x128xf32>
    %c0_3 = arith.constant 0 : index
    %c0_4 = arith.constant 0 : index
    %3 = vector.load %arg5[%c0_3, %c0_4] : memref<1x256xf32, #tpu.memory_space<vmem>>, vector<1x256xf32>
    %c0_5 = arith.constant 0 : index
    %c0_6 = arith.constant 0 : index
    %4 = vector.load %arg6[%c0_5, %c0_6] : memref<1x256xf32, #tpu.memory_space<vmem>>, vector<1x256xf32>
    %5 = tpu.iota {dimensions = array<i32: 1>} : vector<100x256xi32>
    %c0_i32 = arith.constant 0 : i32
    %6 = vector.broadcast %c0_i32 : i32 to vector<100x256xi32>
    %7 = arith.cmpi sgt, %5, %6 : vector<100x256xi32>
    %c255_i32 = arith.constant 255 : i32
    %8 = vector.broadcast %c255_i32 : i32 to vector<100x256xi32>
    %9 = arith.cmpi slt, %5, %8 : vector<100x256xi32>
    %c0_7 = arith.constant 0 : index
    %c0_8 = arith.constant 0 : index
    %c0_9 = arith.constant 0 : index
    %10 = vector.load %arg1[%c0_7, %c0_8, %c0_9] : memref<4x100x256xf32, #tpu.memory_space<vmem>>, vector<1x100x256xf32>
    %11 = vector.shape_cast %10 : vector<1x100x256xf32> to vector<100x256xf32>
    %12 = arith.truncf %11 : vector<100x256xf32> to vector<100x256xbf16>
    %cst = arith.constant dense<0.000000e+00> : vector<100x128xf32>
    %13 = tpu.matmul %12, %1, %cst {dimension_numbers = #tpu.dot_dimension_numbers<[1], [0], [0], [1], [0, 0, 1, 1], [], []>} : vector<100x256xbf16>, vector<256x128xbf16>, vector<100x128xf32> -> vector<100x128xf32>
    %14 = vector.broadcast %2 : vector<1x128xf32> to vector<100x128xf32>
    %15 = arith.addf %13, %14 : vector<100x128xf32>
    %c0_10 = arith.constant 0 : index
    %c0_11 = arith.constant 0 : index
    %c0_12 = arith.constant 0 : index
    %16 = vector.load %arg2[%c0_10, %c0_11, %c0_12] : memref<4x100x256xf32, #tpu.memory_space<vmem>>, vector<1x100x256xf32>
    %17 = vector.shape_cast %16 : vector<1x100x256xf32> to vector<100x256xf32>
    %18 = vector.extract_strided_slice %15 {offsets = [0, 100], sizes = [100, 1], strides = [1, 1]} : vector<100x128xf32> to vector<100x1xf32>
    %19 = vector.extract_strided_slice %15 {offsets = [0, 101], sizes = [100, 1], strides = [1, 1]} : vector<100x128xf32> to vector<100x1xf32>
    %20 = vector.extract_strided_slice %15 {offsets = [0, 102], sizes = [100, 1], strides = [1, 1]} : vector<100x128xf32> to vector<100x1xf32>
    %c1_i32 = arith.constant 1 : i32
    %21 = tpu.dynamic_rotate %17 by %c1_i32 dim 1 : vector<100x256xf32>, i32 -> vector<100x256xf32>
    %cst_13 = arith.constant 0.000000e+00 : f32
    %22 = vector.broadcast %cst_13 : f32 to vector<100x256xf32>
    %23 = arith.select %7, %21, %22 : vector<100x256xi1>, vector<100x256xf32>
    %c255_i32_14 = arith.constant 255 : i32
    %24 = tpu.dynamic_rotate %17 by %c255_i32_14 dim 1 : vector<100x256xf32>, i32 -> vector<100x256xf32>
    %cst_15 = arith.constant 0.000000e+00 : f32
    %25 = vector.broadcast %cst_15 : f32 to vector<100x256xf32>
    %26 = arith.select %9, %24, %25 : vector<100x256xi1>, vector<100x256xf32>
    %27 = vector.broadcast %19 : vector<100x1xf32> to vector<100x256xf32>
    %28 = arith.mulf %27, %17 : vector<100x256xf32>
    %29 = vector.broadcast %18 : vector<100x1xf32> to vector<100x256xf32>
    %30 = arith.mulf %29, %23 : vector<100x256xf32>
    %31 = arith.addf %28, %30 : vector<100x256xf32>
    %32 = vector.broadcast %20 : vector<100x1xf32> to vector<100x256xf32>
    %33 = arith.mulf %32, %26 : vector<100x256xf32>
    %34 = arith.addf %31, %33 : vector<100x256xf32>
    %cst_16 = arith.constant 0.000000e+00 : f32
    %35 = vector.broadcast %cst_16 : f32 to vector<100x256xf32>
    %36 = arith.maximumf %34, %35 : vector<100x256xf32>
    %37 = vector.extract_strided_slice %15 {offsets = [0, 0], sizes = [100, 100], strides = [1, 1]} : vector<100x128xf32> to vector<100x100xf32>
    %38 = arith.truncf %37 : vector<100x100xf32> to vector<100x100xbf16>
    %39 = arith.truncf %36 : vector<100x256xf32> to vector<100x256xbf16>
    %cst_17 = arith.constant dense<0.000000e+00> : vector<100x256xf32>
    %40 = tpu.matmul %38, %39, %cst_17 {dimension_numbers = #tpu.dot_dimension_numbers<[1], [0], [0], [1], [0, 0, 1, 1], [], []>} : vector<100x100xbf16>, vector<100x256xbf16>, vector<100x256xf32> -> vector<100x256xf32>
    %cst_18 = arith.constant dense<0.000000e+00> : vector<100xf32>
    %41 = vector.multi_reduction <add>, %40, %cst_18 [1] : vector<100x256xf32> to vector<100xf32>
    %42 = vector.shape_cast %41 : vector<100xf32> to vector<100x1xf32>
    %43 = arith.mulf %40, %40 : vector<100x256xf32>
    %cst_19 = arith.constant dense<0.000000e+00> : vector<100xf32>
    %44 = vector.multi_reduction <add>, %43, %cst_19 [1] : vector<100x256xf32> to vector<100xf32>
    %45 = vector.shape_cast %44 : vector<100xf32> to vector<100x1xf32>
    %cst_20 = arith.constant 3.906250e-03 : f32
    %46 = vector.broadcast %cst_20 : f32 to vector<100x1xf32>
    %47 = arith.mulf %42, %46 : vector<100x1xf32>
    %cst_21 = arith.constant 3.906250e-03 : f32
    %48 = vector.broadcast %cst_21 : f32 to vector<100x1xf32>
    %49 = arith.mulf %45, %48 : vector<100x1xf32>
    %50 = arith.mulf %47, %47 : vector<100x1xf32>
    %51 = arith.subf %49, %50 : vector<100x1xf32>
    %cst_22 = arith.constant 9.99999974E-6 : f32
    %52 = vector.broadcast %cst_22 : f32 to vector<100x1xf32>
    %53 = arith.addf %51, %52 : vector<100x1xf32>
    %54 = math.rsqrt %53 : vector<100x1xf32>
    %55 = vector.broadcast %47 : vector<100x1xf32> to vector<100x256xf32>
    %56 = arith.subf %40, %55 : vector<100x256xf32>
    %57 = vector.broadcast %54 : vector<100x1xf32> to vector<100x256xf32>
    %58 = arith.mulf %56, %57 : vector<100x256xf32>
    %59 = vector.broadcast %3 : vector<1x256xf32> to vector<100x256xf32>
    %60 = arith.mulf %58, %59 : vector<100x256xf32>
    %61 = vector.broadcast %4 : vector<1x256xf32> to vector<100x256xf32>
    %62 = arith.addf %60, %61 : vector<100x256xf32>
    %c0_23 = arith.constant 0 : index
    %c0_24 = arith.constant 0 : index
    %c0_25 = arith.constant 0 : index
    %63 = vector.load %arg7[%c0_23, %c0_24, %c0_25] : memref<4x100x256xf32, #tpu.memory_space<vmem>>, vector<1x100x256xf32>
    %64 = vector.shape_cast %63 : vector<1x100x256xf32> to vector<100x256xf32>
    %65 = vector.shape_cast %62 : vector<100x256xf32> to vector<1x100x256xf32>
    tpu.vector_store %arg7[%c0_23, %c0_24, %c0_25], %65 {strides = array<i32>} : memref<4x100x256xf32, #tpu.memory_space<vmem>>, vector<1x100x256xf32>,
    %c1 = arith.constant 1 : index
    %c0_26 = arith.constant 0 : index
    %c0_27 = arith.constant 0 : index
    %66 = vector.load %arg1[%c1, %c0_26, %c0_27] : memref<4x100x256xf32, #tpu.memory_space<vmem>>, vector<1x100x256xf32>
    %67 = vector.shape_cast %66 : vector<1x100x256xf32> to vector<100x256xf32>
    %68 = arith.truncf %67 : vector<100x256xf32> to vector<100x256xbf16>
    %cst_28 = arith.constant dense<0.000000e+00> : vector<100x128xf32>
    %69 = tpu.matmul %68, %1, %cst_28 {dimension_numbers = #tpu.dot_dimension_numbers<[1], [0], [0], [1], [0, 0, 1, 1], [], []>} : vector<100x256xbf16>, vector<256x128xbf16>, vector<100x128xf32> -> vector<100x128xf32>
    %70 = vector.broadcast %2 : vector<1x128xf32> to vector<100x128xf32>
    %71 = arith.addf %69, %70 : vector<100x128xf32>
    %c1_29 = arith.constant 1 : index
    %c0_30 = arith.constant 0 : index
    %c0_31 = arith.constant 0 : index
    %72 = vector.load %arg2[%c1_29, %c0_30, %c0_31] : memref<4x100x256xf32, #tpu.memory_space<vmem>>, vector<1x100x256xf32>
    %73 = vector.shape_cast %72 : vector<1x100x256xf32> to vector<100x256xf32>
    %74 = vector.extract_strided_slice %71 {offsets = [0, 100], sizes = [100, 1], strides = [1, 1]} : vector<100x128xf32> to vector<100x1xf32>
    %75 = vector.extract_strided_slice %71 {offsets = [0, 101], sizes = [100, 1], strides = [1, 1]} : vector<100x128xf32> to vector<100x1xf32>
    %76 = vector.extract_strided_slice %71 {offsets = [0, 102], sizes = [100, 1], strides = [1, 1]} : vector<100x128xf32> to vector<100x1xf32>
    %c1_i32_32 = arith.constant 1 : i32
    %77 = tpu.dynamic_rotate %73 by %c1_i32_32 dim 1 : vector<100x256xf32>, i32 -> vector<100x256xf32>
    %cst_33 = arith.constant 0.000000e+00 : f32
    %78 = vector.broadcast %cst_33 : f32 to vector<100x256xf32>
    %79 = arith.select %7, %77, %78 : vector<100x256xi1>, vector<100x256xf32>
    %c255_i32_34 = arith.constant 255 : i32
    %80 = tpu.dynamic_rotate %73 by %c255_i32_34 dim 1 : vector<100x256xf32>, i32 -> vector<100x256xf32>
    %cst_35 = arith.constant 0.000000e+00 : f32
    %81 = vector.broadcast %cst_35 : f32 to vector<100x256xf32>
    %82 = arith.select %9, %80, %81 : vector<100x256xi1>, vector<100x256xf32>
    %83 = vector.broadcast %75 : vector<100x1xf32> to vector<100x256xf32>
    %84 = arith.mulf %83, %73 : vector<100x256xf32>
    %85 = vector.broadcast %74 : vector<100x1xf32> to vector<100x256xf32>
    %86 = arith.mulf %85, %79 : vector<100x256xf32>
    %87 = arith.addf %84, %86 : vector<100x256xf32>
    %88 = vector.broadcast %76 : vector<100x1xf32> to vector<100x256xf32>
    %89 = arith.mulf %88, %82 : vector<100x256xf32>
    %90 = arith.addf %87, %89 : vector<100x256xf32>
    %cst_36 = arith.constant 0.000000e+00 : f32
    %91 = vector.broadcast %cst_36 : f32 to vector<100x256xf32>
    %92 = arith.maximumf %90, %91 : vector<100x256xf32>
    %93 = vector.extract_strided_slice %71 {offsets = [0, 0], sizes = [100, 100], strides = [1, 1]} : vector<100x128xf32> to vector<100x100xf32>
    %94 = arith.truncf %93 : vector<100x100xf32> to vector<100x100xbf16>
    %95 = arith.truncf %92 : vector<100x256xf32> to vector<100x256xbf16>
    %cst_37 = arith.constant dense<0.000000e+00> : vector<100x256xf32>
    %96 = tpu.matmul %94, %95, %cst_37 {dimension_numbers = #tpu.dot_dimension_numbers<[1], [0], [0], [1], [0, 0, 1, 1], [], []>} : vector<100x100xbf16>, vector<100x256xbf16>, vector<100x256xf32> -> vector<100x256xf32>
    %cst_38 = arith.constant dense<0.000000e+00> : vector<100xf32>
    %97 = vector.multi_reduction <add>, %96, %cst_38 [1] : vector<100x256xf32> to vector<100xf32>
    %98 = vector.shape_cast %97 : vector<100xf32> to vector<100x1xf32>
    %99 = arith.mulf %96, %96 : vector<100x256xf32>
    %cst_39 = arith.constant dense<0.000000e+00> : vector<100xf32>
    %100 = vector.multi_reduction <add>, %99, %cst_39 [1] : vector<100x256xf32> to vector<100xf32>
    %101 = vector.shape_cast %100 : vector<100xf32> to vector<100x1xf32>
    %cst_40 = arith.constant 3.906250e-03 : f32
    %102 = vector.broadcast %cst_40 : f32 to vector<100x1xf32>
    %103 = arith.mulf %98, %102 : vector<100x1xf32>
    %cst_41 = arith.constant 3.906250e-03 : f32
    %104 = vector.broadcast %cst_41 : f32 to vector<100x1xf32>
    %105 = arith.mulf %101, %104 : vector<100x1xf32>
    %106 = arith.mulf %103, %103 : vector<100x1xf32>
    %107 = arith.subf %105, %106 : vector<100x1xf32>
    %cst_42 = arith.constant 9.99999974E-6 : f32
    %108 = vector.broadcast %cst_42 : f32 to vector<100x1xf32>
    %109 = arith.addf %107, %108 : vector<100x1xf32>
    %110 = math.rsqrt %109 : vector<100x1xf32>
    %111 = vector.broadcast %103 : vector<100x1xf32> to vector<100x256xf32>
    %112 = arith.subf %96, %111 : vector<100x256xf32>
    %113 = vector.broadcast %110 : vector<100x1xf32> to vector<100x256xf32>
    %114 = arith.mulf %112, %113 : vector<100x256xf32>
    %115 = vector.broadcast %3 : vector<1x256xf32> to vector<100x256xf32>
    %116 = arith.mulf %114, %115 : vector<100x256xf32>
    %117 = vector.broadcast %4 : vector<1x256xf32> to vector<100x256xf32>
    %118 = arith.addf %116, %117 : vector<100x256xf32>
    %c1_43 = arith.constant 1 : index
    %c0_44 = arith.constant 0 : index
    %c0_45 = arith.constant 0 : index
    %119 = vector.load %arg7[%c1_43, %c0_44, %c0_45] : memref<4x100x256xf32, #tpu.memory_space<vmem>>, vector<1x100x256xf32>
    %120 = vector.shape_cast %119 : vector<1x100x256xf32> to vector<100x256xf32>
    %121 = vector.shape_cast %118 : vector<100x256xf32> to vector<1x100x256xf32>
    tpu.vector_store %arg7[%c1_43, %c0_44, %c0_45], %121 {strides = array<i32>} : memref<4x100x256xf32, #tpu.memory_space<vmem>>, vector<1x100x256xf32>,
    %c2 = arith.constant 2 : index
    %c0_46 = arith.constant 0 : index
    %c0_47 = arith.constant 0 : index
    %122 = vector.load %arg1[%c2, %c0_46, %c0_47] : memref<4x100x256xf32, #tpu.memory_space<vmem>>, vector<1x100x256xf32>
    %123 = vector.shape_cast %122 : vector<1x100x256xf32> to vector<100x256xf32>
    %124 = arith.truncf %123 : vector<100x256xf32> to vector<100x256xbf16>
    %cst_48 = arith.constant dense<0.000000e+00> : vector<100x128xf32>
    %125 = tpu.matmul %124, %1, %cst_48 {dimension_numbers = #tpu.dot_dimension_numbers<[1], [0], [0], [1], [0, 0, 1, 1], [], []>} : vector<100x256xbf16>, vector<256x128xbf16>, vector<100x128xf32> -> vector<100x128xf32>
    %126 = vector.broadcast %2 : vector<1x128xf32> to vector<100x128xf32>
    %127 = arith.addf %125, %126 : vector<100x128xf32>
    %c2_49 = arith.constant 2 : index
    %c0_50 = arith.constant 0 : index
    %c0_51 = arith.constant 0 : index
    %128 = vector.load %arg2[%c2_49, %c0_50, %c0_51] : memref<4x100x256xf32, #tpu.memory_space<vmem>>, vector<1x100x256xf32>
    %129 = vector.shape_cast %128 : vector<1x100x256xf32> to vector<100x256xf32>
    %130 = vector.extract_strided_slice %127 {offsets = [0, 100], sizes = [100, 1], strides = [1, 1]} : vector<100x128xf32> to vector<100x1xf32>
    %131 = vector.extract_strided_slice %127 {offsets = [0, 101], sizes = [100, 1], strides = [1, 1]} : vector<100x128xf32> to vector<100x1xf32>
    %132 = vector.extract_strided_slice %127 {offsets = [0, 102], sizes = [100, 1], strides = [1, 1]} : vector<100x128xf32> to vector<100x1xf32>
    %c1_i32_52 = arith.constant 1 : i32
    %133 = tpu.dynamic_rotate %129 by %c1_i32_52 dim 1 : vector<100x256xf32>, i32 -> vector<100x256xf32>
    %cst_53 = arith.constant 0.000000e+00 : f32
    %134 = vector.broadcast %cst_53 : f32 to vector<100x256xf32>
    %135 = arith.select %7, %133, %134 : vector<100x256xi1>, vector<100x256xf32>
    %c255_i32_54 = arith.constant 255 : i32
    %136 = tpu.dynamic_rotate %129 by %c255_i32_54 dim 1 : vector<100x256xf32>, i32 -> vector<100x256xf32>
    %cst_55 = arith.constant 0.000000e+00 : f32
    %137 = vector.broadcast %cst_55 : f32 to vector<100x256xf32>
    %138 = arith.select %9, %136, %137 : vector<100x256xi1>, vector<100x256xf32>
    %139 = vector.broadcast %131 : vector<100x1xf32> to vector<100x256xf32>
    %140 = arith.mulf %139, %129 : vector<100x256xf32>
    %141 = vector.broadcast %130 : vector<100x1xf32> to vector<100x256xf32>
    %142 = arith.mulf %141, %135 : vector<100x256xf32>
    %143 = arith.addf %140, %142 : vector<100x256xf32>
    %144 = vector.broadcast %132 : vector<100x1xf32> to vector<100x256xf32>
    %145 = arith.mulf %144, %138 : vector<100x256xf32>
    %146 = arith.addf %143, %145 : vector<100x256xf32>
    %cst_56 = arith.constant 0.000000e+00 : f32
    %147 = vector.broadcast %cst_56 : f32 to vector<100x256xf32>
    %148 = arith.maximumf %146, %147 : vector<100x256xf32>
    %149 = vector.extract_strided_slice %127 {offsets = [0, 0], sizes = [100, 100], strides = [1, 1]} : vector<100x128xf32> to vector<100x100xf32>
    %150 = arith.truncf %149 : vector<100x100xf32> to vector<100x100xbf16>
    %151 = arith.truncf %148 : vector<100x256xf32> to vector<100x256xbf16>
    %cst_57 = arith.constant dense<0.000000e+00> : vector<100x256xf32>
    %152 = tpu.matmul %150, %151, %cst_57 {dimension_numbers = #tpu.dot_dimension_numbers<[1], [0], [0], [1], [0, 0, 1, 1], [], []>} : vector<100x100xbf16>, vector<100x256xbf16>, vector<100x256xf32> -> vector<100x256xf32>
    %cst_58 = arith.constant dense<0.000000e+00> : vector<100xf32>
    %153 = vector.multi_reduction <add>, %152, %cst_58 [1] : vector<100x256xf32> to vector<100xf32>
    %154 = vector.shape_cast %153 : vector<100xf32> to vector<100x1xf32>
    %155 = arith.mulf %152, %152 : vector<100x256xf32>
    %cst_59 = arith.constant dense<0.000000e+00> : vector<100xf32>
    %156 = vector.multi_reduction <add>, %155, %cst_59 [1] : vector<100x256xf32> to vector<100xf32>
    %157 = vector.shape_cast %156 : vector<100xf32> to vector<100x1xf32>
    %cst_60 = arith.constant 3.906250e-03 : f32
    %158 = vector.broadcast %cst_60 : f32 to vector<100x1xf32>
    %159 = arith.mulf %154, %158 : vector<100x1xf32>
    %cst_61 = arith.constant 3.906250e-03 : f32
    %160 = vector.broadcast %cst_61 : f32 to vector<100x1xf32>
    %161 = arith.mulf %157, %160 : vector<100x1xf32>
    %162 = arith.mulf %159, %159 : vector<100x1xf32>
    %163 = arith.subf %161, %162 : vector<100x1xf32>
    %cst_62 = arith.constant 9.99999974E-6 : f32
    %164 = vector.broadcast %cst_62 : f32 to vector<100x1xf32>
    %165 = arith.addf %163, %164 : vector<100x1xf32>
    %166 = math.rsqrt %165 : vector<100x1xf32>
    %167 = vector.broadcast %159 : vector<100x1xf32> to vector<100x256xf32>
    %168 = arith.subf %152, %167 : vector<100x256xf32>
    %169 = vector.broadcast %166 : vector<100x1xf32> to vector<100x256xf32>
    %170 = arith.mulf %168, %169 : vector<100x256xf32>
    %171 = vector.broadcast %3 : vector<1x256xf32> to vector<100x256xf32>
    %172 = arith.mulf %170, %171 : vector<100x256xf32>
    %173 = vector.broadcast %4 : vector<1x256xf32> to vector<100x256xf32>
    %174 = arith.addf %172, %173 : vector<100x256xf32>
    %c2_63 = arith.constant 2 : index
    %c0_64 = arith.constant 0 : index
    %c0_65 = arith.constant 0 : index
    %175 = vector.load %arg7[%c2_63, %c0_64, %c0_65] : memref<4x100x256xf32, #tpu.memory_space<vmem>>, vector<1x100x256xf32>
    %176 = vector.shape_cast %175 : vector<1x100x256xf32> to vector<100x256xf32>
    %177 = vector.shape_cast %174 : vector<100x256xf32> to vector<1x100x256xf32>
    tpu.vector_store %arg7[%c2_63, %c0_64, %c0_65], %177 {strides = array<i32>} : memref<4x100x256xf32, #tpu.memory_space<vmem>>, vector<1x100x256xf32>,
    %c3 = arith.constant 3 : index
    %c0_66 = arith.constant 0 : index
    %c0_67 = arith.constant 0 : index
    %178 = vector.load %arg1[%c3, %c0_66, %c0_67] : memref<4x100x256xf32, #tpu.memory_space<vmem>>, vector<1x100x256xf32>
    %179 = vector.shape_cast %178 : vector<1x100x256xf32> to vector<100x256xf32>
    %180 = arith.truncf %179 : vector<100x256xf32> to vector<100x256xbf16>
    %cst_68 = arith.constant dense<0.000000e+00> : vector<100x128xf32>
    %181 = tpu.matmul %180, %1, %cst_68 {dimension_numbers = #tpu.dot_dimension_numbers<[1], [0], [0], [1], [0, 0, 1, 1], [], []>} : vector<100x256xbf16>, vector<256x128xbf16>, vector<100x128xf32> -> vector<100x128xf32>
    %182 = vector.broadcast %2 : vector<1x128xf32> to vector<100x128xf32>
    %183 = arith.addf %181, %182 : vector<100x128xf32>
    %c3_69 = arith.constant 3 : index
    %c0_70 = arith.constant 0 : index
    %c0_71 = arith.constant 0 : index
    %184 = vector.load %arg2[%c3_69, %c0_70, %c0_71] : memref<4x100x256xf32, #tpu.memory_space<vmem>>, vector<1x100x256xf32>
    %185 = vector.shape_cast %184 : vector<1x100x256xf32> to vector<100x256xf32>
    %186 = vector.extract_strided_slice %183 {offsets = [0, 100], sizes = [100, 1], strides = [1, 1]} : vector<100x128xf32> to vector<100x1xf32>
    %187 = vector.extract_strided_slice %183 {offsets = [0, 101], sizes = [100, 1], strides = [1, 1]} : vector<100x128xf32> to vector<100x1xf32>
    %188 = vector.extract_strided_slice %183 {offsets = [0, 102], sizes = [100, 1], strides = [1, 1]} : vector<100x128xf32> to vector<100x1xf32>
    %c1_i32_72 = arith.constant 1 : i32
    %189 = tpu.dynamic_rotate %185 by %c1_i32_72 dim 1 : vector<100x256xf32>, i32 -> vector<100x256xf32>
    %cst_73 = arith.constant 0.000000e+00 : f32
    %190 = vector.broadcast %cst_73 : f32 to vector<100x256xf32>
    %191 = arith.select %7, %189, %190 : vector<100x256xi1>, vector<100x256xf32>
    %c255_i32_74 = arith.constant 255 : i32
    %192 = tpu.dynamic_rotate %185 by %c255_i32_74 dim 1 : vector<100x256xf32>, i32 -> vector<100x256xf32>
    %cst_75 = arith.constant 0.000000e+00 : f32
    %193 = vector.broadcast %cst_75 : f32 to vector<100x256xf32>
    %194 = arith.select %9, %192, %193 : vector<100x256xi1>, vector<100x256xf32>
    %195 = vector.broadcast %187 : vector<100x1xf32> to vector<100x256xf32>
    %196 = arith.mulf %195, %185 : vector<100x256xf32>
    %197 = vector.broadcast %186 : vector<100x1xf32> to vector<100x256xf32>
    %198 = arith.mulf %197, %191 : vector<100x256xf32>
    %199 = arith.addf %196, %198 : vector<100x256xf32>
    %200 = vector.broadcast %188 : vector<100x1xf32> to vector<100x256xf32>
    %201 = arith.mulf %200, %194 : vector<100x256xf32>
    %202 = arith.addf %199, %201 : vector<100x256xf32>
    %cst_76 = arith.constant 0.000000e+00 : f32
    %203 = vector.broadcast %cst_76 : f32 to vector<100x256xf32>
    %204 = arith.maximumf %202, %203 : vector<100x256xf32>
    %205 = vector.extract_strided_slice %183 {offsets = [0, 0], sizes = [100, 100], strides = [1, 1]} : vector<100x128xf32> to vector<100x100xf32>
    %206 = arith.truncf %205 : vector<100x100xf32> to vector<100x100xbf16>
    %207 = arith.truncf %204 : vector<100x256xf32> to vector<100x256xbf16>
    %cst_77 = arith.constant dense<0.000000e+00> : vector<100x256xf32>
    %208 = tpu.matmul %206, %207, %cst_77 {dimension_numbers = #tpu.dot_dimension_numbers<[1], [0], [0], [1], [0, 0, 1, 1], [], []>} : vector<100x100xbf16>, vector<100x256xbf16>, vector<100x256xf32> -> vector<100x256xf32>
    %cst_78 = arith.constant dense<0.000000e+00> : vector<100xf32>
    %209 = vector.multi_reduction <add>, %208, %cst_78 [1] : vector<100x256xf32> to vector<100xf32>
    %210 = vector.shape_cast %209 : vector<100xf32> to vector<100x1xf32>
    %211 = arith.mulf %208, %208 : vector<100x256xf32>
    %cst_79 = arith.constant dense<0.000000e+00> : vector<100xf32>
    %212 = vector.multi_reduction <add>, %211, %cst_79 [1] : vector<100x256xf32> to vector<100xf32>
    %213 = vector.shape_cast %212 : vector<100xf32> to vector<100x1xf32>
    %cst_80 = arith.constant 3.906250e-03 : f32
    %214 = vector.broadcast %cst_80 : f32 to vector<100x1xf32>
    %215 = arith.mulf %210, %214 : vector<100x1xf32>
    %cst_81 = arith.constant 3.906250e-03 : f32
    %216 = vector.broadcast %cst_81 : f32 to vector<100x1xf32>
    %217 = arith.mulf %213, %216 : vector<100x1xf32>
    %218 = arith.mulf %215, %215 : vector<100x1xf32>
    %219 = arith.subf %217, %218 : vector<100x1xf32>
    %cst_82 = arith.constant 9.99999974E-6 : f32
    %220 = vector.broadcast %cst_82 : f32 to vector<100x1xf32>
    %221 = arith.addf %219, %220 : vector<100x1xf32>
    %222 = math.rsqrt %221 : vector<100x1xf32>
    %223 = vector.broadcast %215 : vector<100x1xf32> to vector<100x256xf32>
    %224 = arith.subf %208, %223 : vector<100x256xf32>
    %225 = vector.broadcast %222 : vector<100x1xf32> to vector<100x256xf32>
    %226 = arith.mulf %224, %225 : vector<100x256xf32>
    %227 = vector.broadcast %3 : vector<1x256xf32> to vector<100x256xf32>
    %228 = arith.mulf %226, %227 : vector<100x256xf32>
    %229 = vector.broadcast %4 : vector<1x256xf32> to vector<100x256xf32>
    %230 = arith.addf %228, %229 : vector<100x256xf32>
    %c3_83 = arith.constant 3 : index
    %c0_84 = arith.constant 0 : index
    %c0_85 = arith.constant 0 : index
    %231 = vector.load %arg7[%c3_83, %c0_84, %c0_85] : memref<4x100x256xf32, #tpu.memory_space<vmem>>, vector<1x100x256xf32>
    %232 = vector.shape_cast %231 : vector<1x100x256xf32> to vector<100x256xf32>
    %233 = vector.shape_cast %230 : vector<100x256xf32> to vector<1x100x256xf32>
    tpu.vector_store %arg7[%c3_83, %c0_84, %c0_85], %233 {strides = array<i32>} : memref<4x100x256xf32, #tpu.memory_space<vmem>>, vector<1x100x256xf32>,
    return
  }
  func.func @transform_0(%arg0: i32) -> (i32, i32, i32) {
    %c0_i32 = arith.constant 0 : i32
    %c0_i32_0 = arith.constant 0 : i32
    %c0_i32_1 = arith.constant 0 : i32
    return %arg0, %c0_i32, %c0_i32_0 : i32, i32, i32
  }
  func.func @transform_1(%arg0: i32) -> (i32, i32, i32) {
    %c0_i32 = arith.constant 0 : i32
    %c0_i32_0 = arith.constant 0 : i32
    %c0_i32_1 = arith.constant 0 : i32
    return %arg0, %c0_i32, %c0_i32_0 : i32, i32, i32
  }
  func.func @transform_2(%arg0: i32) -> (i32, i32) {
    %c0_i32 = arith.constant 0 : i32
    %c0_i32_0 = arith.constant 0 : i32
    %c0_i32_1 = arith.constant 0 : i32
    return %c0_i32, %c0_i32_0 : i32, i32
  }
  func.func @transform_3(%arg0: i32) -> (i32, i32) {
    %c0_i32 = arith.constant 0 : i32
    %c0_i32_0 = arith.constant 0 : i32
    %c0_i32_1 = arith.constant 0 : i32
    return %c0_i32, %c0_i32_0 : i32, i32
  }
  func.func @transform_4(%arg0: i32) -> (i32, i32) {
    %c0_i32 = arith.constant 0 : i32
    %c0_i32_0 = arith.constant 0 : i32
    %c0_i32_1 = arith.constant 0 : i32
    return %c0_i32, %c0_i32_0 : i32, i32
  }
  func.func @transform_5(%arg0: i32) -> (i32, i32) {
    %c0_i32 = arith.constant 0 : i32
    %c0_i32_0 = arith.constant 0 : i32
    %c0_i32_1 = arith.constant 0 : i32
    return %c0_i32, %c0_i32_0 : i32, i32
  }
  func.func @transform_6(%arg0: i32) -> (i32, i32, i32) {
    %c0_i32 = arith.constant 0 : i32
    %c0_i32_0 = arith.constant 0 : i32
    %c0_i32_1 = arith.constant 0 : i32
    return %arg0, %c0_i32, %c0_i32_0 : i32, i32, i32
  }
}

</mosaic_0001>

<llo_original>
// kernel: tpu_custom_call.1
$region0: #{tpu_custom_call.1}
  #allocation0 [shape = 'u32[]', space=smem, size = 0x4, offset = 0x4, fixed_abs, tag = 'smem constant byte address 0x4 - core index']
  #allocation1 [shape = 'u32[144,128]{1,0:T(1,128)}', space=vmem, size = 0x12000, scoped, tag = 'internal scratch']
  %s0 = inlined_call_operand.vmem [shape: f32[8,100,256], index: 0, kind: input, shape index: {}]
  %s1 = inlined_call_operand.vmem [shape: f32[8,100,256], index: 1, kind: input, shape index: {}]
  %s2 = inlined_call_operand.vmem [shape: f32[256,128], index: 2, kind: input, shape index: {}]
  %s3 = inlined_call_operand.vmem [shape: f32[1,128], index: 3, kind: input, shape index: {}]
  %s4 = inlined_call_operand.vmem [shape: f32[1,256], index: 4, kind: input, shape index: {}]
  %s5 = inlined_call_operand.vmem [shape: f32[1,256], index: 5, kind: input, shape index: {}]
  %s6 = inlined_call_operand.vmem [shape: f32[8,100,256], index: 6, kind: output, shape index: {}]
  %s7 = sld [smem:[#allocation0]]
  $region57: #{tpu_custom_call.1} parent=0
    _
  %s9 = ssub.s32 1, %s7
  %s10 = scalar_select 0, %s9, %s7
  loop: start=0, step=1, limit=4
  $region2: #{tpu_custom_call.1} parent=0 // loop_pre_header
    _
  $region3: #{tpu_custom_call.1} parent=0 // loop_header
    %s12 = sphi 0, %s16
    %p13 = scmp.ge.s32.totalorder %s12, 4
    %s22 = sphi 0, %s24
    %s25 = sphi 0, %s22
    %s26 = sphi 0, %s25
    %s42 = sphi 0, %s26
    %s48 = sphi 0, %s50
    %s51 = sphi 0, %s48
    %s52 = sphi 0, %s51
    %s68 = sphi 0, %s52
    %s72 = sphi 0, %s72
    %s74 = sphi 0, %s72
    %s75 = sphi 0, %s74
    %s89 = sphi 0, %s75
    %s93 = sphi 0, %s93
    %s95 = sphi 0, %s93
    %s96 = sphi 0, %s95
    %s110 = sphi 0, %s96
    %s114 = sphi 0, %s114
    %s116 = sphi 0, %s114
    %s117 = sphi 0, %s116
    %s131 = sphi 0, %s117
    %s135 = sphi 0, %s135
    %s137 = sphi 0, %s135
    %s138 = sphi 0, %s137
    %s152 = sphi 0, %s138
    %s158 = sphi 0, %s160
    %s161 = sphi 0, %s158
    %s162 = sphi 0, %s161
    %s178 = sphi 0, %s162
  $region4: #{tpu_custom_call.1} parent=0 // loop_header_branch
    %15 = sbr.rel (%p13) target = $region8
  $region5: #{tpu_custom_call.1} parent=0 // loop_body
    %s17 = ssub.s32 %s12, 1
    %s18 = ssub.s32 %s12, 2
    %s19 = sadd.s32 %s12, 1
    %s20 = ssub.s32 %s12, %s19
    %p21 = scmp.eq.s32.totalorder %s20, 0
    %s23 = sadd.s32 %s22, 1
    %s24 = scalar_select %p21, %s22, %s23
    %p27 = pneg %p21
    %p28 = scmp.eq.s32.totalorder %s12, 1
    %p29 = por %p27, %p28
    %p30 = scmp.ne.s32.totalorder %s22, %s25
    %p31 = scmp.eq.s32.totalorder %s12, 0
    %p32 = por %p30, %p31
    %p33 = scmp.ne.s32.totalorder %s22, %s25
    %p34 = scmp.eq.s32.totalorder %s17, 1
    %p35 = por %p33, %p34
    %p36 = scmp.ne.s32.totalorder %s25, %s26
    %p37 = scmp.eq.s32.totalorder %s17, 0
    %p38 = por %p36, %p37
    %p39 = scmp.ne.s32.totalorder %s25, %s26
    %p40 = scmp.eq.s32.totalorder %s18, 1
    %p41 = por %p39, %p40
    %p43 = scmp.ne.s32.totalorder %s26, %s42
    %p44 = scmp.eq.s32.totalorder %s18, 0
    %p45 = por %p43, %p44
    %s46 = ssub.s32 %s12, %s19
    %p47 = scmp.eq.s32.totalorder %s46, 0
    %s49 = sadd.s32 %s48, 1
    %s50 = scalar_select %p47, %s48, %s49
    %p53 = pneg %p47
    %p54 = scmp.eq.s32.totalorder %s12, 1
    %p55 = por %p53, %p54
    %p56 = scmp.ne.s32.totalorder %s48, %s51
    %p57 = scmp.eq.s32.totalorder %s12, 0
    %p58 = por %p56, %p57
    %p59 = scmp.ne.s32.totalorder %s48, %s51
    %p60 = scmp.eq.s32.totalorder %s17, 1
    %p61 = por %p59, %p60
    %p62 = scmp.ne.s32.totalorder %s51, %s52
    %p63 = scmp.eq.s32.totalorder %s17, 0
    %p64 = por %p62, %p63
    %p65 = scmp.ne.s32.totalorder %s51, %s52
    %p66 = scmp.eq.s32.totalorder %s18, 1
    %p67 = por %p65, %p66
    %p69 = scmp.ne.s32.totalorder %s52, %s68
    %p70 = scmp.eq.s32.totalorder %s18, 0
    %p71 = por %p69, %p70
    %s73 = sadd.s32 %s72, 1
    %p76 = scmp.eq.s32.totalorder %s12, 1
    %p77 = scmp.ne.s32.totalorder %s72, %s74
    %p78 = scmp.eq.s32.totalorder %s12, 0
    %p79 = por %p77, %p78
    %p80 = scmp.ne.s32.totalorder %s72, %s74
    %p81 = scmp.eq.s32.totalorder %s17, 1
    %p82 = por %p80, %p81
    %p83 = scmp.ne.s32.totalorder %s74, %s75
    %p84 = scmp.eq.s32.totalorder %s17, 0
    %p85 = por %p83, %p84
    %p86 = scmp.ne.s32.totalorder %s74, %s75
    %p87 = scmp.eq.s32.totalorder %s18, 1
    %p88 = por %p86, %p87
    %p90 = scmp.ne.s32.totalorder %s75, %s89
    %p91 = scmp.eq.s32.totalorder %s18, 0
    %p92 = por %p90, %p91
    %s94 = sadd.s32 %s93, 1
    %p97 = scmp.eq.s32.totalorder %s12, 1
    %p98 = scmp.ne.s32.totalorder %s93, %s95
    %p99 = scmp.eq.s32.totalorder %s12, 0
    %p100 = por %p98, %p99
    %p101 = scmp.ne.s32.totalorder %s93, %s95
    %p102 = scmp.eq.s32.totalorder %s17, 1
    %p103 = por %p101, %p102
    %p104 = scmp.ne.s32.totalorder %s95, %s96
    %p105 = scmp.eq.s32.totalorder %s17, 0
    %p106 = por %p104, %p105
    %p107 = scmp.ne.s32.totalorder %s95, %s96
    %p108 = scmp.eq.s32.totalorder %s18, 1
    %p109 = por %p107, %p108
    %p111 = scmp.ne.s32.totalorder %s96, %s110
    %p112 = scmp.eq.s32.totalorder %s18, 0
    %p113 = por %p111, %p112
    %s115 = sadd.s32 %s114, 1
    %p118 = scmp.eq.s32.totalorder %s12, 1
    %p119 = scmp.ne.s32.totalorder %s114, %s116
    %p120 = scmp.eq.s32.totalorder %s12, 0
    %p121 = por %p119, %p120
    %p122 = scmp.ne.s32.totalorder %s114, %s116
    %p123 = scmp.eq.s32.totalorder %s17, 1
    %p124 = por %p122, %p123
    %p125 = scmp.ne.s32.totalorder %s116, %s117
    %p126 = scmp.eq.s32.totalorder %s17, 0
    %p127 = por %p125, %p126
    %p128 = scmp.ne.s32.totalorder %s116, %s117
    %p129 = scmp.eq.s32.totalorder %s18, 1
    %p130 = por %p128, %p129
    %p132 = scmp.ne.s32.totalorder %s117, %s131
    %p133 = scmp.eq.s32.totalorder %s18, 0
    %p134 = por %p132, %p133
    %s136 = sadd.s32 %s135, 1
    %p139 = scmp.eq.s32.totalorder %s12, 1
    %p140 = scmp.ne.s32.totalorder %s135, %s137
    %p141 = scmp.eq.s32.totalorder %s12, 0
    %p142 = por %p140, %p141
    %p143 = scmp.ne.s32.totalorder %s135, %s137
    %p144 = scmp.eq.s32.totalorder %s17, 1
    %p145 = por %p143, %p144
    %p146 = scmp.ne.s32.totalorder %s137, %s138
    %p147 = scmp.eq.s32.totalorder %s17, 0
    %p148 = por %p146, %p147
    %p149 = scmp.ne.s32.totalorder %s137, %s138
    %p150 = scmp.eq.s32.totalorder %s18, 1
    %p151 = por %p149, %p150
    %p153 = scmp.ne.s32.totalorder %s138, %s152
    %p154 = scmp.eq.s32.totalorder %s18, 0
    %p155 = por %p153, %p154
    %s156 = ssub.s32 %s12, %s19
    %p157 = scmp.eq.s32.totalorder %s156, 0
    %s159 = sadd.s32 %s158, 1
    %s160 = scalar_select %p157, %s158, %s159
    %p163 = pneg %p157
    %p164 = scmp.eq.s32.totalorder %s12, 1
    %p165 = por %p163, %p164
    %p166 = scmp.ne.s32.totalorder %s158, %s161
    %p167 = scmp.eq.s32.totalorder %s12, 0
    %p168 = por %p166, %p167
    %p169 = scmp.ne.s32.totalorder %s158, %s161
    %p170 = scmp.eq.s32.totalorder %s17, 1
    %p171 = por %p169, %p170
    %p172 = scmp.ne.s32.totalorder %s161, %s162
    %p173 = scmp.eq.s32.totalorder %s17, 0
    %p174 = por %p172, %p173
    %p175 = scmp.ne.s32.totalorder %s161, %s162
    %p176 = scmp.eq.s32.totalorder %s18, 1
    %p177 = por %p175, %p176
    %p179 = scmp.ne.s32.totalorder %s162, %s178
    %p180 = scmp.eq.s32.totalorder %s18, 0
    %p181 = por %p179, %p180
    %p182 = scmp.le.s32.totalorder 1, %s12
    %p183 = scmp.lt.s32.totalorder %s12, 3
    %p184 = pnand %p182, %p183
    %p185 = pneg %p184
    // Predicated region
    $region9: #{tpu_custom_call.1} parent=5 // pred_check
      _
    $region10: #{tpu_custom_call.1} parent=5 // pred_check_branch
      %187 = sbr.rel (%p184) target = $region12
    $region11: #{tpu_custom_call.1} parent=5 // pred_region
      %s188 = ssub.s32 %s12, 1
      // Predicated region
      $region13: #{tpu_custom_call.1} parent=11 // pred_check
        %p189 = pneg %p85
      $region14: #{tpu_custom_call.1} parent=11 // pred_check_branch
        %191 = sbr.rel (%p189) target = $region16
      $region15: #{tpu_custom_call.1} parent=11 // pred_region
        _
      $region16: #{tpu_custom_call.1} parent=11 // pred_fallthru
        _
      // Predicated region
      $region17: #{tpu_custom_call.1} parent=11 // pred_check
        %p192 = pneg %p106
      $region18: #{tpu_custom_call.1} parent=11 // pred_check_branch
        %194 = sbr.rel (%p192) target = $region20
      $region19: #{tpu_custom_call.1} parent=11 // pred_region
        _
      $region20: #{tpu_custom_call.1} parent=11 // pred_fallthru
        _
      // Predicated region
      $region21: #{tpu_custom_call.1} parent=11 // pred_check
        %p195 = pneg %p127
      $region22: #{tpu_custom_call.1} parent=11 // pred_check_branch
        %197 = sbr.rel (%p195) target = $region24
      $region23: #{tpu_custom_call.1} parent=11 // pred_region
        _
      $region24: #{tpu_custom_call.1} parent=11 // pred_fallthru
        _
      // Predicated region
      $region25: #{tpu_custom_call.1} parent=11 // pred_check
        %p198 = pneg %p148
      $region26: #{tpu_custom_call.1} parent=11 // pred_check_branch
        %200 = sbr.rel (%p198) target = $region28
      $region27: #{tpu_custom_call.1} parent=11 // pred_region
        _
      $region28: #{tpu_custom_call.1} parent=11 // pred_fallthru
        _
    $region12: #{tpu_custom_call.1} parent=5 // pred_fallthru
      _
    %p201 = scmp.lt.s32.totalorder %s12, 2
    // Predicated region
    $region29: #{tpu_custom_call.1} parent=5 // pred_check
      %p202 = pneg %p201
    $region30: #{tpu_custom_call.1} parent=5 // pred_check_branch
      %204 = sbr.rel (%p202) target = $region32
    $region31: #{tpu_custom_call.1} parent=5 // pred_region
      // Predicated region
      $region33: #{tpu_custom_call.1} parent=31 // pred_check
        %p205 = pneg %p32
      $region34: #{tpu_custom_call.1} parent=31 // pred_check_branch
        %207 = sbr.rel (%p205) target = $region36
      $region35: #{tpu_custom_call.1} parent=31 // pred_region
        %s208 = smul.u32 4, %s12
        %p209 = scmp.lt.s32.totalorder %s208, 7
        %s210 = scalar_select %p209, %s208, 7
        %s211 = smul.addr %s210, 26
        %s212 = smul.addr %s211, 8
        %s213 = scalar_lea.vmem %s0, %s212
        %s214 = smul.u32 4, %s12
      $region36: #{tpu_custom_call.1} parent=31 // pred_fallthru
        _
      // Predicated region
      $region37: #{tpu_custom_call.1} parent=31 // pred_check
        %p215 = pneg %p58
      $region38: #{tpu_custom_call.1} parent=31 // pred_check_branch
        %217 = sbr.rel (%p215) target = $region40
      $region39: #{tpu_custom_call.1} parent=31 // pred_region
        %s218 = smul.u32 4, %s12
        %p219 = scmp.lt.s32.totalorder %s218, 7
        %s220 = scalar_select %p219, %s218, 7
        %s221 = smul.addr %s220, 26
        %s222 = smul.addr %s221, 8
        %s223 = scalar_lea.vmem %s1, %s222
        %s224 = smul.u32 4, %s12
      $region40: #{tpu_custom_call.1} parent=31 // pred_fallthru
        _
    $region32: #{tpu_custom_call.1} parent=5 // pred_fallthru
      _
    %p225 = scmp.le.s32.totalorder 1, %s12
    %p226 = scmp.lt.s32.totalorder %s12, 3
    %p227 = pnand %p225, %p226
    %p228 = pneg %p227
    // Predicated region
    $region41: #{tpu_custom_call.1} parent=5 // pred_check
      _
    $region42: #{tpu_custom_call.1} parent=5 // pred_check_branch
      %230 = sbr.rel (%p227) target = $region44
    $region43: #{tpu_custom_call.1} parent=5 // pred_region
      %s231 = ssub.s32 %s12, 1
      %s232 = smul.u32 4, %s17
      %p233 = scmp.lt.s32.totalorder %s232, 7
      %s234 = scalar_select %p233, %s232, 7
      %s235 = smul.addr %s234, 26
      %s236 = smul.addr %s235, 8
      %s237 = scalar_lea.vmem %s0, %s236
      %p238 = pneg %p38
      %p239 = pneg %p35
      %s240 = smul.u32 4, %s17
      %p241 = scmp.lt.s32.totalorder %s240, 7
      %s242 = scalar_select %p241, %s240, 7
      %s243 = smul.addr %s242, 26
      %s244 = smul.addr %s243, 8
      %s245 = scalar_lea.vmem %s1, %s244
      %p246 = pneg %p64
      %p247 = pneg %p61
      %p248 = pneg %p85
      %p249 = pneg %p82
      %p250 = pneg %p106
      %p251 = pneg %p103
      %p252 = pneg %p127
      %p253 = pneg %p124
      %p254 = pneg %p148
      %p255 = pneg %p145
      %p256 = pneg %p174
      %p257 = pneg %p171
      %s258 = smul.u32 4, %s17
      %p259 = scmp.lt.s32.totalorder %s258, 7
      %s260 = scalar_select %p259, %s258, 7
      %s261 = smul.addr %s260, 26
      %s262 = smul.addr %s261, 8
      %s263 = scalar_lea.vmem %s6, %s262
      %s264 = smul.u32 4, %s17
      %p265 = scmp.lt.s32.totalorder %s264, 7
      %s266 = scalar_select %p265, %s264, 7
      %s267 = smul.addr %s266, 26
      %s268 = smul.addr %s267, 8
      %s269 = scalar_lea.vmem %s0, %s268
      %s270 = smul.u32 4, %s17
      %s271 = smul.u32 4, %s17
      %p272 = scmp.lt.s32.totalorder %s271, 7
      %s273 = scalar_select %p272, %s271, 7
      %s274 = smul.addr %s273, 26
      %s275 = smul.addr %s274, 8
      %s276 = scalar_lea.vmem %s1, %s275
      %s277 = smul.u32 4, %s17
      %s278 = smul.u32 4, %s17
      %p279 = scmp.lt.s32.totalorder %s278, 7
      %s280 = scalar_select %p279, %s278, 7
      %s281 = smul.addr %s280, 26
      %s282 = smul.addr %s281, 8
      %s283 = scalar_lea.vmem %s6, %s282
      %s284 = smul.u32 4, %s17
      %v286 = vld [vmem:[%s2] sm:$0xff]
      %v287 = vld [vmem:[%s2 + $0x8] sm:$0xff]
      %v288 = vld [vmem:[%s2 + $0x10] sm:$0xff]
      %v289 = vld [vmem:[%s2 + $0x18] sm:$0xff]
      %v290 = vld [vmem:[%s2 + $0x20] sm:$0xff]
      %v291 = vld [vmem:[%s2 + $0x28] sm:$0xff]
      %v292 = vld [vmem:[%s2 + $0x30] sm:$0xff]
      %v293 = vld [vmem:[%s2 + $0x38] sm:$0xff]
      %v294 = vld [vmem:[%s2 + $0x40] sm:$0xff]
      %v295 = vld [vmem:[%s2 + $0x48] sm:$0xff]
      %v296 = vld [vmem:[%s2 + $0x50] sm:$0xff]
      %v297 = vld [vmem:[%s2 + $0x58] sm:$0xff]
      %v298 = vld [vmem:[%s2 + $0x60] sm:$0xff]
      %v299 = vld [vmem:[%s2 + $0x68] sm:$0xff]
      %v300 = vld [vmem:[%s2 + $0x70] sm:$0xff]
      %v301 = vld [vmem:[%s2 + $0x78] sm:$0xff]
      %v302 = vld [vmem:[%s2 + $0x80] sm:$0xff]
      %v303 = vld [vmem:[%s2 + $0x88] sm:$0xff]
      %v304 = vld [vmem:[%s2 + $0x90] sm:$0xff]
      %v305 = vld [vmem:[%s2 + $0x98] sm:$0xff]
      %v306 = vld [vmem:[%s2 + $0xa0] sm:$0xff]
      %v307 = vld [vmem:[%s2 + $0xa8] sm:$0xff]
      %v308 = vld [vmem:[%s2 + $0xb0] sm:$0xff]
      %v309 = vld [vmem:[%s2 + $0xb8] sm:$0xff]
      %v310 = vld [vmem:[%s2 + $0xc0] sm:$0xff]
      %v311 = vld [vmem:[%s2 + $0xc8] sm:$0xff]
      %v312 = vld [vmem:[%s2 + $0xd0] sm:$0xff]
      %v313 = vld [vmem:[%s2 + $0xd8] sm:$0xff]
      %v314 = vld [vmem:[%s2 + $0xe0] sm:$0xff]
      %v315 = vld [vmem:[%s2 + $0xe8] sm:$0xff]
      %v316 = vld [vmem:[%s2 + $0xf0] sm:$0xff]
      %v317 = vld [vmem:[%s2 + $0xf8] sm:$0xff]
      %v318 = vpack.c.bf16 %v287, %v286
      %v319 = vpack.c.bf16 %v289, %v288
      %v320 = vpack.c.bf16 %v291, %v290
      %v321 = vpack.c.bf16 %v293, %v292
      %v322 = vpack.c.bf16 %v295, %v294
      %v323 = vpack.c.bf16 %v297, %v296
      %v324 = vpack.c.bf16 %v299, %v298
      %v325 = vpack.c.bf16 %v301, %v300
      %v326 = vpack.c.bf16 %v303, %v302
      %v327 = vpack.c.bf16 %v305, %v304
      %v328 = vpack.c.bf16 %v307, %v306
      %v329 = vpack.c.bf16 %v309, %v308
      %v330 = vpack.c.bf16 %v311, %v310
      %v331 = vpack.c.bf16 %v313, %v312
      %v332 = vpack.c.bf16 %v315, %v314
      %v333 = vpack.c.bf16 %v317, %v316
      %v334 = vld [vmem:[%s3] sm:$0x1]
      %v335 = vld [vmem:[%s4] sm:$0x3]
      %v336 = vld [vmem:[%s5] sm:$0x3]
      %v337 = vlaneseq
      %v338 = vand.u32 %v337, 127
      %v339 = vadd.s32 %v338, 128
      %vm340 = vcmp.gt.s32.totalorder %v338, 0
      %vm341 = vcmp.gt.s32.totalorder %v339, 0
      %vm342 = vcmp.lt.s32.totalorder %v338, 255
      %vm343 = vcmp.lt.s32.totalorder %v339, 255
      %v344 = vld [vmem:[%s269] sm:$0xff]
      %v345 = vld [vmem:[%s269 + $0x8] sm:$0xff]
      %v346 = vld [vmem:[%s269 + $0x10] sm:$0xff]
      %v347 = vld [vmem:[%s269 + $0x18] sm:$0xff]
      %v348 = vld [vmem:[%s269 + $0x20] sm:$0xff]
      %v349 = vld [vmem:[%s269 + $0x28] sm:$0xff]
      %v350 = vld [vmem:[%s269 + $0x30] sm:$0xff]
      %v351 = vld [vmem:[%s269 + $0x38] sm:$0xff]
      %v352 = vld [vmem:[%s269 + $0x40] sm:$0xff]
      %v353 = vld [vmem:[%s269 + $0x48] sm:$0xff]
      %v354 = vld [vmem:[%s269 + $0x50] sm:$0xff]
      %v355 = vld [vmem:[%s269 + $0x58] sm:$0xff]
      %v356 = vld [vmem:[%s269 + $0x60] sm:$0xff]
      %v357 = vld [vmem:[%s269 + $0x68] sm:$0xff]
      %v358 = vld [vmem:[%s269 + $0x70] sm:$0xff]
      %v359 = vld [vmem:[%s269 + $0x78] sm:$0xff]
      %v360 = vld [vmem:[%s269 + $0x80] sm:$0xff]
      %v361 = vld [vmem:[%s269 + $0x88] sm:$0xff]
      %v362 = vld [vmem:[%s269 + $0x90] sm:$0xff]
      %v363 = vld [vmem:[%s269 + $0x98] sm:$0xff]
      %v364 = vld [vmem:[%s269 + $0xa0] sm:$0xff]
      %v365 = vld [vmem:[%s269 + $0xa8] sm:$0xff]
      %v366 = vld [vmem:[%s269 + $0xb0] sm:$0xff]
      %v367 = vld [vmem:[%s269 + $0xb8] sm:$0xff]
      %v368 = vld [vmem:[%s269 + $0xc0] sm:$0xf]
      %v369 = vld [vmem:[%s269 + $0xc8] sm:$0xf]
      %v370 = vpack.c.bf16 %v346, %v344
      %v371 = vpack.c.bf16 %v347, %v345
      %v372 = vpack.c.bf16 %v350, %v348
      %v373 = vpack.c.bf16 %v351, %v349
      %v374 = vpack.c.bf16 %v354, %v352
      %v375 = vpack.c.bf16 %v355, %v353
      %v376 = vpack.c.bf16 %v358, %v356
      %v377 = vpack.c.bf16 %v359, %v357
      %v378 = vpack.c.bf16 %v362, %v360
      %v379 = vpack.c.bf16 %v363, %v361
      %v380 = vpack.c.bf16 %v366, %v364
      %v381 = vpack.c.bf16 %v367, %v365
      %v382 = vpack.c.bf16 %v368, %v368
      %v383 = vpack.c.bf16 %v369, %v369
      %v385 = vlaneseq
      %v386 = vshrl.u32 %v385, 7
      %v387 = vsub.s32 0, %v386
      %v388 = vrot.slane %v334, %v387
      %390 = vmatprep.subr.bf16.mxu0 0
      %391 = vmatpush1.bf16.msra.mxu0 %v325
      %392 = vmatprep.subr.bf16.mxu0 0
      %393 = vmatpush1.bf16.msra.mxu0 %v324
      %394 = vmatprep.subr.bf16.mxu0 0
      %395 = vmatpush1.bf16.msra.mxu0 %v323
      %396 = vmatprep.subr.bf16.mxu0 0
      %397 = vmatpush1.bf16.msra.mxu0 %v322
      %398 = vmatprep.subr.bf16.mxu0 0
      %399 = vmatpush1.bf16.msra.mxu0 %v321
      %400 = vmatprep.subr.bf16.mxu0 0
      %401 = vmatpush1.bf16.msra.mxu0 %v320
      %402 = vmatprep.subr.bf16.mxu0 0
      %403 = vmatpush1.bf16.msra.mxu0 %v319
      %404 = vmatprep.subr.bf16.mxu0 0
      %405 = vmatpush1.bf16.msra.mxu0 %v318
      %406 = vmatprep.subr.bf16.mxu0 0
      %407 = vmatpush2.bf16.msra.mxu0 %v333
      %408 = vmatprep.subr.bf16.mxu0 0
      %409 = vmatpush2.bf16.msra.mxu0 %v332
      %410 = vmatprep.subr.bf16.mxu0 0
      %411 = vmatpush2.bf16.msra.mxu0 %v331
      %412 = vmatprep.subr.bf16.mxu0 0
      %413 = vmatpush2.bf16.msra.mxu0 %v330
      %414 = vmatprep.subr.bf16.mxu0 0
      %415 = vmatpush2.bf16.msra.mxu0 %v329
      %416 = vmatprep.subr.bf16.mxu0 0
      %417 = vmatpush2.bf16.msra.mxu0 %v328
      %418 = vmatprep.subr.bf16.mxu0 0
      %419 = vmatpush2.bf16.msra.mxu0 %v327
      %420 = vmatprep.subr.bf16.mxu0 0
      %421 = vmatpush2.bf16.msra.mxu0 %v326
      %422 = vmatprep.mubr.bf16.mxu0 %v371
      %423 = vmatmul.mubr.bf16.gmra.mxu0 %v370
      %v424 = vpop.f32.mrf.mxu0
      %v425 = vadd.f32 %v388, %v424
      %v426 = vpop.f32.mrf.mxu0
      %v427 = vpop.f32.mrf.mxu0
      %v428 = vadd.f32 %v388, %v427
      %v429 = vpop.f32.mrf.mxu0
      %430 = vmatprep.mubr.bf16.mxu0 %v373
      %431 = vmatmul.mubr.bf16.gmra.mxu0 %v372
      %v432 = vpop.f32.mrf.mxu0
      %v433 = vadd.f32 %v388, %v432
      %v434 = vpop.f32.mrf.mxu0
      %v435 = vpop.f32.mrf.mxu0
      %v436 = vadd.f32 %v388, %v435
      %v437 = vpop.f32.mrf.mxu0
      %438 = vmatprep.mubr.bf16.mxu0 %v375
      %439 = vmatmul.mubr.bf16.gmra.mxu0 %v374
      %v440 = vpop.f32.mrf.mxu0
      %v441 = vadd.f32 %v388, %v440
      %v442 = vpop.f32.mrf.mxu0
      %v443 = vpop.f32.mrf.mxu0
      %v444 = vadd.f32 %v388, %v443
      %v445 = vpop.f32.mrf.mxu0
      %446 = vmatprep.mubr.bf16.mxu0 %v377
      %447 = vmatmul.mubr.bf16.gmra.mxu0 %v376
      %v448 = vpop.f32.mrf.mxu0
      %v449 = vadd.f32 %v388, %v448
      %v450 = vpop.f32.mrf.mxu0
      %v451 = vpop.f32.mrf.mxu0
      %v452 = vadd.f32 %v388, %v451
      %v453 = vpop.f32.mrf.mxu0
      %454 = vmatprep.mubr.bf16.mxu0 %v379
      %455 = vmatmul.mubr.bf16.gmra.mxu0 %v378
      %v456 = vpop.f32.mrf.mxu0
      %v457 = vadd.f32 %v388, %v456
      %v458 = vpop.f32.mrf.mxu0
      %v459 = vpop.f32.mrf.mxu0
      %v460 = vadd.f32 %v388, %v459
      %v461 = vpop.f32.mrf.mxu0
      %462 = vmatprep.mubr.bf16.mxu0 %v381
      %463 = vmatmul.mubr.bf16.gmra.mxu0 %v380
      %v464 = vpop.f32.mrf.mxu0
      %v465 = vadd.f32 %v388, %v464
      %v466 = vpop.f32.mrf.mxu0
      %v467 = vpop.f32.mrf.mxu0
      %v468 = vadd.f32 %v388, %v467
      %v469 = vpop.f32.mrf.mxu0
      %470 = vmatprep.mubr.bf16.mxu0 %v383
      %471 = vmatmul.mubr.bf16.gmra.mxu0 %v382
      %v472 = vpop.f32.mrf.mxu0
      %v473 = vadd.f32 %v388, %v472
      %v474 = vpop.f32.mrf.mxu0
      %v475 = vpop.f32.mrf.mxu0
      %v476 = vpop.f32.mrf.mxu0
      %477 = vdwg.mxu0
      %v478 = vld [vmem:[%s276] sm:$0xff]
      %v479 = vld [vmem:[%s276 + $0x8] sm:$0xff]
      %v480 = vld [vmem:[%s276 + $0x10] sm:$0xff]
      %v481 = vld [vmem:[%s276 + $0x18] sm:$0xff]
      %v482 = vld [vmem:[%s276 + $0x20] sm:$0xff]
      %v483 = vld [vmem:[%s276 + $0x28] sm:$0xff]
      %v484 = vld [vmem:[%s276 + $0x30] sm:$0xff]
      %v485 = vld [vmem:[%s276 + $0x38] sm:$0xff]
      %v486 = vld [vmem:[%s276 + $0x40] sm:$0xff]
      %v487 = vld [vmem:[%s276 + $0x48] sm:$0xff]
      %v488 = vld [vmem:[%s276 + $0x50] sm:$0xff]
      %v489 = vld [vmem:[%s276 + $0x58] sm:$0xff]
      %v490 = vld [vmem:[%s276 + $0x60] sm:$0xff]
      %v491 = vld [vmem:[%s276 + $0x68] sm:$0xff]
      %v492 = vld [vmem:[%s276 + $0x70] sm:$0xff]
      %v493 = vld [vmem:[%s276 + $0x78] sm:$0xff]
      %v494 = vld [vmem:[%s276 + $0x80] sm:$0xff]
      %v495 = vld [vmem:[%s276 + $0x88] sm:$0xff]
      %v496 = vld [vmem:[%s276 + $0x90] sm:$0xff]
      %v497 = vld [vmem:[%s276 + $0x98] sm:$0xff]
      %v498 = vld [vmem:[%s276 + $0xa0] sm:$0xff]
      %v499 = vld [vmem:[%s276 + $0xa8] sm:$0xff]
      %v500 = vld [vmem:[%s276 + $0xb0] sm:$0xff]
      %v501 = vld [vmem:[%s276 + $0xb8] sm:$0xff]
      %v502 = vld [vmem:[%s276 + $0xc0] sm:$0xf]
      %v503 = vld [vmem:[%s276 + $0xc8] sm:$0xf]
      %504 = vrot.lane.b32.xlu0 %v478, 1
      %v505 = vpop.permute.xlu0 %504
      %506 = vrot.lane.b32.xlu0 %v480, 1
      %v507 = vpop.permute.xlu0 %506
      %508 = vrot.lane.b32.xlu0 %v482, 1
      %v509 = vpop.permute.xlu0 %508
      %510 = vrot.lane.b32.xlu0 %v484, 1
      %v511 = vpop.permute.xlu0 %510
      %512 = vrot.lane.b32.xlu0 %v486, 1
      %v513 = vpop.permute.xlu0 %512
      %514 = vrot.lane.b32.xlu0 %v488, 1
      %v515 = vpop.permute.xlu0 %514
      %516 = vrot.lane.b32.xlu0 %v490, 1
      %v517 = vpop.permute.xlu0 %516
      %518 = vrot.lane.b32.xlu0 %v492, 1
      %v519 = vpop.permute.xlu0 %518
      %520 = vrot.lane.b32.xlu0 %v494, 1
      %v521 = vpop.permute.xlu0 %520
      %522 = vrot.lane.b32.xlu0 %v496, 1
      %v523 = vpop.permute.xlu0 %522
      %524 = vrot.lane.b32.xlu0 %v498, 1
      %v525 = vpop.permute.xlu0 %524
      %526 = vrot.lane.b32.xlu0 %v500, 1
      %v527 = vpop.permute.xlu0 %526
      %528 = vrot.lane.b32.xlu0 %v502, 1
      %v529 = vpop.permute.xlu0 %528
      %530 = vrot.lane.b32.xlu0 %v479, 1
      %v531 = vpop.permute.xlu0 %530
      %532 = vrot.lane.b32.xlu0 %v481, 1
      %v533 = vpop.permute.xlu0 %532
      %534 = vrot.lane.b32.xlu0 %v483, 1
      %v535 = vpop.permute.xlu0 %534
      %536 = vrot.lane.b32.xlu0 %v485, 1
      %v537 = vpop.permute.xlu0 %536
      %538 = vrot.lane.b32.xlu0 %v487, 1
      %v539 = vpop.permute.xlu0 %538
      %540 = vrot.lane.b32.xlu0 %v489, 1
      %v541 = vpop.permute.xlu0 %540
      %542 = vrot.lane.b32.xlu0 %v491, 1
      %v543 = vpop.permute.xlu0 %542
      %544 = vrot.lane.b32.xlu0 %v493, 1
      %v545 = vpop.permute.xlu0 %544
      %546 = vrot.lane.b32.xlu0 %v495, 1
      %v547 = vpop.permute.xlu0 %546
      %548 = vrot.lane.b32.xlu0 %v497, 1
      %v549 = vpop.permute.xlu0 %548
      %550 = vrot.lane.b32.xlu0 %v499, 1
      %v551 = vpop.permute.xlu0 %550
      %552 = vrot.lane.b32.xlu0 %v501, 1
      %v553 = vpop.permute.xlu0 %552
      %554 = vrot.lane.b32.xlu0 %v503, 1
      %v555 = vpop.permute.xlu0 %554
      %vm556 = vcmp.lt.s32.totalorder %v338, 1
      %v557 = vsel %vm556, %v505, %v531
      %v558 = vsel %vm556, %v507, %v533
      %v559 = vsel %vm556, %v509, %v535
      %v560 = vsel %vm556, %v511, %v537
      %v561 = vsel %vm556, %v513, %v539
      %v562 = vsel %vm556, %v515, %v541
      %v563 = vsel %vm556, %v517, %v543
      %v564 = vsel %vm556, %v519, %v545
      %v565 = vsel %vm556, %v521, %v547
      %v566 = vsel %vm556, %v523, %v549
      %v567 = vsel %vm556, %v525, %v551
      %v568 = vsel %vm556, %v527, %v553
      %v569 = vsel %vm556, %v529, %v555
      %v570 = vsel %vm556, %v531, %v505
      %v571 = vsel %vm556, %v533, %v507
      %v572 = vsel %vm556, %v535, %v509
      %v573 = vsel %vm556, %v537, %v511
      %v574 = vsel %vm556, %v539, %v513
      %v575 = vsel %vm556, %v541, %v515
      %v576 = vsel %vm556, %v543, %v517
      %v577 = vsel %vm556, %v545, %v519
      %v578 = vsel %vm556, %v547, %v521
      %v579 = vsel %vm556, %v549, %v523
      %v580 = vsel %vm556, %v551, %v525
      %v581 = vsel %vm556, %v553, %v527
      %v582 = vsel %vm556, %v555, %v529
      %v583 = vsel %vm340, %v570, 0.0
      %v584 = vsel %vm341, %v557, 0.0
      %v585 = vsel %vm340, %v571, 0.0
      %v586 = vsel %vm341, %v558, 0.0
      %v587 = vsel %vm340, %v572, 0.0
      %v588 = vsel %vm341, %v559, 0.0
      %v589 = vsel %vm340, %v573, 0.0
      %v590 = vsel %vm341, %v560, 0.0
      %v591 = vsel %vm340, %v574, 0.0
      %v592 = vsel %vm341, %v561, 0.0
      %v593 = vsel %vm340, %v575, 0.0
      %v594 = vsel %vm341, %v562, 0.0
      %v595 = vsel %vm340, %v576, 0.0
      %v596 = vsel %vm341, %v563, 0.0
      %v597 = vsel %vm340, %v577, 0.0
      %v598 = vsel %vm341, %v564, 0.0
      %v599 = vsel %vm340, %v578, 0.0
      %v600 = vsel %vm341, %v565, 0.0
      %v601 = vsel %vm340, %v579, 0.0
      %v602 = vsel %vm341, %v566, 0.0
      %v603 = vsel %vm340, %v580, 0.0
      %v604 = vsel %vm341, %v567, 0.0
      %v605 = vsel %vm340, %v581, 0.0
      %v606 = vsel %vm341, %v568, 0.0
      %v607 = vsel %vm340, %v582, 0.0
      %v608 = vsel %vm341, %v569, 0.0
      %609 = vrot.lane.b32.xlu0 %v478, 127
      %v610 = vpop.permute.xlu0 %609
      %611 = vrot.lane.b32.xlu0 %v480, 127
      %v612 = vpop.permute.xlu0 %611
      %613 = vrot.lane.b32.xlu0 %v482, 127
      %v614 = vpop.permute.xlu0 %613
      %615 = vrot.lane.b32.xlu0 %v484, 127
      %v616 = vpop.permute.xlu0 %615
      %617 = vrot.lane.b32.xlu0 %v486, 127
      %v618 = vpop.permute.xlu0 %617
      %619 = vrot.lane.b32.xlu0 %v488, 127
      %v620 = vpop.permute.xlu0 %619
      %621 = vrot.lane.b32.xlu0 %v490, 127
      %v622 = vpop.permute.xlu0 %621
      %623 = vrot.lane.b32.xlu0 %v492, 127
      %v624 = vpop.permute.xlu0 %623
      %625 = vrot.lane.b32.xlu0 %v494, 127
      %v626 = vpop.permute.xlu0 %625
      %627 = vrot.lane.b32.xlu0 %v496, 127
      %v628 = vpop.permute.xlu0 %627
      %629 = vrot.lane.b32.xlu0 %v498, 127
      %v630 = vpop.permute.xlu0 %629
      %631 = vrot.lane.b32.xlu0 %v500, 127
      %v632 = vpop.permute.xlu0 %631
      %633 = vrot.lane.b32.xlu0 %v502, 127
      %v634 = vpop.permute.xlu0 %633
      %635 = vrot.lane.b32.xlu0 %v479, 127
      %v636 = vpop.permute.xlu0 %635
      %637 = vrot.lane.b32.xlu0 %v481, 127
      %v638 = vpop.permute.xlu0 %637
      %639 = vrot.lane.b32.xlu0 %v483, 127
      %v640 = vpop.permute.xlu0 %639
      %641 = vrot.lane.b32.xlu0 %v485, 127
      %v642 = vpop.permute.xlu0 %641
      %643 = vrot.lane.b32.xlu0 %v487, 127
      %v644 = vpop.permute.xlu0 %643
      %645 = vrot.lane.b32.xlu0 %v489, 127
      %v646 = vpop.permute.xlu0 %645
      %647 = vrot.lane.b32.xlu0 %v491, 127
      %v648 = vpop.permute.xlu0 %647
      %649 = vrot.lane.b32.xlu0 %v493, 127
      %v650 = vpop.permute.xlu0 %649
      %651 = vrot.lane.b32.xlu0 %v495, 127
      %v652 = vpop.permute.xlu0 %651
      %653 = vrot.lane.b32.xlu0 %v497, 127
      %v654 = vpop.permute.xlu0 %653
      %655 = vrot.lane.b32.xlu0 %v499, 127
      %v656 = vpop.permute.xlu0 %655
      %657 = vrot.lane.b32.xlu0 %v501, 127
      %v658 = vpop.permute.xlu0 %657
      %659 = vrot.lane.b32.xlu0 %v503, 127
      %v660 = vpop.permute.xlu0 %659
      %vm661 = vcmp.lt.s32.totalorder %v338, 127
      %v662 = vsel %vm661, %v610, %v636
      %v663 = vsel %vm661, %v612, %v638
      %v664 = vsel %vm661, %v614, %v640
      %v665 = vsel %vm661, %v616, %v642
      %v666 = vsel %vm661, %v618, %v644
      %v667 = vsel %vm661, %v620, %v646
      %v668 = vsel %vm661, %v622, %v648
      %v669 = vsel %vm661, %v624, %v650
      %v670 = vsel %vm661, %v626, %v652
      %v671 = vsel %vm661, %v628, %v654
      %v672 = vsel %vm661, %v630, %v656
      %v673 = vsel %vm661, %v632, %v658
      %v674 = vsel %vm661, %v634, %v660
      %v675 = vsel %vm661, %v636, %v610
      %v676 = vsel %vm661, %v638, %v612
      %v677 = vsel %vm661, %v640, %v614
      %v678 = vsel %vm661, %v642, %v616
      %v679 = vsel %vm661, %v644, %v618
      %v680 = vsel %vm661, %v646, %v620
      %v681 = vsel %vm661, %v648, %v622
      %v682 = vsel %vm661, %v650, %v624
      %v683 = vsel %vm661, %v652, %v626
      %v684 = vsel %vm661, %v654, %v628
      %v685 = vsel %vm661, %v656, %v630
      %v686 = vsel %vm661, %v658, %v632
      %v687 = vsel %vm661, %v660, %v634
      %v688 = vsel %vm342, %v662, 0.0
      %v689 = vsel %vm343, %v675, 0.0
      %v690 = vsel %vm342, %v663, 0.0
      %v691 = vsel %vm343, %v676, 0.0
      %v692 = vsel %vm342, %v664, 0.0
      %v693 = vsel %vm343, %v677, 0.0
      %v694 = vsel %vm342, %v665, 0.0
      %v695 = vsel %vm343, %v678, 0.0
      %v696 = vsel %vm342, %v666, 0.0
      %v697 = vsel %vm343, %v679, 0.0
      %v698 = vsel %vm342, %v667, 0.0
      %v699 = vsel %vm343, %v680, 0.0
      %v700 = vsel %vm342, %v668, 0.0
      %v701 = vsel %vm343, %v681, 0.0
      %v702 = vsel %vm342, %v669, 0.0
      %v703 = vsel %vm343, %v682, 0.0
      %v704 = vsel %vm342, %v670, 0.0
      %v705 = vsel %vm343, %v683, 0.0
      %v706 = vsel %vm342, %v671, 0.0
      %v707 = vsel %vm343, %v684, 0.0
      %v708 = vsel %vm342, %v672, 0.0
      %v709 = vsel %vm343, %v685, 0.0
      %v710 = vsel %vm342, %v673, 0.0
      %v711 = vsel %vm343, %v686, 0.0
      %v712 = vsel %vm342, %v674, 0.0
      %v713 = vsel %vm343, %v687, 0.0
      %715 = vset.pattern.permute.xlu0 101
      %716 = vperm.xlu0 %715, %v425
      %v717 = vpop.permute.xlu0 %716
      %720 = vset.pattern.permute.xlu0 101
      %721 = vperm.xlu0 %720, %v428
      %v722 = vpop.permute.xlu0 %721
      %725 = vset.pattern.permute.xlu0 101
      %726 = vperm.xlu0 %725, %v433
      %v727 = vpop.permute.xlu0 %726
      %730 = vset.pattern.permute.xlu0 101
      %731 = vperm.xlu0 %730, %v436
      %v732 = vpop.permute.xlu0 %731
      %735 = vset.pattern.permute.xlu0 101
      %736 = vperm.xlu0 %735, %v441
      %v737 = vpop.permute.xlu0 %736
      %740 = vset.pattern.permute.xlu0 101
      %741 = vperm.xlu0 %740, %v444
      %v742 = vpop.permute.xlu0 %741
      %745 = vset.pattern.permute.xlu0 101
      %746 = vperm.xlu0 %745, %v449
      %v747 = vpop.permute.xlu0 %746
      %750 = vset.pattern.permute.xlu0 101
      %751 = vperm.xlu0 %750, %v452
      %v752 = vpop.permute.xlu0 %751
      %755 = vset.pattern.permute.xlu0 101
      %756 = vperm.xlu0 %755, %v457
      %v757 = vpop.permute.xlu0 %756
      %760 = vset.pattern.permute.xlu0 101
      %761 = vperm.xlu0 %760, %v460
      %v762 = vpop.permute.xlu0 %761
      %765 = vset.pattern.permute.xlu0 101
      %766 = vperm.xlu0 %765, %v465
      %v767 = vpop.permute.xlu0 %766
      %770 = vset.pattern.permute.xlu0 101
      %771 = vperm.xlu0 %770, %v468
      %v772 = vpop.permute.xlu0 %771
      %775 = vset.pattern.permute.xlu0 101
      %776 = vperm.xlu0 %775, %v473
      %v777 = vpop.permute.xlu0 %776
      %v779 = vmul.f32 %v717, %v478
      %v780 = vmul.f32 %v717, %v479
      %v781 = vmul.f32 %v722, %v480
      %v782 = vmul.f32 %v722, %v481
      %v783 = vmul.f32 %v727, %v482
      %v784 = vmul.f32 %v727, %v483
      %v785 = vmul.f32 %v732, %v484
      %v786 = vmul.f32 %v732, %v485
      %v787 = vmul.f32 %v737, %v486
      %v788 = vmul.f32 %v737, %v487
      %v789 = vmul.f32 %v742, %v488
      %v790 = vmul.f32 %v742, %v489
      %v791 = vmul.f32 %v747, %v490
      %v792 = vmul.f32 %v747, %v491
      %v793 = vmul.f32 %v752, %v492
      %v794 = vmul.f32 %v752, %v493
      %v795 = vmul.f32 %v757, %v494
      %v796 = vmul.f32 %v757, %v495
      %v797 = vmul.f32 %v762, %v496
      %v798 = vmul.f32 %v762, %v497
      %v799 = vmul.f32 %v767, %v498
      %v800 = vmul.f32 %v767, %v499
      %v801 = vmul.f32 %v772, %v500
      %v802 = vmul.f32 %v772, %v501
      %v803 = vmul.f32 %v777, %v502
      %v804 = vmul.f32 %v777, %v503
      %805 = vset.pattern.permute.xlu0 100
      %806 = vperm.xlu0 %805, %v425
      %v807 = vpop.permute.xlu0 %806
      %809 = vset.pattern.permute.xlu0 100
      %810 = vperm.xlu0 %809, %v428
      %v811 = vpop.permute.xlu0 %810
      %813 = vset.pattern.permute.xlu0 100
      %814 = vperm.xlu0 %813, %v433
      %v815 = vpop.permute.xlu0 %814
      %817 = vset.pattern.permute.xlu0 100
      %818 = vperm.xlu0 %817, %v436
      %v819 = vpop.permute.xlu0 %818
      %821 = vset.pattern.permute.xlu0 100
      %822 = vperm.xlu0 %821, %v441
      %v823 = vpop.permute.xlu0 %822
      %825 = vset.pattern.permute.xlu0 100
      %826 = vperm.xlu0 %825, %v444
      %v827 = vpop.permute.xlu0 %826
      %829 = vset.pattern.permute.xlu0 100
      %830 = vperm.xlu0 %829, %v449
      %v831 = vpop.permute.xlu0 %830
      %833 = vset.pattern.permute.xlu0 100
      %834 = vperm.xlu0 %833, %v452
      %v835 = vpop.permute.xlu0 %834
      %837 = vset.pattern.permute.xlu0 100
      %838 = vperm.xlu0 %837, %v457
      %v839 = vpop.permute.xlu0 %838
      %841 = vset.pattern.permute.xlu0 100
      %842 = vperm.xlu0 %841, %v460
      %v843 = vpop.permute.xlu0 %842
      %845 = vset.pattern.permute.xlu0 100
      %846 = vperm.xlu0 %845, %v465
      %v847 = vpop.permute.xlu0 %846
      %849 = vset.pattern.permute.xlu0 100
      %850 = vperm.xlu0 %849, %v468
      %v851 = vpop.permute.xlu0 %850
      %853 = vset.pattern.permute.xlu0 100
      %854 = vperm.xlu0 %853, %v473
      %v855 = vpop.permute.xlu0 %854
      %v857 = vmul.f32 %v807, %v583
      %v858 = vmul.f32 %v807, %v584
      %v859 = vmul.f32 %v811, %v585
      %v860 = vmul.f32 %v811, %v586
      %v861 = vmul.f32 %v815, %v587
      %v862 = vmul.f32 %v815, %v588
      %v863 = vmul.f32 %v819, %v589
      %v864 = vmul.f32 %v819, %v590
      %v865 = vmul.f32 %v823, %v591
      %v866 = vmul.f32 %v823, %v592
      %v867 = vmul.f32 %v827, %v593
      %v868 = vmul.f32 %v827, %v594
      %v869 = vmul.f32 %v831, %v595
      %v870 = vmul.f32 %v831, %v596
      %v871 = vmul.f32 %v835, %v597
      %v872 = vmul.f32 %v835, %v598
      %v873 = vmul.f32 %v839, %v599
      %v874 = vmul.f32 %v839, %v600
      %v875 = vmul.f32 %v843, %v601
      %v876 = vmul.f32 %v843, %v602
      %v877 = vmul.f32 %v847, %v603
      %v878 = vmul.f32 %v847, %v604
      %v879 = vmul.f32 %v851, %v605
      %v880 = vmul.f32 %v851, %v606
      %v881 = vmul.f32 %v855, %v607
      %v882 = vmul.f32 %v855, %v608
      %v883 = vadd.f32 %v779, %v857
      %v884 = vadd.f32 %v780, %v858
      %v885 = vadd.f32 %v781, %v859
      %v886 = vadd.f32 %v782, %v860
      %v887 = vadd.f32 %v783, %v861
      %v888 = vadd.f32 %v784, %v862
      %v889 = vadd.f32 %v785, %v863
      %v890 = vadd.f32 %v786, %v864
      %v891 = vadd.f32 %v787, %v865
      %v892 = vadd.f32 %v788, %v866
      %v893 = vadd.f32 %v789, %v867
      %v894 = vadd.f32 %v790, %v868
      %v895 = vadd.f32 %v791, %v869
      %v896 = vadd.f32 %v792, %v870
      %v897 = vadd.f32 %v793, %v871
      %v898 = vadd.f32 %v794, %v872
      %v899 = vadd.f32 %v795, %v873
      %v900 = vadd.f32 %v796, %v874
      %v901 = vadd.f32 %v797, %v875
      %v902 = vadd.f32 %v798, %v876
      %v903 = vadd.f32 %v799, %v877
      %v904 = vadd.f32 %v800, %v878
      %v905 = vadd.f32 %v801, %v879
      %v906 = vadd.f32 %v802, %v880
      %v907 = vadd.f32 %v803, %v881
      %v908 = vadd.f32 %v804, %v882
      %909 = vset.pattern.permute.xlu0 102
      %910 = vperm.xlu0 %909, %v425
      %v911 = vpop.permute.xlu0 %910
      %913 = vset.pattern.permute.xlu0 102
      %914 = vperm.xlu0 %913, %v428
      %v915 = vpop.permute.xlu0 %914
      %917 = vset.pattern.permute.xlu0 102
      %918 = vperm.xlu0 %917, %v433
      %v919 = vpop.permute.xlu0 %918
      %921 = vset.pattern.permute.xlu0 102
      %922 = vperm.xlu0 %921, %v436
      %v923 = vpop.permute.xlu0 %922
      %925 = vset.pattern.permute.xlu0 102
      %926 = vperm.xlu0 %925, %v441
      %v927 = vpop.permute.xlu0 %926
      %929 = vset.pattern.permute.xlu0 102
      %930 = vperm.xlu0 %929, %v444
      %v931 = vpop.permute.xlu0 %930
      %933 = vset.pattern.permute.xlu0 102
      %934 = vperm.xlu0 %933, %v449
      %v935 = vpop.permute.xlu0 %934
      %937 = vset.pattern.permute.xlu0 102
      %938 = vperm.xlu0 %937, %v452
      %v939 = vpop.permute.xlu0 %938
      %941 = vset.pattern.permute.xlu0 102
      %942 = vperm.xlu0 %941, %v457
      %v943 = vpop.permute.xlu0 %942
      %945 = vset.pattern.permute.xlu0 102
      %946 = vperm.xlu0 %945, %v460
      %v947 = vpop.permute.xlu0 %946
      %949 = vset.pattern.permute.xlu0 102
      %950 = vperm.xlu0 %949, %v465
      %v951 = vpop.permute.xlu0 %950
      %953 = vset.pattern.permute.xlu0 102
      %954 = vperm.xlu0 %953, %v468
      %v955 = vpop.permute.xlu0 %954
      %957 = vset.pattern.permute.xlu0 102
      %958 = vperm.xlu0 %957, %v473
      %v959 = vpop.permute.xlu0 %958
      %v961 = vmul.f32 %v911, %v688
      %v962 = vmul.f32 %v911, %v689
      %v963 = vmul.f32 %v915, %v690
      %v964 = vmul.f32 %v915, %v691
      %v965 = vmul.f32 %v919, %v692
      %v966 = vmul.f32 %v919, %v693
      %v967 = vmul.f32 %v923, %v694
      %v968 = vmul.f32 %v923, %v695
      %v969 = vmul.f32 %v927, %v696
      %v970 = vmul.f32 %v927, %v697
      %v971 = vmul.f32 %v931, %v698
      %v972 = vmul.f32 %v931, %v699
      %v973 = vmul.f32 %v935, %v700
      %v974 = vmul.f32 %v935, %v701
      %v975 = vmul.f32 %v939, %v702
      %v976 = vmul.f32 %v939, %v703
      %v977 = vmul.f32 %v943, %v704
      %v978 = vmul.f32 %v943, %v705
      %v979 = vmul.f32 %v947, %v706
      %v980 = vmul.f32 %v947, %v707
      %v981 = vmul.f32 %v951, %v708
      %v982 = vmul.f32 %v951, %v709
      %v983 = vmul.f32 %v955, %v710
      %v984 = vmul.f32 %v955, %v711
      %v985 = vmul.f32 %v959, %v712
      %v986 = vmul.f32 %v959, %v713
      %v987 = vadd.f32 %v883, %v961
      %v988 = vadd.f32 %v884, %v962
      %v989 = vadd.f32 %v885, %v963
      %v990 = vadd.f32 %v886, %v964
      %v991 = vadd.f32 %v887, %v965
      %v992 = vadd.f32 %v888, %v966
      %v993 = vadd.f32 %v889, %v967
      %v994 = vadd.f32 %v890, %v968
      %v995 = vadd.f32 %v891, %v969
      %v996 = vadd.f32 %v892, %v970
      %v997 = vadd.f32 %v893, %v971
      %v998 = vadd.f32 %v894, %v972
      %v999 = vadd.f32 %v895, %v973
      %v1000 = vadd.f32 %v896, %v974
      %v1001 = vadd.f32 %v897, %v975
      %v1002 = vadd.f32 %v898, %v976
      %v1003 = vadd.f32 %v899, %v977
      %v1004 = vadd.f32 %v900, %v978
      %v1005 = vadd.f32 %v901, %v979
      %v1006 = vadd.f32 %v902, %v980
      %v1007 = vadd.f32 %v903, %v981
      %v1008 = vadd.f32 %v904, %v982
      %v1009 = vadd.f32 %v905, %v983
      %v1010 = vadd.f32 %v906, %v984
      %v1011 = vadd.f32 %v907, %v985
      %v1012 = vadd.f32 %v908, %v986
      %v1013 = vmax.f32 %v987, 0.0
      %v1014 = vmax.f32 %v988, 0.0
      %v1015 = vmax.f32 %v989, 0.0
      %v1016 = vmax.f32 %v990, 0.0
      %v1017 = vmax.f32 %v991, 0.0
      %v1018 = vmax.f32 %v992, 0.0
      %v1019 = vmax.f32 %v993, 0.0
      %v1020 = vmax.f32 %v994, 0.0
      %v1021 = vmax.f32 %v995, 0.0
      %v1022 = vmax.f32 %v996, 0.0
      %v1023 = vmax.f32 %v997, 0.0
      %v1024 = vmax.f32 %v998, 0.0
      %v1025 = vmax.f32 %v999, 0.0
      %v1026 = vmax.f32 %v1000, 0.0
      %v1027 = vmax.f32 %v1001, 0.0
      %v1028 = vmax.f32 %v1002, 0.0
      %v1029 = vmax.f32 %v1003, 0.0
      %v1030 = vmax.f32 %v1004, 0.0
      %v1031 = vmax.f32 %v1005, 0.0
      %v1032 = vmax.f32 %v1006, 0.0
      %v1033 = vmax.f32 %v1007, 0.0
      %v1034 = vmax.f32 %v1008, 0.0
      %v1035 = vmax.f32 %v1009, 0.0
      %v1036 = vmax.f32 %v1010, 0.0
      %v1037 = vmax.f32 %v1011, 0.0
      %v1038 = vmax.f32 %v1012, 0.0
      %v1039 = vpack.c.bf16 %v428, %v425
      %v1040 = vpack.c.bf16 %v436, %v433
      %v1041 = vpack.c.bf16 %v444, %v441
      %v1042 = vpack.c.bf16 %v452, %v449
      %v1043 = vpack.c.bf16 %v460, %v457
      %v1044 = vpack.c.bf16 %v468, %v465
      %v1045 = vpack.c.bf16 %v473, %v473
      %v1046 = vpack.c.bf16 %v1015, %v1013
      %v1047 = vpack.c.bf16 %v1016, %v1014
      %v1048 = vpack.c.bf16 %v1019, %v1017
      %v1049 = vpack.c.bf16 %v1020, %v1018
      %v1050 = vpack.c.bf16 %v1023, %v1021
      %v1051 = vpack.c.bf16 %v1024, %v1022
      %v1052 = vpack.c.bf16 %v1027, %v1025
      %v1053 = vpack.c.bf16 %v1028, %v1026
      %v1054 = vpack.c.bf16 %v1031, %v1029
      %v1055 = vpack.c.bf16 %v1032, %v1030
      %v1056 = vpack.c.bf16 %v1035, %v1033
      %v1057 = vpack.c.bf16 %v1036, %v1034
      %v1058 = vpack.c.bf16 %v1037, %v1037
      %v1059 = vpack.c.bf16 %v1038, %v1038
      %vm1060 = vcmask 818176
      %v1062 = vsel %vm1060, %v1039, 0
      %v1065 = vsel %vm1060, %v1040, 0
      %v1068 = vsel %vm1060, %v1041, 0
      %v1071 = vsel %vm1060, %v1042, 0
      %v1074 = vsel %vm1060, %v1043, 0
      %v1077 = vsel %vm1060, %v1044, 0
      %v1080 = vsel %vm1060, %v1045, 0
      %vm1082 = vcmask 1041408
      %v1084 = vsel %vm1082, %v1058, 0
      %v1087 = vsel %vm1082, %v1059, 0
      %1089 = vmatprep.subr.bf16.mxu0 0
      %1090 = vmatpush1.bf16.msra.mxu0 0
      %1091 = vmatprep.subr.bf16.mxu0 %v1087
      %1092 = vmatpush1.bf16.msra.mxu0 %v1084
      %1093 = vmatprep.subr.bf16.mxu0 %v1057
      %1094 = vmatpush1.bf16.msra.mxu0 %v1056
      %1095 = vmatprep.subr.bf16.mxu0 %v1055
      %1096 = vmatpush1.bf16.msra.mxu0 %v1054
      %1097 = vmatprep.subr.bf16.mxu0 %v1053
      %1098 = vmatpush1.bf16.msra.mxu0 %v1052
      %1099 = vmatprep.subr.bf16.mxu0 %v1051
      %1100 = vmatpush1.bf16.msra.mxu0 %v1050
      %1101 = vmatprep.subr.bf16.mxu0 %v1049
      %1102 = vmatpush1.bf16.msra.mxu0 %v1048
      %1103 = vmatprep.subr.bf16.mxu0 %v1047
      %1104 = vmatpush1.bf16.msra.mxu0 %v1046
      %1105 = vmatprep.subr.bf16.mxu0 0
      %1106 = vmatpush2.bf16.msra.mxu0 0
      %1107 = vmatprep.subr.bf16.mxu0 0
      %1108 = vmatpush2.bf16.msra.mxu0 0
      %1109 = vmatprep.subr.bf16.mxu0 0
      %1110 = vmatpush2.bf16.msra.mxu0 0
      %1111 = vmatprep.subr.bf16.mxu0 0
      %1112 = vmatpush2.bf16.msra.mxu0 0
      %1113 = vmatprep.subr.bf16.mxu0 0
      %1114 = vmatpush2.bf16.msra.mxu0 0
      %1115 = vmatprep.subr.bf16.mxu0 0
      %1116 = vmatpush2.bf16.msra.mxu0 0
      %1117 = vmatprep.subr.bf16.mxu0 0
      %1118 = vmatpush2.bf16.msra.mxu0 0
      %1119 = vmatprep.subr.bf16.mxu0 0
      %1120 = vmatpush2.bf16.msra.mxu0 0
      %1121 = vmatprep.mubr.bf16.mxu0 0
      %1122 = vmatmul.mubr.bf16.gmra.mxu0 %v1062
      %v1123 = vpop.f32.mrf.mxu0
      %v1124 = vadd.f32 0.0, %v1123
      %v1125 = vpop.f32.mrf.mxu0
      %v1126 = vadd.f32 0.0, %v1125
      %v1127 = vpop.f32.mrf.mxu0
      %v1128 = vadd.f32 0.0, %v1127
      %v1129 = vpop.f32.mrf.mxu0
      %v1130 = vadd.f32 0.0, %v1129
      %1131 = vmatprep.mubr.bf16.mxu0 0
      %1132 = vmatmul.mubr.bf16.gmra.mxu0 %v1065
      %v1133 = vpop.f32.mrf.mxu0
      %v1134 = vadd.f32 0.0, %v1133
      %v1135 = vpop.f32.mrf.mxu0
      %v1136 = vadd.f32 0.0, %v1135
      %v1137 = vpop.f32.mrf.mxu0
      %v1138 = vadd.f32 0.0, %v1137
      %v1139 = vpop.f32.mrf.mxu0
      %v1140 = vadd.f32 0.0, %v1139
      %1141 = vmatprep.mubr.bf16.mxu0 0
      %1142 = vmatmul.mubr.bf16.gmra.mxu0 %v1068
      %v1143 = vpop.f32.mrf.mxu0
      %v1144 = vadd.f32 0.0, %v1143
      %v1145 = vpop.f32.mrf.mxu0
      %v1146 = vadd.f32 0.0, %v1145
      %v1147 = vpop.f32.mrf.mxu0
      %v1148 = vadd.f32 0.0, %v1147
      %v1149 = vpop.f32.mrf.mxu0
      %v1150 = vadd.f32 0.0, %v1149
      %1151 = vmatprep.mubr.bf16.mxu0 0
      %1152 = vmatmul.mubr.bf16.gmra.mxu0 %v1071
      %v1153 = vpop.f32.mrf.mxu0
      %v1154 = vadd.f32 0.0, %v1153
      %v1155 = vpop.f32.mrf.mxu0
      %v1156 = vadd.f32 0.0, %v1155
      %v1157 = vpop.f32.mrf.mxu0
      %v1158 = vadd.f32 0.0, %v1157
      %v1159 = vpop.f32.mrf.mxu0
      %v1160 = vadd.f32 0.0, %v1159
      %1161 = vmatprep.mubr.bf16.mxu0 0
      %1162 = vmatmul.mubr.bf16.gmra.mxu0 %v1074
      %v1163 = vpop.f32.mrf.mxu0
      %v1164 = vadd.f32 0.0, %v1163
      %v1165 = vpop.f32.mrf.mxu0
      %v1166 = vadd.f32 0.0, %v1165
      %v1167 = vpop.f32.mrf.mxu0
      %v1168 = vadd.f32 0.0, %v1167
      %v1169 = vpop.f32.mrf.mxu0
      %v1170 = vadd.f32 0.0, %v1169
      %1171 = vmatprep.mubr.bf16.mxu0 0
      %1172 = vmatmul.mubr.bf16.gmra.mxu0 %v1077
      %v1173 = vpop.f32.mrf.mxu0
      %v1174 = vadd.f32 0.0, %v1173
      %v1175 = vpop.f32.mrf.mxu0
      %v1176 = vadd.f32 0.0, %v1175
      %v1177 = vpop.f32.mrf.mxu0
      %v1178 = vadd.f32 0.0, %v1177
      %v1179 = vpop.f32.mrf.mxu0
      %v1180 = vadd.f32 0.0, %v1179
      %1181 = vmatprep.mubr.bf16.mxu0 0
      %1182 = vmatmul.mubr.bf16.gmra.mxu0 %v1080
      %v1183 = vpop.f32.mrf.mxu0
      %v1184 = vadd.f32 0.0, %v1183
      %v1185 = vpop.f32.mrf.mxu0
      %v1186 = vadd.f32 0.0, %v1185
      %v1187 = vpop.f32.mrf.mxu0
      %v1188 = vpop.f32.mrf.mxu0
      %1189 = vdwg.mxu0
      %v1190 = vadd.f32 %v1124, %v1126
      %1191 = vadd.xlane.f32.xlu0 %v1190
      %v1192 = vpop.xlane.xlu0 %1191
      %v1193 = vadd.f32 %v1128, %v1130
      %1194 = vadd.xlane.f32.xlu0 %v1193
      %v1195 = vpop.xlane.xlu0 %1194
      %v1196 = vadd.f32 %v1134, %v1136
      %1197 = vadd.xlane.f32.xlu0 %v1196
      %v1198 = vpop.xlane.xlu0 %1197
      %v1199 = vadd.f32 %v1138, %v1140
      %1200 = vadd.xlane.f32.xlu0 %v1199
      %v1201 = vpop.xlane.xlu0 %1200
      %v1202 = vadd.f32 %v1144, %v1146
      %1203 = vadd.xlane.f32.xlu0 %v1202
      %v1204 = vpop.xlane.xlu0 %1203
      %v1205 = vadd.f32 %v1148, %v1150
      %1206 = vadd.xlane.f32.xlu0 %v1205
      %v1207 = vpop.xlane.xlu0 %1206
      %v1208 = vadd.f32 %v1154, %v1156
      %1209 = vadd.xlane.f32.xlu0 %v1208
      %v1210 = vpop.xlane.xlu0 %1209
      %v1211 = vadd.f32 %v1158, %v1160
      %1212 = vadd.xlane.f32.xlu0 %v1211
      %v1213 = vpop.xlane.xlu0 %1212
      %v1214 = vadd.f32 %v1164, %v1166
      %1215 = vadd.xlane.f32.xlu0 %v1214
      %v1216 = vpop.xlane.xlu0 %1215
      %v1217 = vadd.f32 %v1168, %v1170
      %1218 = vadd.xlane.f32.xlu0 %v1217
      %v1219 = vpop.xlane.xlu0 %1218
      %v1220 = vadd.f32 %v1174, %v1176
      %1221 = vadd.xlane.f32.xlu0 %v1220
      %v1222 = vpop.xlane.xlu0 %1221
      %v1223 = vadd.f32 %v1178, %v1180
      %1224 = vadd.xlane.f32.xlu0 %v1223
      %v1225 = vpop.xlane.xlu0 %1224
      %vm1226 = vcmask 1043456
      %v1227 = vsel %vm1226, %v1184, 0.0
      %v1228 = vsel %vm1226, %v1186, 0.0
      %v1229 = vadd.f32 %v1227, %v1228
      %1230 = vadd.xlane.f32.xlu0 %v1229
      %v1231 = vpop.xlane.xlu0 %1230
      %v1232 = vmul.f32 %v1124, %v1124
      %v1233 = vmul.f32 %v1126, %v1126
      %v1234 = vmul.f32 %v1128, %v1128
      %v1235 = vmul.f32 %v1130, %v1130
      %v1236 = vmul.f32 %v1134, %v1134
      %v1237 = vmul.f32 %v1136, %v1136
      %v1238 = vmul.f32 %v1138, %v1138
      %v1239 = vmul.f32 %v1140, %v1140
      %v1240 = vmul.f32 %v1144, %v1144
      %v1241 = vmul.f32 %v1146, %v1146
      %v1242 = vmul.f32 %v1148, %v1148
      %v1243 = vmul.f32 %v1150, %v1150
      %v1244 = vmul.f32 %v1154, %v1154
      %v1245 = vmul.f32 %v1156, %v1156
      %v1246 = vmul.f32 %v1158, %v1158
      %v1247 = vmul.f32 %v1160, %v1160
      %v1248 = vmul.f32 %v1164, %v1164
      %v1249 = vmul.f32 %v1166, %v1166
      %v1250 = vmul.f32 %v1168, %v1168
      %v1251 = vmul.f32 %v1170, %v1170
      %v1252 = vmul.f32 %v1174, %v1174
      %v1253 = vmul.f32 %v1176, %v1176
      %v1254 = vmul.f32 %v1178, %v1178
      %v1255 = vmul.f32 %v1180, %v1180
      %v1256 = vmul.f32 %v1184, %v1184
      %v1257 = vmul.f32 %v1186, %v1186
      %v1258 = vadd.f32 %v1232, %v1233
      %1259 = vadd.xlane.f32.xlu0 %v1258
      %v1260 = vpop.xlane.xlu0 %1259
      %v1261 = vadd.f32 %v1234, %v1235
      %1262 = vadd.xlane.f32.xlu0 %v1261
      %v1263 = vpop.xlane.xlu0 %1262
      %v1264 = vadd.f32 %v1236, %v1237
      %1265 = vadd.xlane.f32.xlu0 %v1264
      %v1266 = vpop.xlane.xlu0 %1265
      %v1267 = vadd.f32 %v1238, %v1239
      %1268 = vadd.xlane.f32.xlu0 %v1267
      %v1269 = vpop.xlane.xlu0 %1268
      %v1270 = vadd.f32 %v1240, %v1241
      %1271 = vadd.xlane.f32.xlu0 %v1270
      %v1272 = vpop.xlane.xlu0 %1271
      %v1273 = vadd.f32 %v1242, %v1243
      %1274 = vadd.xlane.f32.xlu0 %v1273
      %v1275 = vpop.xlane.xlu0 %1274
      %v1276 = vadd.f32 %v1244, %v1245
      %1277 = vadd.xlane.f32.xlu0 %v1276
      %v1278 = vpop.xlane.xlu0 %1277
      %v1279 = vadd.f32 %v1246, %v1247
      %1280 = vadd.xlane.f32.xlu0 %v1279
      %v1281 = vpop.xlane.xlu0 %1280
      %v1282 = vadd.f32 %v1248, %v1249
      %1283 = vadd.xlane.f32.xlu0 %v1282
      %v1284 = vpop.xlane.xlu0 %1283
      %v1285 = vadd.f32 %v1250, %v1251
      %1286 = vadd.xlane.f32.xlu0 %v1285
      %v1287 = vpop.xlane.xlu0 %1286
      %v1288 = vadd.f32 %v1252, %v1253
      %1289 = vadd.xlane.f32.xlu0 %v1288
      %v1290 = vpop.xlane.xlu0 %1289
      %v1291 = vadd.f32 %v1254, %v1255
      %1292 = vadd.xlane.f32.xlu0 %v1291
      %v1293 = vpop.xlane.xlu0 %1292
      %v1294 = vsel %vm1226, %v1256, 0.0
      %v1295 = vsel %vm1226, %v1257, 0.0
      %v1296 = vadd.f32 %v1294, %v1295
      %1297 = vadd.xlane.f32.xlu0 %v1296
      %v1298 = vpop.xlane.xlu0 %1297
      %v1299 = vmul.f32 %v1192, 0.00390625
      %v1300 = vmul.f32 %v1195, 0.00390625
      %v1301 = vmul.f32 %v1198, 0.00390625
      %v1302 = vmul.f32 %v1201, 0.00390625
      %v1303 = vmul.f32 %v1204, 0.00390625
      %v1304 = vmul.f32 %v1207, 0.00390625
      %v1305 = vmul.f32 %v1210, 0.00390625
      %v1306 = vmul.f32 %v1213, 0.00390625
      %v1307 = vmul.f32 %v1216, 0.00390625
      %v1308 = vmul.f32 %v1219, 0.00390625
      %v1309 = vmul.f32 %v1222, 0.00390625
      %v1310 = vmul.f32 %v1225, 0.00390625
      %v1311 = vmul.f32 %v1231, 0.00390625
      %v1312 = vmul.f32 %v1260, 0.00390625
      %v1313 = vmul.f32 %v1263, 0.00390625
      %v1314 = vmul.f32 %v1266, 0.00390625
      %v1315 = vmul.f32 %v1269, 0.00390625
      %v1316 = vmul.f32 %v1272, 0.00390625
      %v1317 = vmul.f32 %v1275, 0.00390625
      %v1318 = vmul.f32 %v1278, 0.00390625
      %v1319 = vmul.f32 %v1281, 0.00390625
      %v1320 = vmul.f32 %v1284, 0.00390625
      %v1321 = vmul.f32 %v1287, 0.00390625
      %v1322 = vmul.f32 %v1290, 0.00390625
      %v1323 = vmul.f32 %v1293, 0.00390625
      %v1324 = vmul.f32 %v1298, 0.00390625
      %v1325 = vmul.f32 %v1299, %v1299
      %v1326 = vmul.f32 %v1300, %v1300
      %v1327 = vmul.f32 %v1301, %v1301
      %v1328 = vmul.f32 %v1302, %v1302
      %v1329 = vmul.f32 %v1303, %v1303
      %v1330 = vmul.f32 %v1304, %v1304
      %v1331 = vmul.f32 %v1305, %v1305
      %v1332 = vmul.f32 %v1306, %v1306
      %v1333 = vmul.f32 %v1307, %v1307
      %v1334 = vmul.f32 %v1308, %v1308
      %v1335 = vmul.f32 %v1309, %v1309
      %v1336 = vmul.f32 %v1310, %v1310
      %v1337 = vmul.f32 %v1311, %v1311
      %v1338 = vsub.f32 %v1312, %v1325
      %v1339 = vsub.f32 %v1313, %v1326
      %v1340 = vsub.f32 %v1314, %v1327
      %v1341 = vsub.f32 %v1315, %v1328
      %v1342 = vsub.f32 %v1316, %v1329
      %v1343 = vsub.f32 %v1317, %v1330
      %v1344 = vsub.f32 %v1318, %v1331
      %v1345 = vsub.f32 %v1319, %v1332
      %v1346 = vsub.f32 %v1320, %v1333
      %v1347 = vsub.f32 %v1321, %v1334
      %v1348 = vsub.f32 %v1322, %v1335
      %v1349 = vsub.f32 %v1323, %v1336
      %v1350 = vsub.f32 %v1324, %v1337
      %v1351 = vadd.f32 %v1338, 1e-05
      %v1352 = vadd.f32 %v1339, 1e-05
      %v1353 = vadd.f32 %v1340, 1e-05
      %v1354 = vadd.f32 %v1341, 1e-05
      %v1355 = vadd.f32 %v1342, 1e-05
      %v1356 = vadd.f32 %v1343, 1e-05
      %v1357 = vadd.f32 %v1344, 1e-05
      %v1358 = vadd.f32 %v1345, 1e-05
      %v1359 = vadd.f32 %v1346, 1e-05
      %v1360 = vadd.f32 %v1347, 1e-05
      %v1361 = vadd.f32 %v1348, 1e-05
      %v1362 = vadd.f32 %v1349, 1e-05
      %v1363 = vadd.f32 %v1350, 1e-05
      %v1364 = vrsqrt.pop %v1351
      %v1365 = vrsqrt.pop %v1352
      %v1366 = vrsqrt.pop %v1353
      %v1367 = vrsqrt.pop %v1354
      %v1368 = vrsqrt.pop %v1355
      %v1369 = vrsqrt.pop %v1356
      %v1370 = vrsqrt.pop %v1357
      %v1371 = vrsqrt.pop %v1358
      %v1372 = vrsqrt.pop %v1359
      %v1373 = vrsqrt.pop %v1360
      %v1374 = vrsqrt.pop %v1361
      %v1375 = vrsqrt.pop %v1362
      %v1376 = vrsqrt.pop %v1363
      %v1377 = vsub.f32 %v1124, %v1299
      %v1378 = vsub.f32 %v1126, %v1299
      %v1379 = vsub.f32 %v1128, %v1300
      %v1380 = vsub.f32 %v1130, %v1300
      %v1381 = vsub.f32 %v1134, %v1301
      %v1382 = vsub.f32 %v1136, %v1301
      %v1383 = vsub.f32 %v1138, %v1302
      %v1384 = vsub.f32 %v1140, %v1302
      %v1385 = vsub.f32 %v1144, %v1303
      %v1386 = vsub.f32 %v1146, %v1303
      %v1387 = vsub.f32 %v1148, %v1304
      %v1388 = vsub.f32 %v1150, %v1304
      %v1389 = vsub.f32 %v1154, %v1305
      %v1390 = vsub.f32 %v1156, %v1305
      %v1391 = vsub.f32 %v1158, %v1306
      %v1392 = vsub.f32 %v1160, %v1306
      %v1393 = vsub.f32 %v1164, %v1307
      %v1394 = vsub.f32 %v1166, %v1307
      %v1395 = vsub.f32 %v1168, %v1308
      %v1396 = vsub.f32 %v1170, %v1308
      %v1397 = vsub.f32 %v1174, %v1309
      %v1398 = vsub.f32 %v1176, %v1309
      %v1399 = vsub.f32 %v1178, %v1310
      %v1400 = vsub.f32 %v1180, %v1310
      %v1401 = vsub.f32 %v1184, %v1311
      %v1402 = vsub.f32 %v1186, %v1311
      %v1403 = vmul.f32 %v1377, %v1364
      %v1404 = vmul.f32 %v1378, %v1364
      %v1405 = vmul.f32 %v1379, %v1365
      %v1406 = vmul.f32 %v1380, %v1365
      %v1407 = vmul.f32 %v1381, %v1366
      %v1408 = vmul.f32 %v1382, %v1366
      %v1409 = vmul.f32 %v1383, %v1367
      %v1410 = vmul.f32 %v1384, %v1367
      %v1411 = vmul.f32 %v1385, %v1368
      %v1412 = vmul.f32 %v1386, %v1368
      %v1413 = vmul.f32 %v1387, %v1369
      %v1414 = vmul.f32 %v1388, %v1369
      %v1415 = vmul.f32 %v1389, %v1370
      %v1416 = vmul.f32 %v1390, %v1370
      %v1417 = vmul.f32 %v1391, %v1371
      %v1418 = vmul.f32 %v1392, %v1371
      %v1419 = vmul.f32 %v1393, %v1372
      %v1420 = vmul.f32 %v1394, %v1372
      %v1421 = vmul.f32 %v1395, %v1373
      %v1422 = vmul.f32 %v1396, %v1373
      %v1423 = vmul.f32 %v1397, %v1374
      %v1424 = vmul.f32 %v1398, %v1374
      %v1425 = vmul.f32 %v1399, %v1375
      %v1426 = vmul.f32 %v1400, %v1375
      %v1427 = vmul.f32 %v1401, %v1376
      %v1428 = vmul.f32 %v1402, %v1376
      %v1430 = vlaneseq
      %v1431 = vshrl.u32 %v1430, 7
      %v1432 = vsub.s32 0, %v1431
      %v1433 = vrot.slane %v335, %v1432
      %v1434 = vlaneseq
      %v1435 = vshrl.u32 %v1434, 7
      %v1436 = vsub.s32 1, %v1435
      %v1437 = vrot.slane %v335, %v1436
      %v1440 = vmul.f32 %v1403, %v1433
      %v1441 = vmul.f32 %v1404, %v1437
      %v1442 = vmul.f32 %v1405, %v1433
      %v1443 = vmul.f32 %v1406, %v1437
      %v1444 = vmul.f32 %v1407, %v1433
      %v1445 = vmul.f32 %v1408, %v1437
      %v1446 = vmul.f32 %v1409, %v1433
      %v1447 = vmul.f32 %v1410, %v1437
      %v1448 = vmul.f32 %v1411, %v1433
      %v1449 = vmul.f32 %v1412, %v1437
      %v1450 = vmul.f32 %v1413, %v1433
      %v1451 = vmul.f32 %v1414, %v1437
      %v1452 = vmul.f32 %v1415, %v1433
      %v1453 = vmul.f32 %v1416, %v1437
      %v1454 = vmul.f32 %v1417, %v1433
      %v1455 = vmul.f32 %v1418, %v1437
      %v1456 = vmul.f32 %v1419, %v1433
      %v1457 = vmul.f32 %v1420, %v1437
      %v1458 = vmul.f32 %v1421, %v1433
      %v1459 = vmul.f32 %v1422, %v1437
      %v1460 = vmul.f32 %v1423, %v1433
      %v1461 = vmul.f32 %v1424, %v1437
      %v1462 = vmul.f32 %v1425, %v1433
      %v1463 = vmul.f32 %v1426, %v1437
      %v1464 = vmul.f32 %v1427, %v1433
      %v1465 = vmul.f32 %v1428, %v1437
      %v1467 = vlaneseq
      %v1468 = vshrl.u32 %v1467, 7
      %v1469 = vsub.s32 0, %v1468
      %v1470 = vrot.slane %v336, %v1469
      %v1471 = vlaneseq
      %v1472 = vshrl.u32 %v1471, 7
      %v1473 = vsub.s32 1, %v1472
      %v1474 = vrot.slane %v336, %v1473
      %v1477 = vadd.f32 %v1440, %v1470
      %v1478 = vadd.f32 %v1441, %v1474
      %v1479 = vadd.f32 %v1442, %v1470
      %v1480 = vadd.f32 %v1443, %v1474
      %v1481 = vadd.f32 %v1444, %v1470
      %v1482 = vadd.f32 %v1445, %v1474
      %v1483 = vadd.f32 %v1446, %v1470
      %v1484 = vadd.f32 %v1447, %v1474
      %v1485 = vadd.f32 %v1448, %v1470
      %v1486 = vadd.f32 %v1449, %v1474
      %v1487 = vadd.f32 %v1450, %v1470
      %v1488 = vadd.f32 %v1451, %v1474
      %v1489 = vadd.f32 %v1452, %v1470
      %v1490 = vadd.f32 %v1453, %v1474
      %v1491 = vadd.f32 %v1454, %v1470
      %v1492 = vadd.f32 %v1455, %v1474
      %v1493 = vadd.f32 %v1456, %v1470
      %v1494 = vadd.f32 %v1457, %v1474
      %v1495 = vadd.f32 %v1458, %v1470
      %v1496 = vadd.f32 %v1459, %v1474
      %v1497 = vadd.f32 %v1460, %v1470
      %v1498 = vadd.f32 %v1461, %v1474
      %v1499 = vadd.f32 %v1462, %v1470
      %v1500 = vadd.f32 %v1463, %v1474
      %v1501 = vadd.f32 %v1464, %v1470
      %v1502 = vadd.f32 %v1465, %v1474
      %1503 = vst [vmem:[%s283] sm:$0xff] %v1477
      %1504 = vst [vmem:[%s283 + $0x8] sm:$0xff] %v1478
      %1505 = vst [vmem:[%s283 + $0x10] sm:$0xff] %v1479
      %1506 = vst [vmem:[%s283 + $0x18] sm:$0xff] %v1480
      %1507 = vst [vmem:[%s283 + $0x20] sm:$0xff] %v1481
      %1508 = vst [vmem:[%s283 + $0x28] sm:$0xff] %v1482
      %1509 = vst [vmem:[%s283 + $0x30] sm:$0xff] %v1483
      %1510 = vst [vmem:[%s283 + $0x38] sm:$0xff] %v1484
      %1511 = vst [vmem:[%s283 + $0x40] sm:$0xff] %v1485
      %1512 = vst [vmem:[%s283 + $0x48] sm:$0xff] %v1486
      %1513 = vst [vmem:[%s283 + $0x50] sm:$0xff] %v1487
      %1514 = vst [vmem:[%s283 + $0x58] sm:$0xff] %v1488
      %1515 = vst [vmem:[%s283 + $0x60] sm:$0xff] %v1489
      %1516 = vst [vmem:[%s283 + $0x68] sm:$0xff] %v1490
      %1517 = vst [vmem:[%s283 + $0x70] sm:$0xff] %v1491
      %1518 = vst [vmem:[%s283 + $0x78] sm:$0xff] %v1492
      %1519 = vst [vmem:[%s283 + $0x80] sm:$0xff] %v1493
      %1520 = vst [vmem:[%s283 + $0x88] sm:$0xff] %v1494
      %1521 = vst [vmem:[%s283 + $0x90] sm:$0xff] %v1495
      %1522 = vst [vmem:[%s283 + $0x98] sm:$0xff] %v1496
      %1523 = vst [vmem:[%s283 + $0xa0] sm:$0xff] %v1497
      %1524 = vst [vmem:[%s283 + $0xa8] sm:$0xff] %v1498
      %1525 = vst [vmem:[%s283 + $0xb0] sm:$0xff] %v1499
      %1526 = vst [vmem:[%s283 + $0xb8] sm:$0xff] %v1500
      %1527 = vst [vmem:[%s283 + $0xc0] sm:$0xf] %v1501
      %1528 = vst [vmem:[%s283 + $0xc8] sm:$0xf] %v1502
      %s1529 = scalar_lea.vmem %s269, 208
      %v1530 = vld [vmem:[%s1529] sm:$0xff]
      %v1531 = vld [vmem:[%s1529 + $0x8] sm:$0xff]
      %v1532 = vld [vmem:[%s1529 + $0x10] sm:$0xff]
      %v1533 = vld [vmem:[%s1529 + $0x18] sm:$0xff]
      %v1534 = vld [vmem:[%s1529 + $0x20] sm:$0xff]
      %v1535 = vld [vmem:[%s1529 + $0x28] sm:$0xff]
      %v1536 = vld [vmem:[%s1529 + $0x30] sm:$0xff]
      %v1537 = vld [vmem:[%s1529 + $0x38] sm:$0xff]
      %v1538 = vld [vmem:[%s1529 + $0x40] sm:$0xff]
      %v1539 = vld [vmem:[%s1529 + $0x48] sm:$0xff]
      %v1540 = vld [vmem:[%s1529 + $0x50] sm:$0xff]
      %v1541 = vld [vmem:[%s1529 + $0x58] sm:$0xff]
      %v1542 = vld [vmem:[%s1529 + $0x60] sm:$0xff]
      %v1543 = vld [vmem:[%s1529 + $0x68] sm:$0xff]
      %v1544 = vld [vmem:[%s1529 + $0x70] sm:$0xff]
      %v1545 = vld [vmem:[%s1529 + $0x78] sm:$0xff]
      %v1546 = vld [vmem:[%s1529 + $0x80] sm:$0xff]
      %v1547 = vld [vmem:[%s1529 + $0x88] sm:$0xff]
      %v1548 = vld [vmem:[%s1529 + $0x90] sm:$0xff]
      %v1549 = vld [vmem:[%s1529 + $0x98] sm:$0xff]
      %v1550 = vld [vmem:[%s1529 + $0xa0] sm:$0xff]
      %v1551 = vld [vmem:[%s1529 + $0xa8] sm:$0xff]
      %v1552 = vld [vmem:[%s1529 + $0xb0] sm:$0xff]
      %v1553 = vld [vmem:[%s1529 + $0xb8] sm:$0xff]
      %v1554 = vld [vmem:[%s1529 + $0xc0] sm:$0xf]
      %v1555 = vld [vmem:[%s1529 + $0xc8] sm:$0xf]
      %v1556 = vpack.c.bf16 %v1532, %v1530
      %v1557 = vpack.c.bf16 %v1533, %v1531
      %v1558 = vpack.c.bf16 %v1536, %v1534
      %v1559 = vpack.c.bf16 %v1537, %v1535
      %v1560 = vpack.c.bf16 %v1540, %v1538
      %v1561 = vpack.c.bf16 %v1541, %v1539
      %v1562 = vpack.c.bf16 %v1544, %v1542
      %v1563 = vpack.c.bf16 %v1545, %v1543
      %v1564 = vpack.c.bf16 %v1548, %v1546
      %v1565 = vpack.c.bf16 %v1549, %v1547
      %v1566 = vpack.c.bf16 %v1552, %v1550
      %v1567 = vpack.c.bf16 %v1553, %v1551
      %v1568 = vpack.c.bf16 %v1554, %v1554
      %v1569 = vpack.c.bf16 %v1555, %v1555
      %1570 = vmatprep.subr.bf16.mxu0 0
      %1571 = vmatpush1.bf16.msra.mxu0 %v325
      %1572 = vmatprep.subr.bf16.mxu0 0
      %1573 = vmatpush1.bf16.msra.mxu0 %v324
      %1574 = vmatprep.subr.bf16.mxu0 0
      %1575 = vmatpush1.bf16.msra.mxu0 %v323
      %1576 = vmatprep.subr.bf16.mxu0 0
      %1577 = vmatpush1.bf16.msra.mxu0 %v322
      %1578 = vmatprep.subr.bf16.mxu0 0
      %1579 = vmatpush1.bf16.msra.mxu0 %v321
      %1580 = vmatprep.subr.bf16.mxu0 0
      %1581 = vmatpush1.bf16.msra.mxu0 %v320
      %1582 = vmatprep.subr.bf16.mxu0 0
      %1583 = vmatpush1.bf16.msra.mxu0 %v319
      %1584 = vmatprep.subr.bf16.mxu0 0
      %1585 = vmatpush1.bf16.msra.mxu0 %v318
      %1586 = vmatprep.subr.bf16.mxu0 0
      %1587 = vmatpush2.bf16.msra.mxu0 %v333
      %1588 = vmatprep.subr.bf16.mxu0 0
      %1589 = vmatpush2.bf16.msra.mxu0 %v332
      %1590 = vmatprep.subr.bf16.mxu0 0
      %1591 = vmatpush2.bf16.msra.mxu0 %v331
      %1592 = vmatprep.subr.bf16.mxu0 0
      %1593 = vmatpush2.bf16.msra.mxu0 %v330
      %1594 = vmatprep.subr.bf16.mxu0 0
      %1595 = vmatpush2.bf16.msra.mxu0 %v329
      %1596 = vmatprep.subr.bf16.mxu0 0
      %1597 = vmatpush2.bf16.msra.mxu0 %v328
      %1598 = vmatprep.subr.bf16.mxu0 0
      %1599 = vmatpush2.bf16.msra.mxu0 %v327
      %1600 = vmatprep.subr.bf16.mxu0 0
      %1601 = vmatpush2.bf16.msra.mxu0 %v326
      %1602 = vmatprep.mubr.bf16.mxu0 %v1557
      %1603 = vmatmul.mubr.bf16.gmra.mxu0 %v1556
      %v1604 = vpop.f32.mrf.mxu0
      %v1605 = vadd.f32 %v388, %v1604
      %v1606 = vpop.f32.mrf.mxu0
      %v1607 = vpop.f32.mrf.mxu0
      %v1608 = vadd.f32 %v388, %v1607
      %v1609 = vpop.f32.mrf.mxu0
      %1610 = vmatprep.mubr.bf16.mxu0 %v1559
      %1611 = vmatmul.mubr.bf16.gmra.mxu0 %v1558
      %v1612 = vpop.f32.mrf.mxu0
      %v1613 = vadd.f32 %v388, %v1612
      %v1614 = vpop.f32.mrf.mxu0
      %v1615 = vpop.f32.mrf.mxu0
      %v1616 = vadd.f32 %v388, %v1615
      %v1617 = vpop.f32.mrf.mxu0
      %1618 = vmatprep.mubr.bf16.mxu0 %v1561
      %1619 = vmatmul.mubr.bf16.gmra.mxu0 %v1560
      %v1620 = vpop.f32.mrf.mxu0
      %v1621 = vadd.f32 %v388, %v1620
      %v1622 = vpop.f32.mrf.mxu0
      %v1623 = vpop.f32.mrf.mxu0
      %v1624 = vadd.f32 %v388, %v1623
      %v1625 = vpop.f32.mrf.mxu0
      %1626 = vmatprep.mubr.bf16.mxu0 %v1563
      %1627 = vmatmul.mubr.bf16.gmra.mxu0 %v1562
      %v1628 = vpop.f32.mrf.mxu0
      %v1629 = vadd.f32 %v388, %v1628
      %v1630 = vpop.f32.mrf.mxu0
      %v1631 = vpop.f32.mrf.mxu0
      %v1632 = vadd.f32 %v388, %v1631
      %v1633 = vpop.f32.mrf.mxu0
      %1634 = vmatprep.mubr.bf16.mxu0 %v1565
      %1635 = vmatmul.mubr.bf16.gmra.mxu0 %v1564
      %v1636 = vpop.f32.mrf.mxu0
      %v1637 = vadd.f32 %v388, %v1636
      %v1638 = vpop.f32.mrf.mxu0
      %v1639 = vpop.f32.mrf.mxu0
      %v1640 = vadd.f32 %v388, %v1639
      %v1641 = vpop.f32.mrf.mxu0
      %1642 = vmatprep.mubr.bf16.mxu0 %v1567
      %1643 = vmatmul.mubr.bf16.gmra.mxu0 %v1566
      %v1644 = vpop.f32.mrf.mxu0
      %v1645 = vadd.f32 %v388, %v1644
      %v1646 = vpop.f32.mrf.mxu0
      %v1647 = vpop.f32.mrf.mxu0
      %v1648 = vadd.f32 %v388, %v1647
      %v1649 = vpop.f32.mrf.mxu0
      %1650 = vmatprep.mubr.bf16.mxu0 %v1569
      %1651 = vmatmul.mubr.bf16.gmra.mxu0 %v1568
      %v1652 = vpop.f32.mrf.mxu0
      %v1653 = vadd.f32 %v388, %v1652
      %v1654 = vpop.f32.mrf.mxu0
      %v1655 = vpop.f32.mrf.mxu0
      %v1656 = vpop.f32.mrf.mxu0
      %1657 = vdwg.mxu0
      %s1658 = scalar_lea.vmem %s276, 208
      %v1659 = vld [vmem:[%s1658] sm:$0xff]
      %v1660 = vld [vmem:[%s1658 + $0x8] sm:$0xff]
      %v1661 = vld [vmem:[%s1658 + $0x10] sm:$0xff]
      %v1662 = vld [vmem:[%s1658 + $0x18] sm:$0xff]
      %v1663 = vld [vmem:[%s1658 + $0x20] sm:$0xff]
      %v1664 = vld [vmem:[%s1658 + $0x28] sm:$0xff]
      %v1665 = vld [vmem:[%s1658 + $0x30] sm:$0xff]
      %v1666 = vld [vmem:[%s1658 + $0x38] sm:$0xff]
      %v1667 = vld [vmem:[%s1658 + $0x40] sm:$0xff]
      %v1668 = vld [vmem:[%s1658 + $0x48] sm:$0xff]
      %v1669 = vld [vmem:[%s1658 + $0x50] sm:$0xff]
      %v1670 = vld [vmem:[%s1658 + $0x58] sm:$0xff]
      %v1671 = vld [vmem:[%s1658 + $0x60] sm:$0xff]
      %v1672 = vld [vmem:[%s1658 + $0x68] sm:$0xff]
      %v1673 = vld [vmem:[%s1658 + $0x70] sm:$0xff]
      %v1674 = vld [vmem:[%s1658 + $0x78] sm:$0xff]
      %v1675 = vld [vmem:[%s1658 + $0x80] sm:$0xff]
      %v1676 = vld [vmem:[%s1658 + $0x88] sm:$0xff]
      %v1677 = vld [vmem:[%s1658 + $0x90] sm:$0xff]
      %v1678 = vld [vmem:[%s1658 + $0x98] sm:$0xff]
      %v1679 = vld [vmem:[%s1658 + $0xa0] sm:$0xff]
      %v1680 = vld [vmem:[%s1658 + $0xa8] sm:$0xff]
      %v1681 = vld [vmem:[%s1658 + $0xb0] sm:$0xff]
      %v1682 = vld [vmem:[%s1658 + $0xb8] sm:$0xff]
      %v1683 = vld [vmem:[%s1658 + $0xc0] sm:$0xf]
      %v1684 = vld [vmem:[%s1658 + $0xc8] sm:$0xf]
      %1685 = vrot.lane.b32.xlu0 %v1659, 1
      %v1686 = vpop.permute.xlu0 %1685
      %1687 = vrot.lane.b32.xlu0 %v1661, 1
      %v1688 = vpop.permute.xlu0 %1687
      %1689 = vrot.lane.b32.xlu0 %v1663, 1
      %v1690 = vpop.permute.xlu0 %1689
      %1691 = vrot.lane.b32.xlu0 %v1665, 1
      %v1692 = vpop.permute.xlu0 %1691
      %1693 = vrot.lane.b32.xlu0 %v1667, 1
      %v1694 = vpop.permute.xlu0 %1693
      %1695 = vrot.lane.b32.xlu0 %v1669, 1
      %v1696 = vpop.permute.xlu0 %1695
      %1697 = vrot.lane.b32.xlu0 %v1671, 1
      %v1698 = vpop.permute.xlu0 %1697
      %1699 = vrot.lane.b32.xlu0 %v1673, 1
      %v1700 = vpop.permute.xlu0 %1699
      %1701 = vrot.lane.b32.xlu0 %v1675, 1
      %v1702 = vpop.permute.xlu0 %1701
      %1703 = vrot.lane.b32.xlu0 %v1677, 1
      %v1704 = vpop.permute.xlu0 %1703
      %1705 = vrot.lane.b32.xlu0 %v1679, 1
      %v1706 = vpop.permute.xlu0 %1705
      %1707 = vrot.lane.b32.xlu0 %v1681, 1
      %v1708 = vpop.permute.xlu0 %1707
      %1709 = vrot.lane.b32.xlu0 %v1683, 1
      %v1710 = vpop.permute.xlu0 %1709
      %1711 = vrot.lane.b32.xlu0 %v1660, 1
      %v1712 = vpop.permute.xlu0 %1711
      %1713 = vrot.lane.b32.xlu0 %v1662, 1
      %v1714 = vpop.permute.xlu0 %1713
      %1715 = vrot.lane.b32.xlu0 %v1664, 1
      %v1716 = vpop.permute.xlu0 %1715
      %1717 = vrot.lane.b32.xlu0 %v1666, 1
      %v1718 = vpop.permute.xlu0 %1717
      %1719 = vrot.lane.b32.xlu0 %v1668, 1
      %v1720 = vpop.permute.xlu0 %1719
      %1721 = vrot.lane.b32.xlu0 %v1670, 1
      %v1722 = vpop.permute.xlu0 %1721
      %1723 = vrot.lane.b32.xlu0 %v1672, 1
      %v1724 = vpop.permute.xlu0 %1723
      %1725 = vrot.lane.b32.xlu0 %v1674, 1
      %v1726 = vpop.permute.xlu0 %1725
      %1727 = vrot.lane.b32.xlu0 %v1676, 1
      %v1728 = vpop.permute.xlu0 %1727
      %1729 = vrot.lane.b32.xlu0 %v1678, 1
      %v1730 = vpop.permute.xlu0 %1729
      %1731 = vrot.lane.b32.xlu0 %v1680, 1
      %v1732 = vpop.permute.xlu0 %1731
      %1733 = vrot.lane.b32.xlu0 %v1682, 1
      %v1734 = vpop.permute.xlu0 %1733
      %1735 = vrot.lane.b32.xlu0 %v1684, 1
      %v1736 = vpop.permute.xlu0 %1735
      %v1737 = vsel %vm556, %v1686, %v1712
      %v1738 = vsel %vm556, %v1688, %v1714
      %v1739 = vsel %vm556, %v1690, %v1716
      %v1740 = vsel %vm556, %v1692, %v1718
      %v1741 = vsel %vm556, %v1694, %v1720
      %v1742 = vsel %vm556, %v1696, %v1722
      %v1743 = vsel %vm556, %v1698, %v1724
      %v1744 = vsel %vm556, %v1700, %v1726
      %v1745 = vsel %vm556, %v1702, %v1728
      %v1746 = vsel %vm556, %v1704, %v1730
      %v1747 = vsel %vm556, %v1706, %v1732
      %v1748 = vsel %vm556, %v1708, %v1734
      %v1749 = vsel %vm556, %v1710, %v1736
      %v1750 = vsel %vm556, %v1712, %v1686
      %v1751 = vsel %vm556, %v1714, %v1688
      %v1752 = vsel %vm556, %v1716, %v1690
      %v1753 = vsel %vm556, %v1718, %v1692
      %v1754 = vsel %vm556, %v1720, %v1694
      %v1755 = vsel %vm556, %v1722, %v1696
      %v1756 = vsel %vm556, %v1724, %v1698
      %v1757 = vsel %vm556, %v1726, %v1700
      %v1758 = vsel %vm556, %v1728, %v1702
      %v1759 = vsel %vm556, %v1730, %v1704
      %v1760 = vsel %vm556, %v1732, %v1706
      %v1761 = vsel %vm556, %v1734, %v1708
      %v1762 = vsel %vm556, %v1736, %v1710
      %v1763 = vsel %vm340, %v1750, 0.0
      %v1764 = vsel %vm341, %v1737, 0.0
      %v1765 = vsel %vm340, %v1751, 0.0
      %v1766 = vsel %vm341, %v1738, 0.0
      %v1767 = vsel %vm340, %v1752, 0.0
      %v1768 = vsel %vm341, %v1739, 0.0
      %v1769 = vsel %vm340, %v1753, 0.0
      %v1770 = vsel %vm341, %v1740, 0.0
      %v1771 = vsel %vm340, %v1754, 0.0
      %v1772 = vsel %vm341, %v1741, 0.0
      %v1773 = vsel %vm340, %v1755, 0.0
      %v1774 = vsel %vm341, %v1742, 0.0
      %v1775 = vsel %vm340, %v1756, 0.0
      %v1776 = vsel %vm341, %v1743, 0.0
      %v1777 = vsel %vm340, %v1757, 0.0
      %v1778 = vsel %vm341, %v1744, 0.0
      %v1779 = vsel %vm340, %v1758, 0.0
      %v1780 = vsel %vm341, %v1745, 0.0
      %v1781 = vsel %vm340, %v1759, 0.0
      %v1782 = vsel %vm341, %v1746, 0.0
      %v1783 = vsel %vm340, %v1760, 0.0
      %v1784 = vsel %vm341, %v1747, 0.0
      %v1785 = vsel %vm340, %v1761, 0.0
      %v1786 = vsel %vm341, %v1748, 0.0
      %v1787 = vsel %vm340, %v1762, 0.0
      %v1788 = vsel %vm341, %v1749, 0.0
      %1789 = vrot.lane.b32.xlu0 %v1659, 127
      %v1790 = vpop.permute.xlu0 %1789
      %1791 = vrot.lane.b32.xlu0 %v1661, 127
      %v1792 = vpop.permute.xlu0 %1791
      %1793 = vrot.lane.b32.xlu0 %v1663, 127
      %v1794 = vpop.permute.xlu0 %1793
      %1795 = vrot.lane.b32.xlu0 %v1665, 127
      %v1796 = vpop.permute.xlu0 %1795
      %1797 = vrot.lane.b32.xlu0 %v1667, 127
      %v1798 = vpop.permute.xlu0 %1797
      %1799 = vrot.lane.b32.xlu0 %v1669, 127
      %v1800 = vpop.permute.xlu0 %1799
      %1801 = vrot.lane.b32.xlu0 %v1671, 127
      %v1802 = vpop.permute.xlu0 %1801
      %1803 = vrot.lane.b32.xlu0 %v1673, 127
      %v1804 = vpop.permute.xlu0 %1803
      %1805 = vrot.lane.b32.xlu0 %v1675, 127
      %v1806 = vpop.permute.xlu0 %1805
      %1807 = vrot.lane.b32.xlu0 %v1677, 127
      %v1808 = vpop.permute.xlu0 %1807
      %1809 = vrot.lane.b32.xlu0 %v1679, 127
      %v1810 = vpop.permute.xlu0 %1809
      %1811 = vrot.lane.b32.xlu0 %v1681, 127
      %v1812 = vpop.permute.xlu0 %1811
      %1813 = vrot.lane.b32.xlu0 %v1683, 127
      %v1814 = vpop.permute.xlu0 %1813
      %1815 = vrot.lane.b32.xlu0 %v1660, 127
      %v1816 = vpop.permute.xlu0 %1815
      %1817 = vrot.lane.b32.xlu0 %v1662, 127
      %v1818 = vpop.permute.xlu0 %1817
      %1819 = vrot.lane.b32.xlu0 %v1664, 127
      %v1820 = vpop.permute.xlu0 %1819
      %1821 = vrot.lane.b32.xlu0 %v1666, 127
      %v1822 = vpop.permute.xlu0 %1821
      %1823 = vrot.lane.b32.xlu0 %v1668, 127
      %v1824 = vpop.permute.xlu0 %1823
      %1825 = vrot.lane.b32.xlu0 %v1670, 127
      %v1826 = vpop.permute.xlu0 %1825
      %1827 = vrot.lane.b32.xlu0 %v1672, 127
      %v1828 = vpop.permute.xlu0 %1827
      %1829 = vrot.lane.b32.xlu0 %v1674, 127
      %v1830 = vpop.permute.xlu0 %1829
      %1831 = vrot.lane.b32.xlu0 %v1676, 127
      %v1832 = vpop.permute.xlu0 %1831
      %1833 = vrot.lane.b32.xlu0 %v1678, 127
      %v1834 = vpop.permute.xlu0 %1833
      %1835 = vrot.lane.b32.xlu0 %v1680, 127
      %v1836 = vpop.permute.xlu0 %1835
      %1837 = vrot.lane.b32.xlu0 %v1682, 127
      %v1838 = vpop.permute.xlu0 %1837
      %1839 = vrot.lane.b32.xlu0 %v1684, 127
      %v1840 = vpop.permute.xlu0 %1839
      %v1841 = vsel %vm661, %v1790, %v1816
      %v1842 = vsel %vm661, %v1792, %v1818
      %v1843 = vsel %vm661, %v1794, %v1820
      %v1844 = vsel %vm661, %v1796, %v1822
      %v1845 = vsel %vm661, %v1798, %v1824
      %v1846 = vsel %vm661, %v1800, %v1826
      %v1847 = vsel %vm661, %v1802, %v1828
      %v1848 = vsel %vm661, %v1804, %v1830
      %v1849 = vsel %vm661, %v1806, %v1832
      %v1850 = vsel %vm661, %v1808, %v1834
      %v1851 = vsel %vm661, %v1810, %v1836
      %v1852 = vsel %vm661, %v1812, %v1838
      %v1853 = vsel %vm661, %v1814, %v1840
      %v1854 = vsel %vm661, %v1816, %v1790
      %v1855 = vsel %vm661, %v1818, %v1792
      %v1856 = vsel %vm661, %v1820, %v1794
      %v1857 = vsel %vm661, %v1822, %v1796
      %v1858 = vsel %vm661, %v1824, %v1798
      %v1859 = vsel %vm661, %v1826, %v1800
      %v1860 = vsel %vm661, %v1828, %v1802
      %v1861 = vsel %vm661, %v1830, %v1804
      %v1862 = vsel %vm661, %v1832, %v1806
      %v1863 = vsel %vm661, %v1834, %v1808
      %v1864 = vsel %vm661, %v1836, %v1810
      %v1865 = vsel %vm661, %v1838, %v1812
      %v1866 = vsel %vm661, %v1840, %v1814
      %v1867 = vsel %vm342, %v1841, 0.0
      %v1868 = vsel %vm343, %v1854, 0.0
      %v1869 = vsel %vm342, %v1842, 0.0
      %v1870 = vsel %vm343, %v1855, 0.0
      %v1871 = vsel %vm342, %v1843, 0.0
      %v1872 = vsel %vm343, %v1856, 0.0
      %v1873 = vsel %vm342, %v1844, 0.0
      %v1874 = vsel %vm343, %v1857, 0.0
      %v1875 = vsel %vm342, %v1845, 0.0
      %v1876 = vsel %vm343, %v1858, 0.0
      %v1877 = vsel %vm342, %v1846, 0.0
      %v1878 = vsel %vm343, %v1859, 0.0
      %v1879 = vsel %vm342, %v1847, 0.0
      %v1880 = vsel %vm343, %v1860, 0.0
      %v1881 = vsel %vm342, %v1848, 0.0
      %v1882 = vsel %vm343, %v1861, 0.0
      %v1883 = vsel %vm342, %v1849, 0.0
      %v1884 = vsel %vm343, %v1862, 0.0
      %v1885 = vsel %vm342, %v1850, 0.0
      %v1886 = vsel %vm343, %v1863, 0.0
      %v1887 = vsel %vm342, %v1851, 0.0
      %v1888 = vsel %vm343, %v1864, 0.0
      %v1889 = vsel %vm342, %v1852, 0.0
      %v1890 = vsel %vm343, %v1865, 0.0
      %v1891 = vsel %vm342, %v1853, 0.0
      %v1892 = vsel %vm343, %v1866, 0.0
      %1894 = vset.pattern.permute.xlu0 101
      %1895 = vperm.xlu0 %1894, %v1605
      %v1896 = vpop.permute.xlu0 %1895
      %1899 = vset.pattern.permute.xlu0 101
      %1900 = vperm.xlu0 %1899, %v1608
      %v1901 = vpop.permute.xlu0 %1900
      %1904 = vset.pattern.permute.xlu0 101
      %1905 = vperm.xlu0 %1904, %v1613
      %v1906 = vpop.permute.xlu0 %1905
      %1909 = vset.pattern.permute.xlu0 101
      %1910 = vperm.xlu0 %1909, %v1616
      %v1911 = vpop.permute.xlu0 %1910
      %1914 = vset.pattern.permute.xlu0 101
      %1915 = vperm.xlu0 %1914, %v1621
      %v1916 = vpop.permute.xlu0 %1915
      %1919 = vset.pattern.permute.xlu0 101
      %1920 = vperm.xlu0 %1919, %v1624
      %v1921 = vpop.permute.xlu0 %1920
      %1924 = vset.pattern.permute.xlu0 101
      %1925 = vperm.xlu0 %1924, %v1629
      %v1926 = vpop.permute.xlu0 %1925
      %1929 = vset.pattern.permute.xlu0 101
      %1930 = vperm.xlu0 %1929, %v1632
      %v1931 = vpop.permute.xlu0 %1930
      %1934 = vset.pattern.permute.xlu0 101
      %1935 = vperm.xlu0 %1934, %v1637
      %v1936 = vpop.permute.xlu0 %1935
      %1939 = vset.pattern.permute.xlu0 101
      %1940 = vperm.xlu0 %1939, %v1640
      %v1941 = vpop.permute.xlu0 %1940
      %1944 = vset.pattern.permute.xlu0 101
      %1945 = vperm.xlu0 %1944, %v1645
      %v1946 = vpop.permute.xlu0 %1945
      %1949 = vset.pattern.permute.xlu0 101
      %1950 = vperm.xlu0 %1949, %v1648
      %v1951 = vpop.permute.xlu0 %1950
      %1954 = vset.pattern.permute.xlu0 101
      %1955 = vperm.xlu0 %1954, %v1653
      %v1956 = vpop.permute.xlu0 %1955
      %v1958 = vmul.f32 %v1896, %v1659
      %v1959 = vmul.f32 %v1896, %v1660
      %v1960 = vmul.f32 %v1901, %v1661
      %v1961 = vmul.f32 %v1901, %v1662
      %v1962 = vmul.f32 %v1906, %v1663
      %v1963 = vmul.f32 %v1906, %v1664
      %v1964 = vmul.f32 %v1911, %v1665
      %v1965 = vmul.f32 %v1911, %v1666
      %v1966 = vmul.f32 %v1916, %v1667
      %v1967 = vmul.f32 %v1916, %v1668
      %v1968 = vmul.f32 %v1921, %v1669
      %v1969 = vmul.f32 %v1921, %v1670
      %v1970 = vmul.f32 %v1926, %v1671
      %v1971 = vmul.f32 %v1926, %v1672
      %v1972 = vmul.f32 %v1931, %v1673
      %v1973 = vmul.f32 %v1931, %v1674
      %v1974 = vmul.f32 %v1936, %v1675
      %v1975 = vmul.f32 %v1936, %v1676
      %v1976 = vmul.f32 %v1941, %v1677
      %v1977 = vmul.f32 %v1941, %v1678
      %v1978 = vmul.f32 %v1946, %v1679
      %v1979 = vmul.f32 %v1946, %v1680
      %v1980 = vmul.f32 %v1951, %v1681
      %v1981 = vmul.f32 %v1951, %v1682
      %v1982 = vmul.f32 %v1956, %v1683
      %v1983 = vmul.f32 %v1956, %v1684
      %1984 = vset.pattern.permute.xlu0 100
      %1985 = vperm.xlu0 %1984, %v1605
      %v1986 = vpop.permute.xlu0 %1985
      %1988 = vset.pattern.permute.xlu0 100
      %1989 = vperm.xlu0 %1988, %v1608
      %v1990 = vpop.permute.xlu0 %1989
      %1992 = vset.pattern.permute.xlu0 100
      %1993 = vperm.xlu0 %1992, %v1613
      %v1994 = vpop.permute.xlu0 %1993
      %1996 = vset.pattern.permute.xlu0 100
      %1997 = vperm.xlu0 %1996, %v1616
      %v1998 = vpop.permute.xlu0 %1997
      %2000 = vset.pattern.permute.xlu0 100
      %2001 = vperm.xlu0 %2000, %v1621
      %v2002 = vpop.permute.xlu0 %2001
      %2004 = vset.pattern.permute.xlu0 100
      %2005 = vperm.xlu0 %2004, %v1624
      %v2006 = vpop.permute.xlu0 %2005
      %2008 = vset.pattern.permute.xlu0 100
      %2009 = vperm.xlu0 %2008, %v1629
      %v2010 = vpop.permute.xlu0 %2009
      %2012 = vset.pattern.permute.xlu0 100
      %2013 = vperm.xlu0 %2012, %v1632
      %v2014 = vpop.permute.xlu0 %2013
      %2016 = vset.pattern.permute.xlu0 100
      %2017 = vperm.xlu0 %2016, %v1637
      %v2018 = vpop.permute.xlu0 %2017
      %2020 = vset.pattern.permute.xlu0 100
      %2021 = vperm.xlu0 %2020, %v1640
      %v2022 = vpop.permute.xlu0 %2021
      %2024 = vset.pattern.permute.xlu0 100
      %2025 = vperm.xlu0 %2024, %v1645
      %v2026 = vpop.permute.xlu0 %2025
      %2028 = vset.pattern.permute.xlu0 100
      %2029 = vperm.xlu0 %2028, %v1648
      %v2030 = vpop.permute.xlu0 %2029
      %2032 = vset.pattern.permute.xlu0 100
      %2033 = vperm.xlu0 %2032, %v1653
      %v2034 = vpop.permute.xlu0 %2033
      %v2036 = vmul.f32 %v1986, %v1763
      %v2037 = vmul.f32 %v1986, %v1764
      %v2038 = vmul.f32 %v1990, %v1765
      %v2039 = vmul.f32 %v1990, %v1766
      %v2040 = vmul.f32 %v1994, %v1767
      %v2041 = vmul.f32 %v1994, %v1768
      %v2042 = vmul.f32 %v1998, %v1769
      %v2043 = vmul.f32 %v1998, %v1770
      %v2044 = vmul.f32 %v2002, %v1771
      %v2045 = vmul.f32 %v2002, %v1772
      %v2046 = vmul.f32 %v2006, %v1773
      %v2047 = vmul.f32 %v2006, %v1774
      %v2048 = vmul.f32 %v2010, %v1775
      %v2049 = vmul.f32 %v2010, %v1776
      %v2050 = vmul.f32 %v2014, %v1777
      %v2051 = vmul.f32 %v2014, %v1778
      %v2052 = vmul.f32 %v2018, %v1779
      %v2053 = vmul.f32 %v2018, %v1780
      %v2054 = vmul.f32 %v2022, %v1781
      %v2055 = vmul.f32 %v2022, %v1782
      %v2056 = vmul.f32 %v2026, %v1783
      %v2057 = vmul.f32 %v2026, %v1784
      %v2058 = vmul.f32 %v2030, %v1785
      %v2059 = vmul.f32 %v2030, %v1786
      %v2060 = vmul.f32 %v2034, %v1787
      %v2061 = vmul.f32 %v2034, %v1788
      %v2062 = vadd.f32 %v1958, %v2036
      %v2063 = vadd.f32 %v1959, %v2037
      %v2064 = vadd.f32 %v1960, %v2038
      %v2065 = vadd.f32 %v1961, %v2039
      %v2066 = vadd.f32 %v1962, %v2040
      %v2067 = vadd.f32 %v1963, %v2041
      %v2068 = vadd.f32 %v1964, %v2042
      %v2069 = vadd.f32 %v1965, %v2043
      %v2070 = vadd.f32 %v1966, %v2044
      %v2071 = vadd.f32 %v1967, %v2045
      %v2072 = vadd.f32 %v1968, %v2046
      %v2073 = vadd.f32 %v1969, %v2047
      %v2074 = vadd.f32 %v1970, %v2048
      %v2075 = vadd.f32 %v1971, %v2049
      %v2076 = vadd.f32 %v1972, %v2050
      %v2077 = vadd.f32 %v1973, %v2051
      %v2078 = vadd.f32 %v1974, %v2052
      %v2079 = vadd.f32 %v1975, %v2053
      %v2080 = vadd.f32 %v1976, %v2054
      %v2081 = vadd.f32 %v1977, %v2055
      %v2082 = vadd.f32 %v1978, %v2056
      %v2083 = vadd.f32 %v1979, %v2057
      %v2084 = vadd.f32 %v1980, %v2058
      %v2085 = vadd.f32 %v1981, %v2059
      %v2086 = vadd.f32 %v1982, %v2060
      %v2087 = vadd.f32 %v1983, %v2061
      %2088 = vset.pattern.permute.xlu0 102
      %2089 = vperm.xlu0 %2088, %v1605
      %v2090 = vpop.permute.xlu0 %2089
      %2092 = vset.pattern.permute.xlu0 102
      %2093 = vperm.xlu0 %2092, %v1608
      %v2094 = vpop.permute.xlu0 %2093
      %2096 = vset.pattern.permute.xlu0 102
      %2097 = vperm.xlu0 %2096, %v1613
      %v2098 = vpop.permute.xlu0 %2097
      %2100 = vset.pattern.permute.xlu0 102
      %2101 = vperm.xlu0 %2100, %v1616
      %v2102 = vpop.permute.xlu0 %2101
      %2104 = vset.pattern.permute.xlu0 102
      %2105 = vperm.xlu0 %2104, %v1621
      %v2106 = vpop.permute.xlu0 %2105
      %2108 = vset.pattern.permute.xlu0 102
      %2109 = vperm.xlu0 %2108, %v1624
      %v2110 = vpop.permute.xlu0 %2109
      %2112 = vset.pattern.permute.xlu0 102
      %2113 = vperm.xlu0 %2112, %v1629
      %v2114 = vpop.permute.xlu0 %2113
      %2116 = vset.pattern.permute.xlu0 102
      %2117 = vperm.xlu0 %2116, %v1632
      %v2118 = vpop.permute.xlu0 %2117
      %2120 = vset.pattern.permute.xlu0 102
      %2121 = vperm.xlu0 %2120, %v1637
      %v2122 = vpop.permute.xlu0 %2121
      %2124 = vset.pattern.permute.xlu0 102
      %2125 = vperm.xlu0 %2124, %v1640
      %v2126 = vpop.permute.xlu0 %2125
      %2128 = vset.pattern.permute.xlu0 102
      %2129 = vperm.xlu0 %2128, %v1645
      %v2130 = vpop.permute.xlu0 %2129
      %2132 = vset.pattern.permute.xlu0 102
      %2133 = vperm.xlu0 %2132, %v1648
      %v2134 = vpop.permute.xlu0 %2133
      %2136 = vset.pattern.permute.xlu0 102
      %2137 = vperm.xlu0 %2136, %v1653
      %v2138 = vpop.permute.xlu0 %2137
      %v2140 = vmul.f32 %v2090, %v1867
      %v2141 = vmul.f32 %v2090, %v1868
      %v2142 = vmul.f32 %v2094, %v1869
      %v2143 = vmul.f32 %v2094, %v1870
      %v2144 = vmul.f32 %v2098, %v1871
      %v2145 = vmul.f32 %v2098, %v1872
      %v2146 = vmul.f32 %v2102, %v1873
      %v2147 = vmul.f32 %v2102, %v1874
      %v2148 = vmul.f32 %v2106, %v1875
      %v2149 = vmul.f32 %v2106, %v1876
      %v2150 = vmul.f32 %v2110, %v1877
      %v2151 = vmul.f32 %v2110, %v1878
      %v2152 = vmul.f32 %v2114, %v1879
      %v2153 = vmul.f32 %v2114, %v1880
      %v2154 = vmul.f32 %v2118, %v1881
      %v2155 = vmul.f32 %v2118, %v1882
      %v2156 = vmul.f32 %v2122, %v1883
      %v2157 = vmul.f32 %v2122, %v1884
      %v2158 = vmul.f32 %v2126, %v1885
      %v2159 = vmul.f32 %v2126, %v1886
      %v2160 = vmul.f32 %v2130, %v1887
      %v2161 = vmul.f32 %v2130, %v1888
      %v2162 = vmul.f32 %v2134, %v1889
      %v2163 = vmul.f32 %v2134, %v1890
      %v2164 = vmul.f32 %v2138, %v1891
      %v2165 = vmul.f32 %v2138, %v1892
      %v2166 = vadd.f32 %v2062, %v2140
      %v2167 = vadd.f32 %v2063, %v2141
      %v2168 = vadd.f32 %v2064, %v2142
      %v2169 = vadd.f32 %v2065, %v2143
      %v2170 = vadd.f32 %v2066, %v2144
      %v2171 = vadd.f32 %v2067, %v2145
      %v2172 = vadd.f32 %v2068, %v2146
      %v2173 = vadd.f32 %v2069, %v2147
      %v2174 = vadd.f32 %v2070, %v2148
      %v2175 = vadd.f32 %v2071, %v2149
      %v2176 = vadd.f32 %v2072, %v2150
      %v2177 = vadd.f32 %v2073, %v2151
      %v2178 = vadd.f32 %v2074, %v2152
      %v2179 = vadd.f32 %v2075, %v2153
      %v2180 = vadd.f32 %v2076, %v2154
      %v2181 = vadd.f32 %v2077, %v2155
      %v2182 = vadd.f32 %v2078, %v2156
      %v2183 = vadd.f32 %v2079, %v2157
      %v2184 = vadd.f32 %v2080, %v2158
      %v2185 = vadd.f32 %v2081, %v2159
      %v2186 = vadd.f32 %v2082, %v2160
      %v2187 = vadd.f32 %v2083, %v2161
      %v2188 = vadd.f32 %v2084, %v2162
      %v2189 = vadd.f32 %v2085, %v2163
      %v2190 = vadd.f32 %v2086, %v2164
      %v2191 = vadd.f32 %v2087, %v2165
      %v2192 = vmax.f32 %v2166, 0.0
      %v2193 = vmax.f32 %v2167, 0.0
      %v2194 = vmax.f32 %v2168, 0.0
      %v2195 = vmax.f32 %v2169, 0.0
      %v2196 = vmax.f32 %v2170, 0.0
      %v2197 = vmax.f32 %v2171, 0.0
      %v2198 = vmax.f32 %v2172, 0.0
      %v2199 = vmax.f32 %v2173, 0.0
      %v2200 = vmax.f32 %v2174, 0.0
      %v2201 = vmax.f32 %v2175, 0.0
      %v2202 = vmax.f32 %v2176, 0.0
      %v2203 = vmax.f32 %v2177, 0.0
      %v2204 = vmax.f32 %v2178, 0.0
      %v2205 = vmax.f32 %v2179, 0.0
      %v2206 = vmax.f32 %v2180, 0.0
      %v2207 = vmax.f32 %v2181, 0.0
      %v2208 = vmax.f32 %v2182, 0.0
      %v2209 = vmax.f32 %v2183, 0.0
      %v2210 = vmax.f32 %v2184, 0.0
      %v2211 = vmax.f32 %v2185, 0.0
      %v2212 = vmax.f32 %v2186, 0.0
      %v2213 = vmax.f32 %v2187, 0.0
      %v2214 = vmax.f32 %v2188, 0.0
      %v2215 = vmax.f32 %v2189, 0.0
      %v2216 = vmax.f32 %v2190, 0.0
      %v2217 = vmax.f32 %v2191, 0.0
      %v2218 = vpack.c.bf16 %v1608, %v1605
      %v2219 = vpack.c.bf16 %v1616, %v1613
      %v2220 = vpack.c.bf16 %v1624, %v1621
      %v2221 = vpack.c.bf16 %v1632, %v1629
      %v2222 = vpack.c.bf16 %v1640, %v1637
      %v2223 = vpack.c.bf16 %v1648, %v1645
      %v2224 = vpack.c.bf16 %v1653, %v1653
      %v2225 = vpack.c.bf16 %v2194, %v2192
      %v2226 = vpack.c.bf16 %v2195, %v2193
      %v2227 = vpack.c.bf16 %v2198, %v2196
      %v2228 = vpack.c.bf16 %v2199, %v2197
      %v2229 = vpack.c.bf16 %v2202, %v2200
      %v2230 = vpack.c.bf16 %v2203, %v2201
      %v2231 = vpack.c.bf16 %v2206, %v2204
      %v2232 = vpack.c.bf16 %v2207, %v2205
      %v2233 = vpack.c.bf16 %v2210, %v2208
      %v2234 = vpack.c.bf16 %v2211, %v2209
      %v2235 = vpack.c.bf16 %v2214, %v2212
      %v2236 = vpack.c.bf16 %v2215, %v2213
      %v2237 = vpack.c.bf16 %v2216, %v2216
      %v2238 = vpack.c.bf16 %v2217, %v2217
      %v2240 = vsel %vm1060, %v2218, 0
      %v2243 = vsel %vm1060, %v2219, 0
      %v2246 = vsel %vm1060, %v2220, 0
      %v2249 = vsel %vm1060, %v2221, 0
      %v2252 = vsel %vm1060, %v2222, 0
      %v2255 = vsel %vm1060, %v2223, 0
      %v2258 = vsel %vm1060, %v2224, 0
      %v2261 = vsel %vm1082, %v2237, 0
      %v2264 = vsel %vm1082, %v2238, 0
      %2266 = vmatprep.subr.bf16.mxu0 0
      %2267 = vmatpush1.bf16.msra.mxu0 0
      %2268 = vmatprep.subr.bf16.mxu0 %v2264
      %2269 = vmatpush1.bf16.msra.mxu0 %v2261
      %2270 = vmatprep.subr.bf16.mxu0 %v2236
      %2271 = vmatpush1.bf16.msra.mxu0 %v2235
      %2272 = vmatprep.subr.bf16.mxu0 %v2234
      %2273 = vmatpush1.bf16.msra.mxu0 %v2233
      %2274 = vmatprep.subr.bf16.mxu0 %v2232
      %2275 = vmatpush1.bf16.msra.mxu0 %v2231
      %2276 = vmatprep.subr.bf16.mxu0 %v2230
      %2277 = vmatpush1.bf16.msra.mxu0 %v2229
      %2278 = vmatprep.subr.bf16.mxu0 %v2228
      %2279 = vmatpush1.bf16.msra.mxu0 %v2227
      %2280 = vmatprep.subr.bf16.mxu0 %v2226
      %2281 = vmatpush1.bf16.msra.mxu0 %v2225
      %2282 = vmatprep.subr.bf16.mxu0 0
      %2283 = vmatpush2.bf16.msra.mxu0 0
      %2284 = vmatprep.subr.bf16.mxu0 0
      %2285 = vmatpush2.bf16.msra.mxu0 0
      %2286 = vmatprep.subr.bf16.mxu0 0
      %2287 = vmatpush2.bf16.msra.mxu0 0
      %2288 = vmatprep.subr.bf16.mxu0 0
      %2289 = vmatpush2.bf16.msra.mxu0 0
      %2290 = vmatprep.subr.bf16.mxu0 0
      %2291 = vmatpush2.bf16.msra.mxu0 0
      %2292 = vmatprep.subr.bf16.mxu0 0
      %2293 = vmatpush2.bf16.msra.mxu0 0
      %2294 = vmatprep.subr.bf16.mxu0 0
      %2295 = vmatpush2.bf16.msra.mxu0 0
      %2296 = vmatprep.subr.bf16.mxu0 0
      %2297 = vmatpush2.bf16.msra.mxu0 0
      %2298 = vmatprep.mubr.bf16.mxu0 0
      %2299 = vmatmul.mubr.bf16.gmra.mxu0 %v2240
      %v2300 = vpop.f32.mrf.mxu0
      %v2301 = vadd.f32 0.0, %v2300
      %v2302 = vpop.f32.mrf.mxu0
      %v2303 = vadd.f32 0.0, %v2302
      %v2304 = vpop.f32.mrf.mxu0
      %v2305 = vadd.f32 0.0, %v2304
      %v2306 = vpop.f32.mrf.mxu0
      %v2307 = vadd.f32 0.0, %v2306
      %2308 = vmatprep.mubr.bf16.mxu0 0
      %2309 = vmatmul.mubr.bf16.gmra.mxu0 %v2243
      %v2310 = vpop.f32.mrf.mxu0
      %v2311 = vadd.f32 0.0, %v2310
      %v2312 = vpop.f32.mrf.mxu0
      %v2313 = vadd.f32 0.0, %v2312
      %v2314 = vpop.f32.mrf.mxu0
      %v2315 = vadd.f32 0.0, %v2314
      %v2316 = vpop.f32.mrf.mxu0
      %v2317 = vadd.f32 0.0, %v2316
      %2318 = vmatprep.mubr.bf16.mxu0 0
      %2319 = vmatmul.mubr.bf16.gmra.mxu0 %v2246
      %v2320 = vpop.f32.mrf.mxu0
      %v2321 = vadd.f32 0.0, %v2320
      %v2322 = vpop.f32.mrf.mxu0
      %v2323 = vadd.f32 0.0, %v2322
      %v2324 = vpop.f32.mrf.mxu0
      %v2325 = vadd.f32 0.0, %v2324
      %v2326 = vpop.f32.mrf.mxu0
      %v2327 = vadd.f32 0.0, %v2326
      %2328 = vmatprep.mubr.bf16.mxu0 0
      %2329 = vmatmul.mubr.bf16.gmra.mxu0 %v2249
      %v2330 = vpop.f32.mrf.mxu0
      %v2331 = vadd.f32 0.0, %v2330
      %v2332 = vpop.f32.mrf.mxu0
      %v2333 = vadd.f32 0.0, %v2332
      %v2334 = vpop.f32.mrf.mxu0
      %v2335 = vadd.f32 0.0, %v2334
      %v2336 = vpop.f32.mrf.mxu0
      %v2337 = vadd.f32 0.0, %v2336
      %2338 = vmatprep.mubr.bf16.mxu0 0
      %2339 = vmatmul.mubr.bf16.gmra.mxu0 %v2252
      %v2340 = vpop.f32.mrf.mxu0
      %v2341 = vadd.f32 0.0, %v2340
      %v2342 = vpop.f32.mrf.mxu0
      %v2343 = vadd.f32 0.0, %v2342
      %v2344 = vpop.f32.mrf.mxu0
      %v2345 = vadd.f32 0.0, %v2344
      %v2346 = vpop.f32.mrf.mxu0
      %v2347 = vadd.f32 0.0, %v2346
      %2348 = vmatprep.mubr.bf16.mxu0 0
      %2349 = vmatmul.mubr.bf16.gmra.mxu0 %v2255
      %v2350 = vpop.f32.mrf.mxu0
      %v2351 = vadd.f32 0.0, %v2350
      %v2352 = vpop.f32.mrf.mxu0
      %v2353 = vadd.f32 0.0, %v2352
      %v2354 = vpop.f32.mrf.mxu0
      %v2355 = vadd.f32 0.0, %v2354
      %v2356 = vpop.f32.mrf.mxu0
      %v2357 = vadd.f32 0.0, %v2356
      %2358 = vmatprep.mubr.bf16.mxu0 0
      %2359 = vmatmul.mubr.bf16.gmra.mxu0 %v2258
      %v2360 = vpop.f32.mrf.mxu0
      %v2361 = vadd.f32 0.0, %v2360
      %v2362 = vpop.f32.mrf.mxu0
      %v2363 = vadd.f32 0.0, %v2362
      %v2364 = vpop.f32.mrf.mxu0
      %v2365 = vpop.f32.mrf.mxu0
      %2366 = vdwg.mxu0
      %v2367 = vadd.f32 %v2301, %v2303
      %2368 = vadd.xlane.f32.xlu0 %v2367
      %v2369 = vpop.xlane.xlu0 %2368
      %v2370 = vadd.f32 %v2305, %v2307
      %2371 = vadd.xlane.f32.xlu0 %v2370
      %v2372 = vpop.xlane.xlu0 %2371
      %v2373 = vadd.f32 %v2311, %v2313
      %2374 = vadd.xlane.f32.xlu0 %v2373
      %v2375 = vpop.xlane.xlu0 %2374
      %v2376 = vadd.f32 %v2315, %v2317
      %2377 = vadd.xlane.f32.xlu0 %v2376
      %v2378 = vpop.xlane.xlu0 %2377
      %v2379 = vadd.f32 %v2321, %v2323
      %2380 = vadd.xlane.f32.xlu0 %v2379
      %v2381 = vpop.xlane.xlu0 %2380
      %v2382 = vadd.f32 %v2325, %v2327
      %2383 = vadd.xlane.f32.xlu0 %v2382
      %v2384 = vpop.xlane.xlu0 %2383
      %v2385 = vadd.f32 %v2331, %v2333
      %2386 = vadd.xlane.f32.xlu0 %v2385
      %v2387 = vpop.xlane.xlu0 %2386
      %v2388 = vadd.f32 %v2335, %v2337
      %2389 = vadd.xlane.f32.xlu0 %v2388
      %v2390 = vpop.xlane.xlu0 %2389
      %v2391 = vadd.f32 %v2341, %v2343
      %2392 = vadd.xlane.f32.xlu0 %v2391
      %v2393 = vpop.xlane.xlu0 %2392
      %v2394 = vadd.f32 %v2345, %v2347
      %2395 = vadd.xlane.f32.xlu0 %v2394
      %v2396 = vpop.xlane.xlu0 %2395
      %v2397 = vadd.f32 %v2351, %v2353
      %2398 = vadd.xlane.f32.xlu0 %v2397
      %v2399 = vpop.xlane.xlu0 %2398
      %v2400 = vadd.f32 %v2355, %v2357
      %2401 = vadd.xlane.f32.xlu0 %v2400
      %v2402 = vpop.xlane.xlu0 %2401
      %v2403 = vsel %vm1226, %v2361, 0.0
      %v2404 = vsel %vm1226, %v2363, 0.0
      %v2405 = vadd.f32 %v2403, %v2404
      %2406 = vadd.xlane.f32.xlu0 %v2405
      %v2407 = vpop.xlane.xlu0 %2406
      %v2408 = vmul.f32 %v2301, %v2301
      %v2409 = vmul.f32 %v2303, %v2303
      %v2410 = vmul.f32 %v2305, %v2305
      %v2411 = vmul.f32 %v2307, %v2307
      %v2412 = vmul.f32 %v2311, %v2311
      %v2413 = vmul.f32 %v2313, %v2313
      %v2414 = vmul.f32 %v2315, %v2315
      %v2415 = vmul.f32 %v2317, %v2317
      %v2416 = vmul.f32 %v2321, %v2321
      %v2417 = vmul.f32 %v2323, %v2323
      %v2418 = vmul.f32 %v2325, %v2325
      %v2419 = vmul.f32 %v2327, %v2327
      %v2420 = vmul.f32 %v2331, %v2331
      %v2421 = vmul.f32 %v2333, %v2333
      %v2422 = vmul.f32 %v2335, %v2335
      %v2423 = vmul.f32 %v2337, %v2337
      %v2424 = vmul.f32 %v2341, %v2341
      %v2425 = vmul.f32 %v2343, %v2343
      %v2426 = vmul.f32 %v2345, %v2345
      %v2427 = vmul.f32 %v2347, %v2347
      %v2428 = vmul.f32 %v2351, %v2351
      %v2429 = vmul.f32 %v2353, %v2353
      %v2430 = vmul.f32 %v2355, %v2355
      %v2431 = vmul.f32 %v2357, %v2357
      %v2432 = vmul.f32 %v2361, %v2361
      %v2433 = vmul.f32 %v2363, %v2363
      %v2434 = vadd.f32 %v2408, %v2409
      %2435 = vadd.xlane.f32.xlu0 %v2434
      %v2436 = vpop.xlane.xlu0 %2435
      %v2437 = vadd.f32 %v2410, %v2411
      %2438 = vadd.xlane.f32.xlu0 %v2437
      %v2439 = vpop.xlane.xlu0 %2438
      %v2440 = vadd.f32 %v2412, %v2413
      %2441 = vadd.xlane.f32.xlu0 %v2440
      %v2442 = vpop.xlane.xlu0 %2441
      %v2443 = vadd.f32 %v2414, %v2415
      %2444 = vadd.xlane.f32.xlu0 %v2443
      %v2445 = vpop.xlane.xlu0 %2444
      %v2446 = vadd.f32 %v2416, %v2417
      %2447 = vadd.xlane.f32.xlu0 %v2446
      %v2448 = vpop.xlane.xlu0 %2447
      %v2449 = vadd.f32 %v2418, %v2419
      %2450 = vadd.xlane.f32.xlu0 %v2449
      %v2451 = vpop.xlane.xlu0 %2450
      %v2452 = vadd.f32 %v2420, %v2421
      %2453 = vadd.xlane.f32.xlu0 %v2452
      %v2454 = vpop.xlane.xlu0 %2453
      %v2455 = vadd.f32 %v2422, %v2423
      %2456 = vadd.xlane.f32.xlu0 %v2455
      %v2457 = vpop.xlane.xlu0 %2456
      %v2458 = vadd.f32 %v2424, %v2425
      %2459 = vadd.xlane.f32.xlu0 %v2458
      %v2460 = vpop.xlane.xlu0 %2459
      %v2461 = vadd.f32 %v2426, %v2427
      %2462 = vadd.xlane.f32.xlu0 %v2461
      %v2463 = vpop.xlane.xlu0 %2462
      %v2464 = vadd.f32 %v2428, %v2429
      %2465 = vadd.xlane.f32.xlu0 %v2464
      %v2466 = vpop.xlane.xlu0 %2465
      %v2467 = vadd.f32 %v2430, %v2431
      %2468 = vadd.xlane.f32.xlu0 %v2467
      %v2469 = vpop.xlane.xlu0 %2468
      %v2470 = vsel %vm1226, %v2432, 0.0
      %v2471 = vsel %vm1226, %v2433, 0.0
      %v2472 = vadd.f32 %v2470, %v2471
      %2473 = vadd.xlane.f32.xlu0 %v2472
      %v2474 = vpop.xlane.xlu0 %2473
      %v2475 = vmul.f32 %v2369, 0.00390625
      %v2476 = vmul.f32 %v2372, 0.00390625
      %v2477 = vmul.f32 %v2375, 0.00390625
      %v2478 = vmul.f32 %v2378, 0.00390625
      %v2479 = vmul.f32 %v2381, 0.00390625
      %v2480 = vmul.f32 %v2384, 0.00390625
      %v2481 = vmul.f32 %v2387, 0.00390625
      %v2482 = vmul.f32 %v2390, 0.00390625
      %v2483 = vmul.f32 %v2393, 0.00390625
      %v2484 = vmul.f32 %v2396, 0.00390625
      %v2485 = vmul.f32 %v2399, 0.00390625
      %v2486 = vmul.f32 %v2402, 0.00390625
      %v2487 = vmul.f32 %v2407, 0.00390625
      %v2488 = vmul.f32 %v2436, 0.00390625
      %v2489 = vmul.f32 %v2439, 0.00390625
      %v2490 = vmul.f32 %v2442, 0.00390625
      %v2491 = vmul.f32 %v2445, 0.00390625
      %v2492 = vmul.f32 %v2448, 0.00390625
      %v2493 = vmul.f32 %v2451, 0.00390625
      %v2494 = vmul.f32 %v2454, 0.00390625
      %v2495 = vmul.f32 %v2457, 0.00390625
      %v2496 = vmul.f32 %v2460, 0.00390625
      %v2497 = vmul.f32 %v2463, 0.00390625
      %v2498 = vmul.f32 %v2466, 0.00390625
      %v2499 = vmul.f32 %v2469, 0.00390625
      %v2500 = vmul.f32 %v2474, 0.00390625
      %v2501 = vmul.f32 %v2475, %v2475
      %v2502 = vmul.f32 %v2476, %v2476
      %v2503 = vmul.f32 %v2477, %v2477
      %v2504 = vmul.f32 %v2478, %v2478
      %v2505 = vmul.f32 %v2479, %v2479
      %v2506 = vmul.f32 %v2480, %v2480
      %v2507 = vmul.f32 %v2481, %v2481
      %v2508 = vmul.f32 %v2482, %v2482
      %v2509 = vmul.f32 %v2483, %v2483
      %v2510 = vmul.f32 %v2484, %v2484
      %v2511 = vmul.f32 %v2485, %v2485
      %v2512 = vmul.f32 %v2486, %v2486
      %v2513 = vmul.f32 %v2487, %v2487
      %v2514 = vsub.f32 %v2488, %v2501
      %v2515 = vsub.f32 %v2489, %v2502
      %v2516 = vsub.f32 %v2490, %v2503
      %v2517 = vsub.f32 %v2491, %v2504
      %v2518 = vsub.f32 %v2492, %v2505
      %v2519 = vsub.f32 %v2493, %v2506
      %v2520 = vsub.f32 %v2494, %v2507
      %v2521 = vsub.f32 %v2495, %v2508
      %v2522 = vsub.f32 %v2496, %v2509
      %v2523 = vsub.f32 %v2497, %v2510
      %v2524 = vsub.f32 %v2498, %v2511
      %v2525 = vsub.f32 %v2499, %v2512
      %v2526 = vsub.f32 %v2500, %v2513
      %v2527 = vadd.f32 %v2514, 1e-05
      %v2528 = vadd.f32 %v2515, 1e-05
      %v2529 = vadd.f32 %v2516, 1e-05
      %v2530 = vadd.f32 %v2517, 1e-05
      %v2531 = vadd.f32 %v2518, 1e-05
      %v2532 = vadd.f32 %v2519, 1e-05
      %v2533 = vadd.f32 %v2520, 1e-05
      %v2534 = vadd.f32 %v2521, 1e-05
      %v2535 = vadd.f32 %v2522, 1e-05
      %v2536 = vadd.f32 %v2523, 1e-05
      %v2537 = vadd.f32 %v2524, 1e-05
      %v2538 = vadd.f32 %v2525, 1e-05
      %v2539 = vadd.f32 %v2526, 1e-05
      %v2540 = vrsqrt.pop %v2527
      %v2541 = vrsqrt.pop %v2528
      %v2542 = vrsqrt.pop %v2529
      %v2543 = vrsqrt.pop %v2530
      %v2544 = vrsqrt.pop %v2531
      %v2545 = vrsqrt.pop %v2532
      %v2546 = vrsqrt.pop %v2533
      %v2547 = vrsqrt.pop %v2534
      %v2548 = vrsqrt.pop %v2535
      %v2549 = vrsqrt.pop %v2536
      %v2550 = vrsqrt.pop %v2537
      %v2551 = vrsqrt.pop %v2538
      %v2552 = vrsqrt.pop %v2539
      %v2553 = vsub.f32 %v2301, %v2475
      %v2554 = vsub.f32 %v2303, %v2475
      %v2555 = vsub.f32 %v2305, %v2476
      %v2556 = vsub.f32 %v2307, %v2476
      %v2557 = vsub.f32 %v2311, %v2477
      %v2558 = vsub.f32 %v2313, %v2477
      %v2559 = vsub.f32 %v2315, %v2478
      %v2560 = vsub.f32 %v2317, %v2478
      %v2561 = vsub.f32 %v2321, %v2479
      %v2562 = vsub.f32 %v2323, %v2479
      %v2563 = vsub.f32 %v2325, %v2480
      %v2564 = vsub.f32 %v2327, %v2480
      %v2565 = vsub.f32 %v2331, %v2481
      %v2566 = vsub.f32 %v2333, %v2481
      %v2567 = vsub.f32 %v2335, %v2482
      %v2568 = vsub.f32 %v2337, %v2482
      %v2569 = vsub.f32 %v2341, %v2483
      %v2570 = vsub.f32 %v2343, %v2483
      %v2571 = vsub.f32 %v2345, %v2484
      %v2572 = vsub.f32 %v2347, %v2484
      %v2573 = vsub.f32 %v2351, %v2485
      %v2574 = vsub.f32 %v2353, %v2485
      %v2575 = vsub.f32 %v2355, %v2486
      %v2576 = vsub.f32 %v2357, %v2486
      %v2577 = vsub.f32 %v2361, %v2487
      %v2578 = vsub.f32 %v2363, %v2487
      %v2579 = vmul.f32 %v2553, %v2540
      %v2580 = vmul.f32 %v2554, %v2540
      %v2581 = vmul.f32 %v2555, %v2541
      %v2582 = vmul.f32 %v2556, %v2541
      %v2583 = vmul.f32 %v2557, %v2542
      %v2584 = vmul.f32 %v2558, %v2542
      %v2585 = vmul.f32 %v2559, %v2543
      %v2586 = vmul.f32 %v2560, %v2543
      %v2587 = vmul.f32 %v2561, %v2544
      %v2588 = vmul.f32 %v2562, %v2544
      %v2589 = vmul.f32 %v2563, %v2545
      %v2590 = vmul.f32 %v2564, %v2545
      %v2591 = vmul.f32 %v2565, %v2546
      %v2592 = vmul.f32 %v2566, %v2546
      %v2593 = vmul.f32 %v2567, %v2547
      %v2594 = vmul.f32 %v2568, %v2547
      %v2595 = vmul.f32 %v2569, %v2548
      %v2596 = vmul.f32 %v2570, %v2548
      %v2597 = vmul.f32 %v2571, %v2549
      %v2598 = vmul.f32 %v2572, %v2549
      %v2599 = vmul.f32 %v2573, %v2550
      %v2600 = vmul.f32 %v2574, %v2550
      %v2601 = vmul.f32 %v2575, %v2551
      %v2602 = vmul.f32 %v2576, %v2551
      %v2603 = vmul.f32 %v2577, %v2552
      %v2604 = vmul.f32 %v2578, %v2552
      %v2605 = vmul.f32 %v2579, %v1433
      %v2606 = vmul.f32 %v2580, %v1437
      %v2607 = vmul.f32 %v2581, %v1433
      %v2608 = vmul.f32 %v2582, %v1437
      %v2609 = vmul.f32 %v2583, %v1433
      %v2610 = vmul.f32 %v2584, %v1437
      %v2611 = vmul.f32 %v2585, %v1433
      %v2612 = vmul.f32 %v2586, %v1437
      %v2613 = vmul.f32 %v2587, %v1433
      %v2614 = vmul.f32 %v2588, %v1437
      %v2615 = vmul.f32 %v2589, %v1433
      %v2616 = vmul.f32 %v2590, %v1437
      %v2617 = vmul.f32 %v2591, %v1433
      %v2618 = vmul.f32 %v2592, %v1437
      %v2619 = vmul.f32 %v2593, %v1433
      %v2620 = vmul.f32 %v2594, %v1437
      %v2621 = vmul.f32 %v2595, %v1433
      %v2622 = vmul.f32 %v2596, %v1437
      %v2623 = vmul.f32 %v2597, %v1433
      %v2624 = vmul.f32 %v2598, %v1437
      %v2625 = vmul.f32 %v2599, %v1433
      %v2626 = vmul.f32 %v2600, %v1437
      %v2627 = vmul.f32 %v2601, %v1433
      %v2628 = vmul.f32 %v2602, %v1437
      %v2629 = vmul.f32 %v2603, %v1433
      %v2630 = vmul.f32 %v2604, %v1437
      %v2631 = vadd.f32 %v2605, %v1470
      %v2632 = vadd.f32 %v2606, %v1474
      %v2633 = vadd.f32 %v2607, %v1470
      %v2634 = vadd.f32 %v2608, %v1474
      %v2635 = vadd.f32 %v2609, %v1470
      %v2636 = vadd.f32 %v2610, %v1474
      %v2637 = vadd.f32 %v2611, %v1470
      %v2638 = vadd.f32 %v2612, %v1474
      %v2639 = vadd.f32 %v2613, %v1470
      %v2640 = vadd.f32 %v2614, %v1474
      %v2641 = vadd.f32 %v2615, %v1470
      %v2642 = vadd.f32 %v2616, %v1474
      %v2643 = vadd.f32 %v2617, %v1470
      %v2644 = vadd.f32 %v2618, %v1474
      %v2645 = vadd.f32 %v2619, %v1470
      %v2646 = vadd.f32 %v2620, %v1474
      %v2647 = vadd.f32 %v2621, %v1470
      %v2648 = vadd.f32 %v2622, %v1474
      %v2649 = vadd.f32 %v2623, %v1470
      %v2650 = vadd.f32 %v2624, %v1474
      %v2651 = vadd.f32 %v2625, %v1470
      %v2652 = vadd.f32 %v2626, %v1474
      %v2653 = vadd.f32 %v2627, %v1470
      %v2654 = vadd.f32 %v2628, %v1474
      %v2655 = vadd.f32 %v2629, %v1470
      %v2656 = vadd.f32 %v2630, %v1474
      %s2657 = scalar_lea.vmem %s283, 208
      %2658 = vst [vmem:[%s2657] sm:$0xff] %v2631
      %2659 = vst [vmem:[%s2657 + $0x8] sm:$0xff] %v2632
      %2660 = vst [vmem:[%s2657 + $0x10] sm:$0xff] %v2633
      %2661 = vst [vmem:[%s2657 + $0x18] sm:$0xff] %v2634
      %2662 = vst [vmem:[%s2657 + $0x20] sm:$0xff] %v2635
      %2663 = vst [vmem:[%s2657 + $0x28] sm:$0xff] %v2636
      %2664 = vst [vmem:[%s2657 + $0x30] sm:$0xff] %v2637
      %2665 = vst [vmem:[%s2657 + $0x38] sm:$0xff] %v2638
      %2666 = vst [vmem:[%s2657 + $0x40] sm:$0xff] %v2639
      %2667 = vst [vmem:[%s2657 + $0x48] sm:$0xff] %v2640
      %2668 = vst [vmem:[%s2657 + $0x50] sm:$0xff] %v2641
      %2669 = vst [vmem:[%s2657 + $0x58] sm:$0xff] %v2642
      %2670 = vst [vmem:[%s2657 + $0x60] sm:$0xff] %v2643
      %2671 = vst [vmem:[%s2657 + $0x68] sm:$0xff] %v2644
      %2672 = vst [vmem:[%s2657 + $0x70] sm:$0xff] %v2645
      %2673 = vst [vmem:[%s2657 + $0x78] sm:$0xff] %v2646
      %2674 = vst [vmem:[%s2657 + $0x80] sm:$0xff] %v2647
      %2675 = vst [vmem:[%s2657 + $0x88] sm:$0xff] %v2648
      %2676 = vst [vmem:[%s2657 + $0x90] sm:$0xff] %v2649
      %2677 = vst [vmem:[%s2657 + $0x98] sm:$0xff] %v2650
      %2678 = vst [vmem:[%s2657 + $0xa0] sm:$0xff] %v2651
      %2679 = vst [vmem:[%s2657 + $0xa8] sm:$0xff] %v2652
      %2680 = vst [vmem:[%s2657 + $0xb0] sm:$0xff] %v2653
      %2681 = vst [vmem:[%s2657 + $0xb8] sm:$0xff] %v2654
      %2682 = vst [vmem:[%s2657 + $0xc0] sm:$0xf] %v2655
      %2683 = vst [vmem:[%s2657 + $0xc8] sm:$0xf] %v2656
      %s2684 = scalar_lea.vmem %s269, 416
      %v2685 = vld [vmem:[%s2684] sm:$0xff]
      %v2686 = vld [vmem:[%s2684 + $0x8] sm:$0xff]
      %v2687 = vld [vmem:[%s2684 + $0x10] sm:$0xff]
      %v2688 = vld [vmem:[%s2684 + $0x18] sm:$0xff]
      %v2689 = vld [vmem:[%s2684 + $0x20] sm:$0xff]
      %v2690 = vld [vmem:[%s2684 + $0x28] sm:$0xff]
      %v2691 = vld [vmem:[%s2684 + $0x30] sm:$0xff]
      %v2692 = vld [vmem:[%s2684 + $0x38] sm:$0xff]
      %v2693 = vld [vmem:[%s2684 + $0x40] sm:$0xff]
      %v2694 = vld [vmem:[%s2684 + $0x48] sm:$0xff]
      %v2695 = vld [vmem:[%s2684 + $0x50] sm:$0xff]
      %v2696 = vld [vmem:[%s2684 + $0x58] sm:$0xff]
      %v2697 = vld [vmem:[%s2684 + $0x60] sm:$0xff]
      %v2698 = vld [vmem:[%s2684 + $0x68] sm:$0xff]
      %v2699 = vld [vmem:[%s2684 + $0x70] sm:$0xff]
      %v2700 = vld [vmem:[%s2684 + $0x78] sm:$0xff]
      %v2701 = vld [vmem:[%s2684 + $0x80] sm:$0xff]
      %v2702 = vld [vmem:[%s2684 + $0x88] sm:$0xff]
      %v2703 = vld [vmem:[%s2684 + $0x90] sm:$0xff]
      %v2704 = vld [vmem:[%s2684 + $0x98] sm:$0xff]
      %v2705 = vld [vmem:[%s2684 + $0xa0] sm:$0xff]
      %v2706 = vld [vmem:[%s2684 + $0xa8] sm:$0xff]
      %v2707 = vld [vmem:[%s2684 + $0xb0] sm:$0xff]
      %v2708 = vld [vmem:[%s2684 + $0xb8] sm:$0xff]
      %v2709 = vld [vmem:[%s2684 + $0xc0] sm:$0xf]
      %v2710 = vld [vmem:[%s2684 + $0xc8] sm:$0xf]
      %v2711 = vpack.c.bf16 %v2687, %v2685
      %v2712 = vpack.c.bf16 %v2688, %v2686
      %v2713 = vpack.c.bf16 %v2691, %v2689
      %v2714 = vpack.c.bf16 %v2692, %v2690
      %v2715 = vpack.c.bf16 %v2695, %v2693
      %v2716 = vpack.c.bf16 %v2696, %v2694
      %v2717 = vpack.c.bf16 %v2699, %v2697
      %v2718 = vpack.c.bf16 %v2700, %v2698
      %v2719 = vpack.c.bf16 %v2703, %v2701
      %v2720 = vpack.c.bf16 %v2704, %v2702
      %v2721 = vpack.c.bf16 %v2707, %v2705
      %v2722 = vpack.c.bf16 %v2708, %v2706
      %v2723 = vpack.c.bf16 %v2709, %v2709
      %v2724 = vpack.c.bf16 %v2710, %v2710
      %2725 = vmatprep.subr.bf16.mxu0 0
      %2726 = vmatpush1.bf16.msra.mxu0 %v325
      %2727 = vmatprep.subr.bf16.mxu0 0
      %2728 = vmatpush1.bf16.msra.mxu0 %v324
      %2729 = vmatprep.subr.bf16.mxu0 0
      %2730 = vmatpush1.bf16.msra.mxu0 %v323
      %2731 = vmatprep.subr.bf16.mxu0 0
      %2732 = vmatpush1.bf16.msra.mxu0 %v322
      %2733 = vmatprep.subr.bf16.mxu0 0
      %2734 = vmatpush1.bf16.msra.mxu0 %v321
      %2735 = vmatprep.subr.bf16.mxu0 0
      %2736 = vmatpush1.bf16.msra.mxu0 %v320
      %2737 = vmatprep.subr.bf16.mxu0 0
      %2738 = vmatpush1.bf16.msra.mxu0 %v319
      %2739 = vmatprep.subr.bf16.mxu0 0
      %2740 = vmatpush1.bf16.msra.mxu0 %v318
      %2741 = vmatprep.subr.bf16.mxu0 0
      %2742 = vmatpush2.bf16.msra.mxu0 %v333
      %2743 = vmatprep.subr.bf16.mxu0 0
      %2744 = vmatpush2.bf16.msra.mxu0 %v332
      %2745 = vmatprep.subr.bf16.mxu0 0
      %2746 = vmatpush2.bf16.msra.mxu0 %v331
      %2747 = vmatprep.subr.bf16.mxu0 0
      %2748 = vmatpush2.bf16.msra.mxu0 %v330
      %2749 = vmatprep.subr.bf16.mxu0 0
      %2750 = vmatpush2.bf16.msra.mxu0 %v329
      %2751 = vmatprep.subr.bf16.mxu0 0
      %2752 = vmatpush2.bf16.msra.mxu0 %v328
      %2753 = vmatprep.subr.bf16.mxu0 0
      %2754 = vmatpush2.bf16.msra.mxu0 %v327
      %2755 = vmatprep.subr.bf16.mxu0 0
      %2756 = vmatpush2.bf16.msra.mxu0 %v326
      %2757 = vmatprep.mubr.bf16.mxu0 %v2712
      %2758 = vmatmul.mubr.bf16.gmra.mxu0 %v2711
      %v2759 = vpop.f32.mrf.mxu0
      %v2760 = vadd.f32 %v388, %v2759
      %v2761 = vpop.f32.mrf.mxu0
      %v2762 = vpop.f32.mrf.mxu0
      %v2763 = vadd.f32 %v388, %v2762
      %v2764 = vpop.f32.mrf.mxu0
      %2765 = vmatprep.mubr.bf16.mxu0 %v2714
      %2766 = vmatmul.mubr.bf16.gmra.mxu0 %v2713
      %v2767 = vpop.f32.mrf.mxu0
      %v2768 = vadd.f32 %v388, %v2767
      %v2769 = vpop.f32.mrf.mxu0
      %v2770 = vpop.f32.mrf.mxu0
      %v2771 = vadd.f32 %v388, %v2770
      %v2772 = vpop.f32.mrf.mxu0
      %2773 = vmatprep.mubr.bf16.mxu0 %v2716
      %2774 = vmatmul.mubr.bf16.gmra.mxu0 %v2715
      %v2775 = vpop.f32.mrf.mxu0
      %v2776 = vadd.f32 %v388, %v2775
      %v2777 = vpop.f32.mrf.mxu0
      %v2778 = vpop.f32.mrf.mxu0
      %v2779 = vadd.f32 %v388, %v2778
      %v2780 = vpop.f32.mrf.mxu0
      %2781 = vmatprep.mubr.bf16.mxu0 %v2718
      %2782 = vmatmul.mubr.bf16.gmra.mxu0 %v2717
      %v2783 = vpop.f32.mrf.mxu0
      %v2784 = vadd.f32 %v388, %v2783
      %v2785 = vpop.f32.mrf.mxu0
      %v2786 = vpop.f32.mrf.mxu0
      %v2787 = vadd.f32 %v388, %v2786
      %v2788 = vpop.f32.mrf.mxu0
      %2789 = vmatprep.mubr.bf16.mxu0 %v2720
      %2790 = vmatmul.mubr.bf16.gmra.mxu0 %v2719
      %v2791 = vpop.f32.mrf.mxu0
      %v2792 = vadd.f32 %v388, %v2791
      %v2793 = vpop.f32.mrf.mxu0
      %v2794 = vpop.f32.mrf.mxu0
      %v2795 = vadd.f32 %v388, %v2794
      %v2796 = vpop.f32.mrf.mxu0
      %2797 = vmatprep.mubr.bf16.mxu0 %v2722
      %2798 = vmatmul.mubr.bf16.gmra.mxu0 %v2721
      %v2799 = vpop.f32.mrf.mxu0
      %v2800 = vadd.f32 %v388, %v2799
      %v2801 = vpop.f32.mrf.mxu0
      %v2802 = vpop.f32.mrf.mxu0
      %v2803 = vadd.f32 %v388, %v2802
      %v2804 = vpop.f32.mrf.mxu0
      %2805 = vmatprep.mubr.bf16.mxu0 %v2724
      %2806 = vmatmul.mubr.bf16.gmra.mxu0 %v2723
      %v2807 = vpop.f32.mrf.mxu0
      %v2808 = vadd.f32 %v388, %v2807
      %v2809 = vpop.f32.mrf.mxu0
      %v2810 = vpop.f32.mrf.mxu0
      %v2811 = vpop.f32.mrf.mxu0
      %2812 = vdwg.mxu0
      %s2813 = scalar_lea.vmem %s276, 416
      %v2814 = vld [vmem:[%s2813] sm:$0xff]
      %v2815 = vld [vmem:[%s2813 + $0x8] sm:$0xff]
      %v2816 = vld [vmem:[%s2813 + $0x10] sm:$0xff]
      %v2817 = vld [vmem:[%s2813 + $0x18] sm:$0xff]
      %v2818 = vld [vmem:[%s2813 + $0x20] sm:$0xff]
      %v2819 = vld [vmem:[%s2813 + $0x28] sm:$0xff]
      %v2820 = vld [vmem:[%s2813 + $0x30] sm:$0xff]
      %v2821 = vld [vmem:[%s2813 + $0x38] sm:$0xff]
      %v2822 = vld [vmem:[%s2813 + $0x40] sm:$0xff]
      %v2823 = vld [vmem:[%s2813 + $0x48] sm:$0xff]
      %v2824 = vld [vmem:[%s2813 + $0x50] sm:$0xff]
      %v2825 = vld [vmem:[%s2813 + $0x58] sm:$0xff]
      %v2826 = vld [vmem:[%s2813 + $0x60] sm:$0xff]
      %v2827 = vld [vmem:[%s2813 + $0x68] sm:$0xff]
      %v2828 = vld [vmem:[%s2813 + $0x70] sm:$0xff]
      %v2829 = vld [vmem:[%s2813 + $0x78] sm:$0xff]
      %v2830 = vld [vmem:[%s2813 + $0x80] sm:$0xff]
      %v2831 = vld [vmem:[%s2813 + $0x88] sm:$0xff]
      %v2832 = vld [vmem:[%s2813 + $0x90] sm:$0xff]
      %v2833 = vld [vmem:[%s2813 + $0x98] sm:$0xff]
      %v2834 = vld [vmem:[%s2813 + $0xa0] sm:$0xff]
      %v2835 = vld [vmem:[%s2813 + $0xa8] sm:$0xff]
      %v2836 = vld [vmem:[%s2813 + $0xb0] sm:$0xff]
      %v2837 = vld [vmem:[%s2813 + $0xb8] sm:$0xff]
      %v2838 = vld [vmem:[%s2813 + $0xc0] sm:$0xf]
      %v2839 = vld [vmem:[%s2813 + $0xc8] sm:$0xf]
      %2840 = vrot.lane.b32.xlu0 %v2814, 1
      %v2841 = vpop.permute.xlu0 %2840
      %2842 = vrot.lane.b32.xlu0 %v2816, 1
      %v2843 = vpop.permute.xlu0 %2842
      %2844 = vrot.lane.b32.xlu0 %v2818, 1
      %v2845 = vpop.permute.xlu0 %2844
      %2846 = vrot.lane.b32.xlu0 %v2820, 1
      %v2847 = vpop.permute.xlu0 %2846
      %2848 = vrot.lane.b32.xlu0 %v2822, 1
      %v2849 = vpop.permute.xlu0 %2848
      %2850 = vrot.lane.b32.xlu0 %v2824, 1
      %v2851 = vpop.permute.xlu0 %2850
      %2852 = vrot.lane.b32.xlu0 %v2826, 1
      %v2853 = vpop.permute.xlu0 %2852
      %2854 = vrot.lane.b32.xlu0 %v2828, 1
      %v2855 = vpop.permute.xlu0 %2854
      %2856 = vrot.lane.b32.xlu0 %v2830, 1
      %v2857 = vpop.permute.xlu0 %2856
      %2858 = vrot.lane.b32.xlu0 %v2832, 1
      %v2859 = vpop.permute.xlu0 %2858
      %2860 = vrot.lane.b32.xlu0 %v2834, 1
      %v2861 = vpop.permute.xlu0 %2860
      %2862 = vrot.lane.b32.xlu0 %v2836, 1
      %v2863 = vpop.permute.xlu0 %2862
      %2864 = vrot.lane.b32.xlu0 %v2838, 1
      %v2865 = vpop.permute.xlu0 %2864
      %2866 = vrot.lane.b32.xlu0 %v2815, 1
      %v2867 = vpop.permute.xlu0 %2866
      %2868 = vrot.lane.b32.xlu0 %v2817, 1
      %v2869 = vpop.permute.xlu0 %2868
      %2870 = vrot.lane.b32.xlu0 %v2819, 1
      %v2871 = vpop.permute.xlu0 %2870
      %2872 = vrot.lane.b32.xlu0 %v2821, 1
      %v2873 = vpop.permute.xlu0 %2872
      %2874 = vrot.lane.b32.xlu0 %v2823, 1
      %v2875 = vpop.permute.xlu0 %2874
      %2876 = vrot.lane.b32.xlu0 %v2825, 1
      %v2877 = vpop.permute.xlu0 %2876
      %2878 = vrot.lane.b32.xlu0 %v2827, 1
      %v2879 = vpop.permute.xlu0 %2878
      %2880 = vrot.lane.b32.xlu0 %v2829, 1
      %v2881 = vpop.permute.xlu0 %2880
      %2882 = vrot.lane.b32.xlu0 %v2831, 1
      %v2883 = vpop.permute.xlu0 %2882
      %2884 = vrot.lane.b32.xlu0 %v2833, 1
      %v2885 = vpop.permute.xlu0 %2884
      %2886 = vrot.lane.b32.xlu0 %v2835, 1
      %v2887 = vpop.permute.xlu0 %2886
      %2888 = vrot.lane.b32.xlu0 %v2837, 1
      %v2889 = vpop.permute.xlu0 %2888
      %2890 = vrot.lane.b32.xlu0 %v2839, 1
      %v2891 = vpop.permute.xlu0 %2890
      %v2892 = vsel %vm556, %v2841, %v2867
      %v2893 = vsel %vm556, %v2843, %v2869
      %v2894 = vsel %vm556, %v2845, %v2871
      %v2895 = vsel %vm556, %v2847, %v2873
      %v2896 = vsel %vm556, %v2849, %v2875
      %v2897 = vsel %vm556, %v2851, %v2877
      %v2898 = vsel %vm556, %v2853, %v2879
      %v2899 = vsel %vm556, %v2855, %v2881
      %v2900 = vsel %vm556, %v2857, %v2883
      %v2901 = vsel %vm556, %v2859, %v2885
      %v2902 = vsel %vm556, %v2861, %v2887
      %v2903 = vsel %vm556, %v2863, %v2889
      %v2904 = vsel %vm556, %v2865, %v2891
      %v2905 = vsel %vm556, %v2867, %v2841
      %v2906 = vsel %vm556, %v2869, %v2843
      %v2907 = vsel %vm556, %v2871, %v2845
      %v2908 = vsel %vm556, %v2873, %v2847
      %v2909 = vsel %vm556, %v2875, %v2849
      %v2910 = vsel %vm556, %v2877, %v2851
      %v2911 = vsel %vm556, %v2879, %v2853
      %v2912 = vsel %vm556, %v2881, %v2855
      %v2913 = vsel %vm556, %v2883, %v2857
      %v2914 = vsel %vm556, %v2885, %v2859
      %v2915 = vsel %vm556, %v2887, %v2861
      %v2916 = vsel %vm556, %v2889, %v2863
      %v2917 = vsel %vm556, %v2891, %v2865
      %v2918 = vsel %vm340, %v2905, 0.0
      %v2919 = vsel %vm341, %v2892, 0.0
      %v2920 = vsel %vm340, %v2906, 0.0
      %v2921 = vsel %vm341, %v2893, 0.0
      %v2922 = vsel %vm340, %v2907, 0.0
      %v2923 = vsel %vm341, %v2894, 0.0
      %v2924 = vsel %vm340, %v2908, 0.0
      %v2925 = vsel %vm341, %v2895, 0.0
      %v2926 = vsel %vm340, %v2909, 0.0
      %v2927 = vsel %vm341, %v2896, 0.0
      %v2928 = vsel %vm340, %v2910, 0.0
      %v2929 = vsel %vm341, %v2897, 0.0
      %v2930 = vsel %vm340, %v2911, 0.0
      %v2931 = vsel %vm341, %v2898, 0.0
      %v2932 = vsel %vm340, %v2912, 0.0
      %v2933 = vsel %vm341, %v2899, 0.0
      %v2934 = vsel %vm340, %v2913, 0.0
      %v2935 = vsel %vm341, %v2900, 0.0
      %v2936 = vsel %vm340, %v2914, 0.0
      %v2937 = vsel %vm341, %v2901, 0.0
      %v2938 = vsel %vm340, %v2915, 0.0
      %v2939 = vsel %vm341, %v2902, 0.0
      %v2940 = vsel %vm340, %v2916, 0.0
      %v2941 = vsel %vm341, %v2903, 0.0
      %v2942 = vsel %vm340, %v2917, 0.0
      %v2943 = vsel %vm341, %v2904, 0.0
      %2944 = vrot.lane.b32.xlu0 %v2814, 127
      %v2945 = vpop.permute.xlu0 %2944
      %2946 = vrot.lane.b32.xlu0 %v2816, 127
      %v2947 = vpop.permute.xlu0 %2946
      %2948 = vrot.lane.b32.xlu0 %v2818, 127
      %v2949 = vpop.permute.xlu0 %2948
      %2950 = vrot.lane.b32.xlu0 %v2820, 127
      %v2951 = vpop.permute.xlu0 %2950
      %2952 = vrot.lane.b32.xlu0 %v2822, 127
      %v2953 = vpop.permute.xlu0 %2952
      %2954 = vrot.lane.b32.xlu0 %v2824, 127
      %v2955 = vpop.permute.xlu0 %2954
      %2956 = vrot.lane.b32.xlu0 %v2826, 127
      %v2957 = vpop.permute.xlu0 %2956
      %2958 = vrot.lane.b32.xlu0 %v2828, 127
      %v2959 = vpop.permute.xlu0 %2958
      %2960 = vrot.lane.b32.xlu0 %v2830, 127
      %v2961 = vpop.permute.xlu0 %2960
      %2962 = vrot.lane.b32.xlu0 %v2832, 127
      %v2963 = vpop.permute.xlu0 %2962
      %2964 = vrot.lane.b32.xlu0 %v2834, 127
      %v2965 = vpop.permute.xlu0 %2964
      %2966 = vrot.lane.b32.xlu0 %v2836, 127
      %v2967 = vpop.permute.xlu0 %2966
      %2968 = vrot.lane.b32.xlu0 %v2838, 127
      %v2969 = vpop.permute.xlu0 %2968
      %2970 = vrot.lane.b32.xlu0 %v2815, 127
      %v2971 = vpop.permute.xlu0 %2970
      %2972 = vrot.lane.b32.xlu0 %v2817, 127
      %v2973 = vpop.permute.xlu0 %2972
      %2974 = vrot.lane.b32.xlu0 %v2819, 127
      %v2975 = vpop.permute.xlu0 %2974
      %2976 = vrot.lane.b32.xlu0 %v2821, 127
      %v2977 = vpop.permute.xlu0 %2976
      %2978 = vrot.lane.b32.xlu0 %v2823, 127
      %v2979 = vpop.permute.xlu0 %2978
      %2980 = vrot.lane.b32.xlu0 %v2825, 127
      %v2981 = vpop.permute.xlu0 %2980
      %2982 = vrot.lane.b32.xlu0 %v2827, 127
      %v2983 = vpop.permute.xlu0 %2982
      %2984 = vrot.lane.b32.xlu0 %v2829, 127
      %v2985 = vpop.permute.xlu0 %2984
      %2986 = vrot.lane.b32.xlu0 %v2831, 127
      %v2987 = vpop.permute.xlu0 %2986
      %2988 = vrot.lane.b32.xlu0 %v2833, 127
      %v2989 = vpop.permute.xlu0 %2988
      %2990 = vrot.lane.b32.xlu0 %v2835, 127
      %v2991 = vpop.permute.xlu0 %2990
      %2992 = vrot.lane.b32.xlu0 %v2837, 127
      %v2993 = vpop.permute.xlu0 %2992
      %2994 = vrot.lane.b32.xlu0 %v2839, 127
      %v2995 = vpop.permute.xlu0 %2994
      %v2996 = vsel %vm661, %v2945, %v2971
      %v2997 = vsel %vm661, %v2947, %v2973
      %v2998 = vsel %vm661, %v2949, %v2975
      %v2999 = vsel %vm661, %v2951, %v2977
      %v3000 = vsel %vm661, %v2953, %v2979
      %v3001 = vsel %vm661, %v2955, %v2981
      %v3002 = vsel %vm661, %v2957, %v2983
      %v3003 = vsel %vm661, %v2959, %v2985
      %v3004 = vsel %vm661, %v2961, %v2987
      %v3005 = vsel %vm661, %v2963, %v2989
      %v3006 = vsel %vm661, %v2965, %v2991
      %v3007 = vsel %vm661, %v2967, %v2993
      %v3008 = vsel %vm661, %v2969, %v2995
      %v3009 = vsel %vm661, %v2971, %v2945
      %v3010 = vsel %vm661, %v2973, %v2947
      %v3011 = vsel %vm661, %v2975, %v2949
      %v3012 = vsel %vm661, %v2977, %v2951
      %v3013 = vsel %vm661, %v2979, %v2953
      %v3014 = vsel %vm661, %v2981, %v2955
      %v3015 = vsel %vm661, %v2983, %v2957
      %v3016 = vsel %vm661, %v2985, %v2959
      %v3017 = vsel %vm661, %v2987, %v2961
      %v3018 = vsel %vm661, %v2989, %v2963
      %v3019 = vsel %vm661, %v2991, %v2965
      %v3020 = vsel %vm661, %v2993, %v2967
      %v3021 = vsel %vm661, %v2995, %v2969
      %v3022 = vsel %vm342, %v2996, 0.0
      %v3023 = vsel %vm343, %v3009, 0.0
      %v3024 = vsel %vm342, %v2997, 0.0
      %v3025 = vsel %vm343, %v3010, 0.0
      %v3026 = vsel %vm342, %v2998, 0.0
      %v3027 = vsel %vm343, %v3011, 0.0
      %v3028 = vsel %vm342, %v2999, 0.0
      %v3029 = vsel %vm343, %v3012, 0.0
      %v3030 = vsel %vm342, %v3000, 0.0
      %v3031 = vsel %vm343, %v3013, 0.0
      %v3032 = vsel %vm342, %v3001, 0.0
      %v3033 = vsel %vm343, %v3014, 0.0
      %v3034 = vsel %vm342, %v3002, 0.0
      %v3035 = vsel %vm343, %v3015, 0.0
      %v3036 = vsel %vm342, %v3003, 0.0
      %v3037 = vsel %vm343, %v3016, 0.0
      %v3038 = vsel %vm342, %v3004, 0.0
      %v3039 = vsel %vm343, %v3017, 0.0
      %v3040 = vsel %vm342, %v3005, 0.0
      %v3041 = vsel %vm343, %v3018, 0.0
      %v3042 = vsel %vm342, %v3006, 0.0
      %v3043 = vsel %vm343, %v3019, 0.0
      %v3044 = vsel %vm342, %v3007, 0.0
      %v3045 = vsel %vm343, %v3020, 0.0
      %v3046 = vsel %vm342, %v3008, 0.0
      %v3047 = vsel %vm343, %v3021, 0.0
      %3049 = vset.pattern.permute.xlu0 101
      %3050 = vperm.xlu0 %3049, %v2760
      %v3051 = vpop.permute.xlu0 %3050
      %3054 = vset.pattern.permute.xlu0 101
      %3055 = vperm.xlu0 %3054, %v2763
      %v3056 = vpop.permute.xlu0 %3055
      %3059 = vset.pattern.permute.xlu0 101
      %3060 = vperm.xlu0 %3059, %v2768
      %v3061 = vpop.permute.xlu0 %3060
      %3064 = vset.pattern.permute.xlu0 101
      %3065 = vperm.xlu0 %3064, %v2771
      %v3066 = vpop.permute.xlu0 %3065
      %3069 = vset.pattern.permute.xlu0 101
      %3070 = vperm.xlu0 %3069, %v2776
      %v3071 = vpop.permute.xlu0 %3070
      %3074 = vset.pattern.permute.xlu0 101
      %3075 = vperm.xlu0 %3074, %v2779
      %v3076 = vpop.permute.xlu0 %3075
      %3079 = vset.pattern.permute.xlu0 101
      %3080 = vperm.xlu0 %3079, %v2784
      %v3081 = vpop.permute.xlu0 %3080
      %3084 = vset.pattern.permute.xlu0 101
      %3085 = vperm.xlu0 %3084, %v2787
      %v3086 = vpop.permute.xlu0 %3085
      %3089 = vset.pattern.permute.xlu0 101
      %3090 = vperm.xlu0 %3089, %v2792
      %v3091 = vpop.permute.xlu0 %3090
      %3094 = vset.pattern.permute.xlu0 101
      %3095 = vperm.xlu0 %3094, %v2795
      %v3096 = vpop.permute.xlu0 %3095
      %3099 = vset.pattern.permute.xlu0 101
      %3100 = vperm.xlu0 %3099, %v2800
      %v3101 = vpop.permute.xlu0 %3100
      %3104 = vset.pattern.permute.xlu0 101
      %3105 = vperm.xlu0 %3104, %v2803
      %v3106 = vpop.permute.xlu0 %3105
      %3109 = vset.pattern.permute.xlu0 101
      %3110 = vperm.xlu0 %3109, %v2808
      %v3111 = vpop.permute.xlu0 %3110
      %v3113 = vmul.f32 %v3051, %v2814
      %v3114 = vmul.f32 %v3051, %v2815
      %v3115 = vmul.f32 %v3056, %v2816
      %v3116 = vmul.f32 %v3056, %v2817
      %v3117 = vmul.f32 %v3061, %v2818
      %v3118 = vmul.f32 %v3061, %v2819
      %v3119 = vmul.f32 %v3066, %v2820
      %v3120 = vmul.f32 %v3066, %v2821
      %v3121 = vmul.f32 %v3071, %v2822
      %v3122 = vmul.f32 %v3071, %v2823
      %v3123 = vmul.f32 %v3076, %v2824
      %v3124 = vmul.f32 %v3076, %v2825
      %v3125 = vmul.f32 %v3081, %v2826
      %v3126 = vmul.f32 %v3081, %v2827
      %v3127 = vmul.f32 %v3086, %v2828
      %v3128 = vmul.f32 %v3086, %v2829
      %v3129 = vmul.f32 %v3091, %v2830
      %v3130 = vmul.f32 %v3091, %v2831
      %v3131 = vmul.f32 %v3096, %v2832
      %v3132 = vmul.f32 %v3096, %v2833
      %v3133 = vmul.f32 %v3101, %v2834
      %v3134 = vmul.f32 %v3101, %v2835
      %v3135 = vmul.f32 %v3106, %v2836
      %v3136 = vmul.f32 %v3106, %v2837
      %v3137 = vmul.f32 %v3111, %v2838
      %v3138 = vmul.f32 %v3111, %v2839
      %3139 = vset.pattern.permute.xlu0 100
      %3140 = vperm.xlu0 %3139, %v2760
      %v3141 = vpop.permute.xlu0 %3140
      %3143 = vset.pattern.permute.xlu0 100
      %3144 = vperm.xlu0 %3143, %v2763
      %v3145 = vpop.permute.xlu0 %3144
      %3147 = vset.pattern.permute.xlu0 100
      %3148 = vperm.xlu0 %3147, %v2768
      %v3149 = vpop.permute.xlu0 %3148
      %3151 = vset.pattern.permute.xlu0 100
      %3152 = vperm.xlu0 %3151, %v2771
      %v3153 = vpop.permute.xlu0 %3152
      %3155 = vset.pattern.permute.xlu0 100
      %3156 = vperm.xlu0 %3155, %v2776
      %v3157 = vpop.permute.xlu0 %3156
      %3159 = vset.pattern.permute.xlu0 100
      %3160 = vperm.xlu0 %3159, %v2779
      %v3161 = vpop.permute.xlu0 %3160
      %3163 = vset.pattern.permute.xlu0 100
      %3164 = vperm.xlu0 %3163, %v2784
      %v3165 = vpop.permute.xlu0 %3164
      %3167 = vset.pattern.permute.xlu0 100
      %3168 = vperm.xlu0 %3167, %v2787
      %v3169 = vpop.permute.xlu0 %3168
      %3171 = vset.pattern.permute.xlu0 100
      %3172 = vperm.xlu0 %3171, %v2792
      %v3173 = vpop.permute.xlu0 %3172
      %3175 = vset.pattern.permute.xlu0 100
      %3176 = vperm.xlu0 %3175, %v2795
      %v3177 = vpop.permute.xlu0 %3176
      %3179 = vset.pattern.permute.xlu0 100
      %3180 = vperm.xlu0 %3179, %v2800
      %v3181 = vpop.permute.xlu0 %3180
      %3183 = vset.pattern.permute.xlu0 100
      %3184 = vperm.xlu0 %3183, %v2803
      %v3185 = vpop.permute.xlu0 %3184
      %3187 = vset.pattern.permute.xlu0 100
      %3188 = vperm.xlu0 %3187, %v2808
      %v3189 = vpop.permute.xlu0 %3188
      %v3191 = vmul.f32 %v3141, %v2918
      %v3192 = vmul.f32 %v3141, %v2919
      %v3193 = vmul.f32 %v3145, %v2920
      %v3194 = vmul.f32 %v3145, %v2921
      %v3195 = vmul.f32 %v3149, %v2922
      %v3196 = vmul.f32 %v3149, %v2923
      %v3197 = vmul.f32 %v3153, %v2924
      %v3198 = vmul.f32 %v3153, %v2925
      %v3199 = vmul.f32 %v3157, %v2926
      %v3200 = vmul.f32 %v3157, %v2927
      %v3201 = vmul.f32 %v3161, %v2928
      %v3202 = vmul.f32 %v3161, %v2929
      %v3203 = vmul.f32 %v3165, %v2930
      %v3204 = vmul.f32 %v3165, %v2931
      %v3205 = vmul.f32 %v3169, %v2932
      %v3206 = vmul.f32 %v3169, %v2933
      %v3207 = vmul.f32 %v3173, %v2934
      %v3208 = vmul.f32 %v3173, %v2935
      %v3209 = vmul.f32 %v3177, %v2936
      %v3210 = vmul.f32 %v3177, %v2937
      %v3211 = vmul.f32 %v3181, %v2938
      %v3212 = vmul.f32 %v3181, %v2939
      %v3213 = vmul.f32 %v3185, %v2940
      %v3214 = vmul.f32 %v3185, %v2941
      %v3215 = vmul.f32 %v3189, %v2942
      %v3216 = vmul.f32 %v3189, %v2943
      %v3217 = vadd.f32 %v3113, %v3191
      %v3218 = vadd.f32 %v3114, %v3192
      %v3219 = vadd.f32 %v3115, %v3193
      %v3220 = vadd.f32 %v3116, %v3194
      %v3221 = vadd.f32 %v3117, %v3195
      %v3222 = vadd.f32 %v3118, %v3196
      %v3223 = vadd.f32 %v3119, %v3197
      %v3224 = vadd.f32 %v3120, %v3198
      %v3225 = vadd.f32 %v3121, %v3199
      %v3226 = vadd.f32 %v3122, %v3200
      %v3227 = vadd.f32 %v3123, %v3201
      %v3228 = vadd.f32 %v3124, %v3202
      %v3229 = vadd.f32 %v3125, %v3203
      %v3230 = vadd.f32 %v3126, %v3204
      %v3231 = vadd.f32 %v3127, %v3205
      %v3232 = vadd.f32 %v3128, %v3206
      %v3233 = vadd.f32 %v3129, %v3207
      %v3234 = vadd.f32 %v3130, %v3208
      %v3235 = vadd.f32 %v3131, %v3209
      %v3236 = vadd.f32 %v3132, %v3210
      %v3237 = vadd.f32 %v3133, %v3211
      %v3238 = vadd.f32 %v3134, %v3212
      %v3239 = vadd.f32 %v3135, %v3213
      %v3240 = vadd.f32 %v3136, %v3214
      %v3241 = vadd.f32 %v3137, %v3215
      %v3242 = vadd.f32 %v3138, %v3216
      %3243 = vset.pattern.permute.xlu0 102
      %3244 = vperm.xlu0 %3243, %v2760
      %v3245 = vpop.permute.xlu0 %3244
      %3247 = vset.pattern.permute.xlu0 102
      %3248 = vperm.xlu0 %3247, %v2763
      %v3249 = vpop.permute.xlu0 %3248
      %3251 = vset.pattern.permute.xlu0 102
      %3252 = vperm.xlu0 %3251, %v2768
      %v3253 = vpop.permute.xlu0 %3252
      %3255 = vset.pattern.permute.xlu0 102
      %3256 = vperm.xlu0 %3255, %v2771
      %v3257 = vpop.permute.xlu0 %3256
      %3259 = vset.pattern.permute.xlu0 102
      %3260 = vperm.xlu0 %3259, %v2776
      %v3261 = vpop.permute.xlu0 %3260
      %3263 = vset.pattern.permute.xlu0 102
      %3264 = vperm.xlu0 %3263, %v2779
      %v3265 = vpop.permute.xlu0 %3264
      %3267 = vset.pattern.permute.xlu0 102
      %3268 = vperm.xlu0 %3267, %v2784
      %v3269 = vpop.permute.xlu0 %3268
      %3271 = vset.pattern.permute.xlu0 102
      %3272 = vperm.xlu0 %3271, %v2787
      %v3273 = vpop.permute.xlu0 %3272
      %3275 = vset.pattern.permute.xlu0 102
      %3276 = vperm.xlu0 %3275, %v2792
      %v3277 = vpop.permute.xlu0 %3276
      %3279 = vset.pattern.permute.xlu0 102
      %3280 = vperm.xlu0 %3279, %v2795
      %v3281 = vpop.permute.xlu0 %3280
      %3283 = vset.pattern.permute.xlu0 102
      %3284 = vperm.xlu0 %3283, %v2800
      %v3285 = vpop.permute.xlu0 %3284
      %3287 = vset.pattern.permute.xlu0 102
      %3288 = vperm.xlu0 %3287, %v2803
      %v3289 = vpop.permute.xlu0 %3288
      %3291 = vset.pattern.permute.xlu0 102
      %3292 = vperm.xlu0 %3291, %v2808
      %v3293 = vpop.permute.xlu0 %3292
      %v3295 = vmul.f32 %v3245, %v3022
      %v3296 = vmul.f32 %v3245, %v3023
      %v3297 = vmul.f32 %v3249, %v3024
      %v3298 = vmul.f32 %v3249, %v3025
      %v3299 = vmul.f32 %v3253, %v3026
      %v3300 = vmul.f32 %v3253, %v3027
      %v3301 = vmul.f32 %v3257, %v3028
      %v3302 = vmul.f32 %v3257, %v3029
      %v3303 = vmul.f32 %v3261, %v3030
      %v3304 = vmul.f32 %v3261, %v3031
      %v3305 = vmul.f32 %v3265, %v3032
      %v3306 = vmul.f32 %v3265, %v3033
      %v3307 = vmul.f32 %v3269, %v3034
      %v3308 = vmul.f32 %v3269, %v3035
      %v3309 = vmul.f32 %v3273, %v3036
      %v3310 = vmul.f32 %v3273, %v3037
      %v3311 = vmul.f32 %v3277, %v3038
      %v3312 = vmul.f32 %v3277, %v3039
      %v3313 = vmul.f32 %v3281, %v3040
      %v3314 = vmul.f32 %v3281, %v3041
      %v3315 = vmul.f32 %v3285, %v3042
      %v3316 = vmul.f32 %v3285, %v3043
      %v3317 = vmul.f32 %v3289, %v3044
      %v3318 = vmul.f32 %v3289, %v3045
      %v3319 = vmul.f32 %v3293, %v3046
      %v3320 = vmul.f32 %v3293, %v3047
      %v3321 = vadd.f32 %v3217, %v3295
      %v3322 = vadd.f32 %v3218, %v3296
      %v3323 = vadd.f32 %v3219, %v3297
      %v3324 = vadd.f32 %v3220, %v3298
      %v3325 = vadd.f32 %v3221, %v3299
      %v3326 = vadd.f32 %v3222, %v3300
      %v3327 = vadd.f32 %v3223, %v3301
      %v3328 = vadd.f32 %v3224, %v3302
      %v3329 = vadd.f32 %v3225, %v3303
      %v3330 = vadd.f32 %v3226, %v3304
      %v3331 = vadd.f32 %v3227, %v3305
      %v3332 = vadd.f32 %v3228, %v3306
      %v3333 = vadd.f32 %v3229, %v3307
      %v3334 = vadd.f32 %v3230, %v3308
      %v3335 = vadd.f32 %v3231, %v3309
      %v3336 = vadd.f32 %v3232, %v3310
      %v3337 = vadd.f32 %v3233, %v3311
      %v3338 = vadd.f32 %v3234, %v3312
      %v3339 = vadd.f32 %v3235, %v3313
      %v3340 = vadd.f32 %v3236, %v3314
      %v3341 = vadd.f32 %v3237, %v3315
      %v3342 = vadd.f32 %v3238, %v3316
      %v3343 = vadd.f32 %v3239, %v3317
      %v3344 = vadd.f32 %v3240, %v3318
      %v3345 = vadd.f32 %v3241, %v3319
      %v3346 = vadd.f32 %v3242, %v3320
      %v3347 = vmax.f32 %v3321, 0.0
      %v3348 = vmax.f32 %v3322, 0.0
      %v3349 = vmax.f32 %v3323, 0.0
      %v3350 = vmax.f32 %v3324, 0.0
      %v3351 = vmax.f32 %v3325, 0.0
      %v3352 = vmax.f32 %v3326, 0.0
      %v3353 = vmax.f32 %v3327, 0.0
      %v3354 = vmax.f32 %v3328, 0.0
      %v3355 = vmax.f32 %v3329, 0.0
      %v3356 = vmax.f32 %v3330, 0.0
      %v3357 = vmax.f32 %v3331, 0.0
      %v3358 = vmax.f32 %v3332, 0.0
      %v3359 = vmax.f32 %v3333, 0.0
      %v3360 = vmax.f32 %v3334, 0.0
      %v3361 = vmax.f32 %v3335, 0.0
      %v3362 = vmax.f32 %v3336, 0.0
      %v3363 = vmax.f32 %v3337, 0.0
      %v3364 = vmax.f32 %v3338, 0.0
      %v3365 = vmax.f32 %v3339, 0.0
      %v3366 = vmax.f32 %v3340, 0.0
      %v3367 = vmax.f32 %v3341, 0.0
      %v3368 = vmax.f32 %v3342, 0.0
      %v3369 = vmax.f32 %v3343, 0.0
      %v3370 = vmax.f32 %v3344, 0.0
      %v3371 = vmax.f32 %v3345, 0.0
      %v3372 = vmax.f32 %v3346, 0.0
      %v3373 = vpack.c.bf16 %v2763, %v2760
      %v3374 = vpack.c.bf16 %v2771, %v2768
      %v3375 = vpack.c.bf16 %v2779, %v2776
      %v3376 = vpack.c.bf16 %v2787, %v2784
      %v3377 = vpack.c.bf16 %v2795, %v2792
      %v3378 = vpack.c.bf16 %v2803, %v2800
      %v3379 = vpack.c.bf16 %v2808, %v2808
      %v3380 = vpack.c.bf16 %v3349, %v3347
      %v3381 = vpack.c.bf16 %v3350, %v3348
      %v3382 = vpack.c.bf16 %v3353, %v3351
      %v3383 = vpack.c.bf16 %v3354, %v3352
      %v3384 = vpack.c.bf16 %v3357, %v3355
      %v3385 = vpack.c.bf16 %v3358, %v3356
      %v3386 = vpack.c.bf16 %v3361, %v3359
      %v3387 = vpack.c.bf16 %v3362, %v3360
      %v3388 = vpack.c.bf16 %v3365, %v3363
      %v3389 = vpack.c.bf16 %v3366, %v3364
      %v3390 = vpack.c.bf16 %v3369, %v3367
      %v3391 = vpack.c.bf16 %v3370, %v3368
      %v3392 = vpack.c.bf16 %v3371, %v3371
      %v3393 = vpack.c.bf16 %v3372, %v3372
      %v3395 = vsel %vm1060, %v3373, 0
      %v3398 = vsel %vm1060, %v3374, 0
      %v3401 = vsel %vm1060, %v3375, 0
      %v3404 = vsel %vm1060, %v3376, 0
      %v3407 = vsel %vm1060, %v3377, 0
      %v3410 = vsel %vm1060, %v3378, 0
      %v3413 = vsel %vm1060, %v3379, 0
      %v3416 = vsel %vm1082, %v3392, 0
      %v3419 = vsel %vm1082, %v3393, 0
      %3421 = vmatprep.subr.bf16.mxu0 0
      %3422 = vmatpush1.bf16.msra.mxu0 0
      %3423 = vmatprep.subr.bf16.mxu0 %v3419
      %3424 = vmatpush1.bf16.msra.mxu0 %v3416
      %3425 = vmatprep.subr.bf16.mxu0 %v3391
      %3426 = vmatpush1.bf16.msra.mxu0 %v3390
      %3427 = vmatprep.subr.bf16.mxu0 %v3389
      %3428 = vmatpush1.bf16.msra.mxu0 %v3388
      %3429 = vmatprep.subr.bf16.mxu0 %v3387
      %3430 = vmatpush1.bf16.msra.mxu0 %v3386
      %3431 = vmatprep.subr.bf16.mxu0 %v3385
      %3432 = vmatpush1.bf16.msra.mxu0 %v3384
      %3433 = vmatprep.subr.bf16.mxu0 %v3383
      %3434 = vmatpush1.bf16.msra.mxu0 %v3382
      %3435 = vmatprep.subr.bf16.mxu0 %v3381
      %3436 = vmatpush1.bf16.msra.mxu0 %v3380
      %3437 = vmatprep.subr.bf16.mxu0 0
      %3438 = vmatpush2.bf16.msra.mxu0 0
      %3439 = vmatprep.subr.bf16.mxu0 0
      %3440 = vmatpush2.bf16.msra.mxu0 0
      %3441 = vmatprep.subr.bf16.mxu0 0
      %3442 = vmatpush2.bf16.msra.mxu0 0
      %3443 = vmatprep.subr.bf16.mxu0 0
      %3444 = vmatpush2.bf16.msra.mxu0 0
      %3445 = vmatprep.subr.bf16.mxu0 0
      %3446 = vmatpush2.bf16.msra.mxu0 0
      %3447 = vmatprep.subr.bf16.mxu0 0
      %3448 = vmatpush2.bf16.msra.mxu0 0
      %3449 = vmatprep.subr.bf16.mxu0 0
      %3450 = vmatpush2.bf16.msra.mxu0 0
      %3451 = vmatprep.subr.bf16.mxu0 0
      %3452 = vmatpush2.bf16.msra.mxu0 0
      %3453 = vmatprep.mubr.bf16.mxu0 0
      %3454 = vmatmul.mubr.bf16.gmra.mxu0 %v3395
      %v3455 = vpop.f32.mrf.mxu0
      %v3456 = vadd.f32 0.0, %v3455
      %v3457 = vpop.f32.mrf.mxu0
      %v3458 = vadd.f32 0.0, %v3457
      %v3459 = vpop.f32.mrf.mxu0
      %v3460 = vadd.f32 0.0, %v3459
      %v3461 = vpop.f32.mrf.mxu0
      %v3462 = vadd.f32 0.0, %v3461
      %3463 = vmatprep.mubr.bf16.mxu0 0
      %3464 = vmatmul.mubr.bf16.gmra.mxu0 %v3398
      %v3465 = vpop.f32.mrf.mxu0
      %v3466 = vadd.f32 0.0, %v3465
      %v3467 = vpop.f32.mrf.mxu0
      %v3468 = vadd.f32 0.0, %v3467
      %v3469 = vpop.f32.mrf.mxu0
      %v3470 = vadd.f32 0.0, %v3469
      %v3471 = vpop.f32.mrf.mxu0
      %v3472 = vadd.f32 0.0, %v3471
      %3473 = vmatprep.mubr.bf16.mxu0 0
      %3474 = vmatmul.mubr.bf16.gmra.mxu0 %v3401
      %v3475 = vpop.f32.mrf.mxu0
      %v3476 = vadd.f32 0.0, %v3475
      %v3477 = vpop.f32.mrf.mxu0
      %v3478 = vadd.f32 0.0, %v3477
      %v3479 = vpop.f32.mrf.mxu0
      %v3480 = vadd.f32 0.0, %v3479
      %v3481 = vpop.f32.mrf.mxu0
      %v3482 = vadd.f32 0.0, %v3481
      %3483 = vmatprep.mubr.bf16.mxu0 0
      %3484 = vmatmul.mubr.bf16.gmra.mxu0 %v3404
      %v3485 = vpop.f32.mrf.mxu0
      %v3486 = vadd.f32 0.0, %v3485
      %v3487 = vpop.f32.mrf.mxu0
      %v3488 = vadd.f32 0.0, %v3487
      %v3489 = vpop.f32.mrf.mxu0
      %v3490 = vadd.f32 0.0, %v3489
      %v3491 = vpop.f32.mrf.mxu0
      %v3492 = vadd.f32 0.0, %v3491
      %3493 = vmatprep.mubr.bf16.mxu0 0
      %3494 = vmatmul.mubr.bf16.gmra.mxu0 %v3407
      %v3495 = vpop.f32.mrf.mxu0
      %v3496 = vadd.f32 0.0, %v3495
      %v3497 = vpop.f32.mrf.mxu0
      %v3498 = vadd.f32 0.0, %v3497
      %v3499 = vpop.f32.mrf.mxu0
      %v3500 = vadd.f32 0.0, %v3499
      %v3501 = vpop.f32.mrf.mxu0
      %v3502 = vadd.f32 0.0, %v3501
      %3503 = vmatprep.mubr.bf16.mxu0 0
      %3504 = vmatmul.mubr.bf16.gmra.mxu0 %v3410
      %v3505 = vpop.f32.mrf.mxu0
      %v3506 = vadd.f32 0.0, %v3505
      %v3507 = vpop.f32.mrf.mxu0
      %v3508 = vadd.f32 0.0, %v3507
      %v3509 = vpop.f32.mrf.mxu0
      %v3510 = vadd.f32 0.0, %v3509
      %v3511 = vpop.f32.mrf.mxu0
      %v3512 = vadd.f32 0.0, %v3511
      %3513 = vmatprep.mubr.bf16.mxu0 0
      %3514 = vmatmul.mubr.bf16.gmra.mxu0 %v3413
      %v3515 = vpop.f32.mrf.mxu0
      %v3516 = vadd.f32 0.0, %v3515
      %v3517 = vpop.f32.mrf.mxu0
      %v3518 = vadd.f32 0.0, %v3517
      %v3519 = vpop.f32.mrf.mxu0
      %v3520 = vpop.f32.mrf.mxu0
      %3521 = vdwg.mxu0
      %v3522 = vadd.f32 %v3456, %v3458
      %3523 = vadd.xlane.f32.xlu0 %v3522
      %v3524 = vpop.xlane.xlu0 %3523
      %v3525 = vadd.f32 %v3460, %v3462
      %3526 = vadd.xlane.f32.xlu0 %v3525
      %v3527 = vpop.xlane.xlu0 %3526
      %v3528 = vadd.f32 %v3466, %v3468
      %3529 = vadd.xlane.f32.xlu0 %v3528
      %v3530 = vpop.xlane.xlu0 %3529
      %v3531 = vadd.f32 %v3470, %v3472
      %3532 = vadd.xlane.f32.xlu0 %v3531
      %v3533 = vpop.xlane.xlu0 %3532
      %v3534 = vadd.f32 %v3476, %v3478
      %3535 = vadd.xlane.f32.xlu0 %v3534
      %v3536 = vpop.xlane.xlu0 %3535
      %v3537 = vadd.f32 %v3480, %v3482
      %3538 = vadd.xlane.f32.xlu0 %v3537
      %v3539 = vpop.xlane.xlu0 %3538
      %v3540 = vadd.f32 %v3486, %v3488
      %3541 = vadd.xlane.f32.xlu0 %v3540
      %v3542 = vpop.xlane.xlu0 %3541
      %v3543 = vadd.f32 %v3490, %v3492
      %3544 = vadd.xlane.f32.xlu0 %v3543
      %v3545 = vpop.xlane.xlu0 %3544
      %v3546 = vadd.f32 %v3496, %v3498
      %3547 = vadd.xlane.f32.xlu0 %v3546
      %v3548 = vpop.xlane.xlu0 %3547
      %v3549 = vadd.f32 %v3500, %v3502
      %3550 = vadd.xlane.f32.xlu0 %v3549
      %v3551 = vpop.xlane.xlu0 %3550
      %v3552 = vadd.f32 %v3506, %v3508
      %3553 = vadd.xlane.f32.xlu0 %v3552
      %v3554 = vpop.xlane.xlu0 %3553
      %v3555 = vadd.f32 %v3510, %v3512
      %3556 = vadd.xlane.f32.xlu0 %v3555
      %v3557 = vpop.xlane.xlu0 %3556
      %v3558 = vsel %vm1226, %v3516, 0.0
      %v3559 = vsel %vm1226, %v3518, 0.0
      %v3560 = vadd.f32 %v3558, %v3559
      %3561 = vadd.xlane.f32.xlu0 %v3560
      %v3562 = vpop.xlane.xlu0 %3561
      %v3563 = vmul.f32 %v3456, %v3456
      %v3564 = vmul.f32 %v3458, %v3458
      %v3565 = vmul.f32 %v3460, %v3460
      %v3566 = vmul.f32 %v3462, %v3462
      %v3567 = vmul.f32 %v3466, %v3466
      %v3568 = vmul.f32 %v3468, %v3468
      %v3569 = vmul.f32 %v3470, %v3470
      %v3570 = vmul.f32 %v3472, %v3472
      %v3571 = vmul.f32 %v3476, %v3476
      %v3572 = vmul.f32 %v3478, %v3478
      %v3573 = vmul.f32 %v3480, %v3480
      %v3574 = vmul.f32 %v3482, %v3482
      %v3575 = vmul.f32 %v3486, %v3486
      %v3576 = vmul.f32 %v3488, %v3488
      %v3577 = vmul.f32 %v3490, %v3490
      %v3578 = vmul.f32 %v3492, %v3492
      %v3579 = vmul.f32 %v3496, %v3496
      %v3580 = vmul.f32 %v3498, %v3498
      %v3581 = vmul.f32 %v3500, %v3500
      %v3582 = vmul.f32 %v3502, %v3502
      %v3583 = vmul.f32 %v3506, %v3506
      %v3584 = vmul.f32 %v3508, %v3508
      %v3585 = vmul.f32 %v3510, %v3510
      %v3586 = vmul.f32 %v3512, %v3512
      %v3587 = vmul.f32 %v3516, %v3516
      %v3588 = vmul.f32 %v3518, %v3518
      %v3589 = vadd.f32 %v3563, %v3564
      %3590 = vadd.xlane.f32.xlu0 %v3589
      %v3591 = vpop.xlane.xlu0 %3590
      %v3592 = vadd.f32 %v3565, %v3566
      %3593 = vadd.xlane.f32.xlu0 %v3592
      %v3594 = vpop.xlane.xlu0 %3593
      %v3595 = vadd.f32 %v3567, %v3568
      %3596 = vadd.xlane.f32.xlu0 %v3595
      %v3597 = vpop.xlane.xlu0 %3596
      %v3598 = vadd.f32 %v3569, %v3570
      %3599 = vadd.xlane.f32.xlu0 %v3598
      %v3600 = vpop.xlane.xlu0 %3599
      %v3601 = vadd.f32 %v3571, %v3572
      %3602 = vadd.xlane.f32.xlu0 %v3601
      %v3603 = vpop.xlane.xlu0 %3602
      %v3604 = vadd.f32 %v3573, %v3574
      %3605 = vadd.xlane.f32.xlu0 %v3604
      %v3606 = vpop.xlane.xlu0 %3605
      %v3607 = vadd.f32 %v3575, %v3576
      %3608 = vadd.xlane.f32.xlu0 %v3607
      %v3609 = vpop.xlane.xlu0 %3608
      %v3610 = vadd.f32 %v3577, %v3578
      %3611 = vadd.xlane.f32.xlu0 %v3610
      %v3612 = vpop.xlane.xlu0 %3611
      %v3613 = vadd.f32 %v3579, %v3580
      %3614 = vadd.xlane.f32.xlu0 %v3613
      %v3615 = vpop.xlane.xlu0 %3614
      %v3616 = vadd.f32 %v3581, %v3582
      %3617 = vadd.xlane.f32.xlu0 %v3616
      %v3618 = vpop.xlane.xlu0 %3617
      %v3619 = vadd.f32 %v3583, %v3584
      %3620 = vadd.xlane.f32.xlu0 %v3619
      %v3621 = vpop.xlane.xlu0 %3620
      %v3622 = vadd.f32 %v3585, %v3586
      %3623 = vadd.xlane.f32.xlu0 %v3622
      %v3624 = vpop.xlane.xlu0 %3623
      %v3625 = vsel %vm1226, %v3587, 0.0
      %v3626 = vsel %vm1226, %v3588, 0.0
      %v3627 = vadd.f32 %v3625, %v3626
      %3628 = vadd.xlane.f32.xlu0 %v3627
      %v3629 = vpop.xlane.xlu0 %3628
      %v3630 = vmul.f32 %v3524, 0.00390625
      %v3631 = vmul.f32 %v3527, 0.00390625
      %v3632 = vmul.f32 %v3530, 0.00390625
      %v3633 = vmul.f32 %v3533, 0.00390625
      %v3634 = vmul.f32 %v3536, 0.00390625
      %v3635 = vmul.f32 %v3539, 0.00390625
      %v3636 = vmul.f32 %v3542, 0.00390625
      %v3637 = vmul.f32 %v3545, 0.00390625
      %v3638 = vmul.f32 %v3548, 0.00390625
      %v3639 = vmul.f32 %v3551, 0.00390625
      %v3640 = vmul.f32 %v3554, 0.00390625
      %v3641 = vmul.f32 %v3557, 0.00390625
      %v3642 = vmul.f32 %v3562, 0.00390625
      %v3643 = vmul.f32 %v3591, 0.00390625
      %v3644 = vmul.f32 %v3594, 0.00390625
      %v3645 = vmul.f32 %v3597, 0.00390625
      %v3646 = vmul.f32 %v3600, 0.00390625
      %v3647 = vmul.f32 %v3603, 0.00390625
      %v3648 = vmul.f32 %v3606, 0.00390625
      %v3649 = vmul.f32 %v3609, 0.00390625
      %v3650 = vmul.f32 %v3612, 0.00390625
      %v3651 = vmul.f32 %v3615, 0.00390625
      %v3652 = vmul.f32 %v3618, 0.00390625
      %v3653 = vmul.f32 %v3621, 0.00390625
      %v3654 = vmul.f32 %v3624, 0.00390625
      %v3655 = vmul.f32 %v3629, 0.00390625
      %v3656 = vmul.f32 %v3630, %v3630
      %v3657 = vmul.f32 %v3631, %v3631
      %v3658 = vmul.f32 %v3632, %v3632
      %v3659 = vmul.f32 %v3633, %v3633
      %v3660 = vmul.f32 %v3634, %v3634
      %v3661 = vmul.f32 %v3635, %v3635
      %v3662 = vmul.f32 %v3636, %v3636
      %v3663 = vmul.f32 %v3637, %v3637
      %v3664 = vmul.f32 %v3638, %v3638
      %v3665 = vmul.f32 %v3639, %v3639
      %v3666 = vmul.f32 %v3640, %v3640
      %v3667 = vmul.f32 %v3641, %v3641
      %v3668 = vmul.f32 %v3642, %v3642
      %v3669 = vsub.f32 %v3643, %v3656
      %v3670 = vsub.f32 %v3644, %v3657
      %v3671 = vsub.f32 %v3645, %v3658
      %v3672 = vsub.f32 %v3646, %v3659
      %v3673 = vsub.f32 %v3647, %v3660
      %v3674 = vsub.f32 %v3648, %v3661
      %v3675 = vsub.f32 %v3649, %v3662
      %v3676 = vsub.f32 %v3650, %v3663
      %v3677 = vsub.f32 %v3651, %v3664
      %v3678 = vsub.f32 %v3652, %v3665
      %v3679 = vsub.f32 %v3653, %v3666
      %v3680 = vsub.f32 %v3654, %v3667
      %v3681 = vsub.f32 %v3655, %v3668
      %v3682 = vadd.f32 %v3669, 1e-05
      %v3683 = vadd.f32 %v3670, 1e-05
      %v3684 = vadd.f32 %v3671, 1e-05
      %v3685 = vadd.f32 %v3672, 1e-05
      %v3686 = vadd.f32 %v3673, 1e-05
      %v3687 = vadd.f32 %v3674, 1e-05
      %v3688 = vadd.f32 %v3675, 1e-05
      %v3689 = vadd.f32 %v3676, 1e-05
      %v3690 = vadd.f32 %v3677, 1e-05
      %v3691 = vadd.f32 %v3678, 1e-05
      %v3692 = vadd.f32 %v3679, 1e-05
      %v3693 = vadd.f32 %v3680, 1e-05
      %v3694 = vadd.f32 %v3681, 1e-05
      %v3695 = vrsqrt.pop %v3682
      %v3696 = vrsqrt.pop %v3683
      %v3697 = vrsqrt.pop %v3684
      %v3698 = vrsqrt.pop %v3685
      %v3699 = vrsqrt.pop %v3686
      %v3700 = vrsqrt.pop %v3687
      %v3701 = vrsqrt.pop %v3688
      %v3702 = vrsqrt.pop %v3689
      %v3703 = vrsqrt.pop %v3690
      %v3704 = vrsqrt.pop %v3691
      %v3705 = vrsqrt.pop %v3692
      %v3706 = vrsqrt.pop %v3693
      %v3707 = vrsqrt.pop %v3694
      %v3708 = vsub.f32 %v3456, %v3630
      %v3709 = vsub.f32 %v3458, %v3630
      %v3710 = vsub.f32 %v3460, %v3631
      %v3711 = vsub.f32 %v3462, %v3631
      %v3712 = vsub.f32 %v3466, %v3632
      %v3713 = vsub.f32 %v3468, %v3632
      %v3714 = vsub.f32 %v3470, %v3633
      %v3715 = vsub.f32 %v3472, %v3633
      %v3716 = vsub.f32 %v3476, %v3634
      %v3717 = vsub.f32 %v3478, %v3634
      %v3718 = vsub.f32 %v3480, %v3635
      %v3719 = vsub.f32 %v3482, %v3635
      %v3720 = vsub.f32 %v3486, %v3636
      %v3721 = vsub.f32 %v3488, %v3636
      %v3722 = vsub.f32 %v3490, %v3637
      %v3723 = vsub.f32 %v3492, %v3637
      %v3724 = vsub.f32 %v3496, %v3638
      %v3725 = vsub.f32 %v3498, %v3638
      %v3726 = vsub.f32 %v3500, %v3639
      %v3727 = vsub.f32 %v3502, %v3639
      %v3728 = vsub.f32 %v3506, %v3640
      %v3729 = vsub.f32 %v3508, %v3640
      %v3730 = vsub.f32 %v3510, %v3641
      %v3731 = vsub.f32 %v3512, %v3641
      %v3732 = vsub.f32 %v3516, %v3642
      %v3733 = vsub.f32 %v3518, %v3642
      %v3734 = vmul.f32 %v3708, %v3695
      %v3735 = vmul.f32 %v3709, %v3695
      %v3736 = vmul.f32 %v3710, %v3696
      %v3737 = vmul.f32 %v3711, %v3696
      %v3738 = vmul.f32 %v3712, %v3697
      %v3739 = vmul.f32 %v3713, %v3697
      %v3740 = vmul.f32 %v3714, %v3698
      %v3741 = vmul.f32 %v3715, %v3698
      %v3742 = vmul.f32 %v3716, %v3699
      %v3743 = vmul.f32 %v3717, %v3699
      %v3744 = vmul.f32 %v3718, %v3700
      %v3745 = vmul.f32 %v3719, %v3700
      %v3746 = vmul.f32 %v3720, %v3701
      %v3747 = vmul.f32 %v3721, %v3701
      %v3748 = vmul.f32 %v3722, %v3702
      %v3749 = vmul.f32 %v3723, %v3702
      %v3750 = vmul.f32 %v3724, %v3703
      %v3751 = vmul.f32 %v3725, %v3703
      %v3752 = vmul.f32 %v3726, %v3704
      %v3753 = vmul.f32 %v3727, %v3704
      %v3754 = vmul.f32 %v3728, %v3705
      %v3755 = vmul.f32 %v3729, %v3705
      %v3756 = vmul.f32 %v3730, %v3706
      %v3757 = vmul.f32 %v3731, %v3706
      %v3758 = vmul.f32 %v3732, %v3707
      %v3759 = vmul.f32 %v3733, %v3707
      %v3760 = vmul.f32 %v3734, %v1433
      %v3761 = vmul.f32 %v3735, %v1437
      %v3762 = vmul.f32 %v3736, %v1433
      %v3763 = vmul.f32 %v3737, %v1437
      %v3764 = vmul.f32 %v3738, %v1433
      %v3765 = vmul.f32 %v3739, %v1437
      %v3766 = vmul.f32 %v3740, %v1433
      %v3767 = vmul.f32 %v3741, %v1437
      %v3768 = vmul.f32 %v3742, %v1433
      %v3769 = vmul.f32 %v3743, %v1437
      %v3770 = vmul.f32 %v3744, %v1433
      %v3771 = vmul.f32 %v3745, %v1437
      %v3772 = vmul.f32 %v3746, %v1433
      %v3773 = vmul.f32 %v3747, %v1437
      %v3774 = vmul.f32 %v3748, %v1433
      %v3775 = vmul.f32 %v3749, %v1437
      %v3776 = vmul.f32 %v3750, %v1433
      %v3777 = vmul.f32 %v3751, %v1437
      %v3778 = vmul.f32 %v3752, %v1433
      %v3779 = vmul.f32 %v3753, %v1437
      %v3780 = vmul.f32 %v3754, %v1433
      %v3781 = vmul.f32 %v3755, %v1437
      %v3782 = vmul.f32 %v3756, %v1433
      %v3783 = vmul.f32 %v3757, %v1437
      %v3784 = vmul.f32 %v3758, %v1433
      %v3785 = vmul.f32 %v3759, %v1437
      %v3786 = vadd.f32 %v3760, %v1470
      %v3787 = vadd.f32 %v3761, %v1474
      %v3788 = vadd.f32 %v3762, %v1470
      %v3789 = vadd.f32 %v3763, %v1474
      %v3790 = vadd.f32 %v3764, %v1470
      %v3791 = vadd.f32 %v3765, %v1474
      %v3792 = vadd.f32 %v3766, %v1470
      %v3793 = vadd.f32 %v3767, %v1474
      %v3794 = vadd.f32 %v3768, %v1470
      %v3795 = vadd.f32 %v3769, %v1474
      %v3796 = vadd.f32 %v3770, %v1470
      %v3797 = vadd.f32 %v3771, %v1474
      %v3798 = vadd.f32 %v3772, %v1470
      %v3799 = vadd.f32 %v3773, %v1474
      %v3800 = vadd.f32 %v3774, %v1470
      %v3801 = vadd.f32 %v3775, %v1474
      %v3802 = vadd.f32 %v3776, %v1470
      %v3803 = vadd.f32 %v3777, %v1474
      %v3804 = vadd.f32 %v3778, %v1470
      %v3805 = vadd.f32 %v3779, %v1474
      %v3806 = vadd.f32 %v3780, %v1470
      %v3807 = vadd.f32 %v3781, %v1474
      %v3808 = vadd.f32 %v3782, %v1470
      %v3809 = vadd.f32 %v3783, %v1474
      %v3810 = vadd.f32 %v3784, %v1470
      %v3811 = vadd.f32 %v3785, %v1474
      %s3812 = scalar_lea.vmem %s283, 416
      %3813 = vst [vmem:[%s3812] sm:$0xff] %v3786
      %3814 = vst [vmem:[%s3812 + $0x8] sm:$0xff] %v3787
      %3815 = vst [vmem:[%s3812 + $0x10] sm:$0xff] %v3788
      %3816 = vst [vmem:[%s3812 + $0x18] sm:$0xff] %v3789
      %3817 = vst [vmem:[%s3812 + $0x20] sm:$0xff] %v3790
      %3818 = vst [vmem:[%s3812 + $0x28] sm:$0xff] %v3791
      %3819 = vst [vmem:[%s3812 + $0x30] sm:$0xff] %v3792
      %3820 = vst [vmem:[%s3812 + $0x38] sm:$0xff] %v3793
      %3821 = vst [vmem:[%s3812 + $0x40] sm:$0xff] %v3794
      %3822 = vst [vmem:[%s3812 + $0x48] sm:$0xff] %v3795
      %3823 = vst [vmem:[%s3812 + $0x50] sm:$0xff] %v3796
      %3824 = vst [vmem:[%s3812 + $0x58] sm:$0xff] %v3797
      %3825 = vst [vmem:[%s3812 + $0x60] sm:$0xff] %v3798
      %3826 = vst [vmem:[%s3812 + $0x68] sm:$0xff] %v3799
      %3827 = vst [vmem:[%s3812 + $0x70] sm:$0xff] %v3800
      %3828 = vst [vmem:[%s3812 + $0x78] sm:$0xff] %v3801
      %3829 = vst [vmem:[%s3812 + $0x80] sm:$0xff] %v3802
      %3830 = vst [vmem:[%s3812 + $0x88] sm:$0xff] %v3803
      %3831 = vst [vmem:[%s3812 + $0x90] sm:$0xff] %v3804
      %3832 = vst [vmem:[%s3812 + $0x98] sm:$0xff] %v3805
      %3833 = vst [vmem:[%s3812 + $0xa0] sm:$0xff] %v3806
      %3834 = vst [vmem:[%s3812 + $0xa8] sm:$0xff] %v3807
      %3835 = vst [vmem:[%s3812 + $0xb0] sm:$0xff] %v3808
      %3836 = vst [vmem:[%s3812 + $0xb8] sm:$0xff] %v3809
      %3837 = vst [vmem:[%s3812 + $0xc0] sm:$0xf] %v3810
      %3838 = vst [vmem:[%s3812 + $0xc8] sm:$0xf] %v3811
      %s3839 = scalar_lea.vmem %s269, 624
      %v3840 = vld [vmem:[%s3839] sm:$0xff]
      %v3841 = vld [vmem:[%s3839 + $0x8] sm:$0xff]
      %v3842 = vld [vmem:[%s3839 + $0x10] sm:$0xff]
      %v3843 = vld [vmem:[%s3839 + $0x18] sm:$0xff]
      %v3844 = vld [vmem:[%s3839 + $0x20] sm:$0xff]
      %v3845 = vld [vmem:[%s3839 + $0x28] sm:$0xff]
      %v3846 = vld [vmem:[%s3839 + $0x30] sm:$0xff]
      %v3847 = vld [vmem:[%s3839 + $0x38] sm:$0xff]
      %v3848 = vld [vmem:[%s3839 + $0x40] sm:$0xff]
      %v3849 = vld [vmem:[%s3839 + $0x48] sm:$0xff]
      %v3850 = vld [vmem:[%s3839 + $0x50] sm:$0xff]
      %v3851 = vld [vmem:[%s3839 + $0x58] sm:$0xff]
      %v3852 = vld [vmem:[%s3839 + $0x60] sm:$0xff]
      %v3853 = vld [vmem:[%s3839 + $0x68] sm:$0xff]
      %v3854 = vld [vmem:[%s3839 + $0x70] sm:$0xff]
      %v3855 = vld [vmem:[%s3839 + $0x78] sm:$0xff]
      %v3856 = vld [vmem:[%s3839 + $0x80] sm:$0xff]
      %v3857 = vld [vmem:[%s3839 + $0x88] sm:$0xff]
      %v3858 = vld [vmem:[%s3839 + $0x90] sm:$0xff]
      %v3859 = vld [vmem:[%s3839 + $0x98] sm:$0xff]
      %v3860 = vld [vmem:[%s3839 + $0xa0] sm:$0xff]
      %v3861 = vld [vmem:[%s3839 + $0xa8] sm:$0xff]
      %v3862 = vld [vmem:[%s3839 + $0xb0] sm:$0xff]
      %v3863 = vld [vmem:[%s3839 + $0xb8] sm:$0xff]
      %v3864 = vld [vmem:[%s3839 + $0xc0] sm:$0xf]
      %v3865 = vld [vmem:[%s3839 + $0xc8] sm:$0xf]
      %v3866 = vpack.c.bf16 %v3842, %v3840
      %v3867 = vpack.c.bf16 %v3843, %v3841
      %v3868 = vpack.c.bf16 %v3846, %v3844
      %v3869 = vpack.c.bf16 %v3847, %v3845
      %v3870 = vpack.c.bf16 %v3850, %v3848
      %v3871 = vpack.c.bf16 %v3851, %v3849
      %v3872 = vpack.c.bf16 %v3854, %v3852
      %v3873 = vpack.c.bf16 %v3855, %v3853
      %v3874 = vpack.c.bf16 %v3858, %v3856
      %v3875 = vpack.c.bf16 %v3859, %v3857
      %v3876 = vpack.c.bf16 %v3862, %v3860
      %v3877 = vpack.c.bf16 %v3863, %v3861
      %v3878 = vpack.c.bf16 %v3864, %v3864
      %v3879 = vpack.c.bf16 %v3865, %v3865
      %3880 = vmatprep.subr.bf16.mxu0 0
      %3881 = vmatpush1.bf16.msra.mxu0 %v325
      %3882 = vmatprep.subr.bf16.mxu0 0
      %3883 = vmatpush1.bf16.msra.mxu0 %v324
      %3884 = vmatprep.subr.bf16.mxu0 0
      %3885 = vmatpush1.bf16.msra.mxu0 %v323
      %3886 = vmatprep.subr.bf16.mxu0 0
      %3887 = vmatpush1.bf16.msra.mxu0 %v322
      %3888 = vmatprep.subr.bf16.mxu0 0
      %3889 = vmatpush1.bf16.msra.mxu0 %v321
      %3890 = vmatprep.subr.bf16.mxu0 0
      %3891 = vmatpush1.bf16.msra.mxu0 %v320
      %3892 = vmatprep.subr.bf16.mxu0 0
      %3893 = vmatpush1.bf16.msra.mxu0 %v319
      %3894 = vmatprep.subr.bf16.mxu0 0
      %3895 = vmatpush1.bf16.msra.mxu0 %v318
      %3896 = vmatprep.subr.bf16.mxu0 0
      %3897 = vmatpush2.bf16.msra.mxu0 %v333
      %3898 = vmatprep.subr.bf16.mxu0 0
      %3899 = vmatpush2.bf16.msra.mxu0 %v332
      %3900 = vmatprep.subr.bf16.mxu0 0
      %3901 = vmatpush2.bf16.msra.mxu0 %v331
      %3902 = vmatprep.subr.bf16.mxu0 0
      %3903 = vmatpush2.bf16.msra.mxu0 %v330
      %3904 = vmatprep.subr.bf16.mxu0 0
      %3905 = vmatpush2.bf16.msra.mxu0 %v329
      %3906 = vmatprep.subr.bf16.mxu0 0
      %3907 = vmatpush2.bf16.msra.mxu0 %v328
      %3908 = vmatprep.subr.bf16.mxu0 0
      %3909 = vmatpush2.bf16.msra.mxu0 %v327
      %3910 = vmatprep.subr.bf16.mxu0 0
      %3911 = vmatpush2.bf16.msra.mxu0 %v326
      %3912 = vmatprep.mubr.bf16.mxu0 %v3867
      %3913 = vmatmul.mubr.bf16.gmra.mxu0 %v3866
      %v3914 = vpop.f32.mrf.mxu0
      %v3915 = vadd.f32 %v388, %v3914
      %v3916 = vpop.f32.mrf.mxu0
      %v3917 = vpop.f32.mrf.mxu0
      %v3918 = vadd.f32 %v388, %v3917
      %v3919 = vpop.f32.mrf.mxu0
      %3920 = vmatprep.mubr.bf16.mxu0 %v3869
      %3921 = vmatmul.mubr.bf16.gmra.mxu0 %v3868
      %v3922 = vpop.f32.mrf.mxu0
      %v3923 = vadd.f32 %v388, %v3922
      %v3924 = vpop.f32.mrf.mxu0
      %v3925 = vpop.f32.mrf.mxu0
      %v3926 = vadd.f32 %v388, %v3925
      %v3927 = vpop.f32.mrf.mxu0
      %3928 = vmatprep.mubr.bf16.mxu0 %v3871
      %3929 = vmatmul.mubr.bf16.gmra.mxu0 %v3870
      %v3930 = vpop.f32.mrf.mxu0
      %v3931 = vadd.f32 %v388, %v3930
      %v3932 = vpop.f32.mrf.mxu0
      %v3933 = vpop.f32.mrf.mxu0
      %v3934 = vadd.f32 %v388, %v3933
      %v3935 = vpop.f32.mrf.mxu0
      %3936 = vmatprep.mubr.bf16.mxu0 %v3873
      %3937 = vmatmul.mubr.bf16.gmra.mxu0 %v3872
      %v3938 = vpop.f32.mrf.mxu0
      %v3939 = vadd.f32 %v388, %v3938
      %v3940 = vpop.f32.mrf.mxu0
      %v3941 = vpop.f32.mrf.mxu0
      %v3942 = vadd.f32 %v388, %v3941
      %v3943 = vpop.f32.mrf.mxu0
      %3944 = vmatprep.mubr.bf16.mxu0 %v3875
      %3945 = vmatmul.mubr.bf16.gmra.mxu0 %v3874
      %v3946 = vpop.f32.mrf.mxu0
      %v3947 = vadd.f32 %v388, %v3946
      %v3948 = vpop.f32.mrf.mxu0
      %v3949 = vpop.f32.mrf.mxu0
      %v3950 = vadd.f32 %v388, %v3949
      %v3951 = vpop.f32.mrf.mxu0
      %3952 = vmatprep.mubr.bf16.mxu0 %v3877
      %3953 = vmatmul.mubr.bf16.gmra.mxu0 %v3876
      %v3954 = vpop.f32.mrf.mxu0
      %v3955 = vadd.f32 %v388, %v3954
      %v3956 = vpop.f32.mrf.mxu0
      %v3957 = vpop.f32.mrf.mxu0
      %v3958 = vadd.f32 %v388, %v3957
      %v3959 = vpop.f32.mrf.mxu0
      %3960 = vmatprep.mubr.bf16.mxu0 %v3879
      %3961 = vmatmul.mubr.bf16.gmra.mxu0 %v3878
      %v3962 = vpop.f32.mrf.mxu0
      %v3963 = vadd.f32 %v388, %v3962
      %v3964 = vpop.f32.mrf.mxu0
      %v3965 = vpop.f32.mrf.mxu0
      %v3966 = vpop.f32.mrf.mxu0
      %3967 = vdwg.mxu0
      %s3968 = scalar_lea.vmem %s276, 624
      %v3969 = vld [vmem:[%s3968] sm:$0xff]
      %v3970 = vld [vmem:[%s3968 + $0x8] sm:$0xff]
      %v3971 = vld [vmem:[%s3968 + $0x10] sm:$0xff]
      %v3972 = vld [vmem:[%s3968 + $0x18] sm:$0xff]
      %v3973 = vld [vmem:[%s3968 + $0x20] sm:$0xff]
      %v3974 = vld [vmem:[%s3968 + $0x28] sm:$0xff]
      %v3975 = vld [vmem:[%s3968 + $0x30] sm:$0xff]
      %v3976 = vld [vmem:[%s3968 + $0x38] sm:$0xff]
      %v3977 = vld [vmem:[%s3968 + $0x40] sm:$0xff]
      %v3978 = vld [vmem:[%s3968 + $0x48] sm:$0xff]
      %v3979 = vld [vmem:[%s3968 + $0x50] sm:$0xff]
      %v3980 = vld [vmem:[%s3968 + $0x58] sm:$0xff]
      %v3981 = vld [vmem:[%s3968 + $0x60] sm:$0xff]
      %v3982 = vld [vmem:[%s3968 + $0x68] sm:$0xff]
      %v3983 = vld [vmem:[%s3968 + $0x70] sm:$0xff]
      %v3984 = vld [vmem:[%s3968 + $0x78] sm:$0xff]
      %v3985 = vld [vmem:[%s3968 + $0x80] sm:$0xff]
      %v3986 = vld [vmem:[%s3968 + $0x88] sm:$0xff]
      %v3987 = vld [vmem:[%s3968 + $0x90] sm:$0xff]
      %v3988 = vld [vmem:[%s3968 + $0x98] sm:$0xff]
      %v3989 = vld [vmem:[%s3968 + $0xa0] sm:$0xff]
      %v3990 = vld [vmem:[%s3968 + $0xa8] sm:$0xff]
      %v3991 = vld [vmem:[%s3968 + $0xb0] sm:$0xff]
      %v3992 = vld [vmem:[%s3968 + $0xb8] sm:$0xff]
      %v3993 = vld [vmem:[%s3968 + $0xc0] sm:$0xf]
      %v3994 = vld [vmem:[%s3968 + $0xc8] sm:$0xf]
      %3995 = vrot.lane.b32.xlu0 %v3969, 1
      %v3996 = vpop.permute.xlu0 %3995
      %3997 = vrot.lane.b32.xlu0 %v3971, 1
      %v3998 = vpop.permute.xlu0 %3997
      %3999 = vrot.lane.b32.xlu0 %v3973, 1
      %v4000 = vpop.permute.xlu0 %3999
      %4001 = vrot.lane.b32.xlu0 %v3975, 1
      %v4002 = vpop.permute.xlu0 %4001
      %4003 = vrot.lane.b32.xlu0 %v3977, 1
      %v4004 = vpop.permute.xlu0 %4003
      %4005 = vrot.lane.b32.xlu0 %v3979, 1
      %v4006 = vpop.permute.xlu0 %4005
      %4007 = vrot.lane.b32.xlu0 %v3981, 1
      %v4008 = vpop.permute.xlu0 %4007
      %4009 = vrot.lane.b32.xlu0 %v3983, 1
      %v4010 = vpop.permute.xlu0 %4009
      %4011 = vrot.lane.b32.xlu0 %v3985, 1
      %v4012 = vpop.permute.xlu0 %4011
      %4013 = vrot.lane.b32.xlu0 %v3987, 1
      %v4014 = vpop.permute.xlu0 %4013
      %4015 = vrot.lane.b32.xlu0 %v3989, 1
      %v4016 = vpop.permute.xlu0 %4015
      %4017 = vrot.lane.b32.xlu0 %v3991, 1
      %v4018 = vpop.permute.xlu0 %4017
      %4019 = vrot.lane.b32.xlu0 %v3993, 1
      %v4020 = vpop.permute.xlu0 %4019
      %4021 = vrot.lane.b32.xlu0 %v3970, 1
      %v4022 = vpop.permute.xlu0 %4021
      %4023 = vrot.lane.b32.xlu0 %v3972, 1
      %v4024 = vpop.permute.xlu0 %4023
      %4025 = vrot.lane.b32.xlu0 %v3974, 1
      %v4026 = vpop.permute.xlu0 %4025
      %4027 = vrot.lane.b32.xlu0 %v3976, 1
      %v4028 = vpop.permute.xlu0 %4027
      %4029 = vrot.lane.b32.xlu0 %v3978, 1
      %v4030 = vpop.permute.xlu0 %4029
      %4031 = vrot.lane.b32.xlu0 %v3980, 1
      %v4032 = vpop.permute.xlu0 %4031
      %4033 = vrot.lane.b32.xlu0 %v3982, 1
      %v4034 = vpop.permute.xlu0 %4033
      %4035 = vrot.lane.b32.xlu0 %v3984, 1
      %v4036 = vpop.permute.xlu0 %4035
      %4037 = vrot.lane.b32.xlu0 %v3986, 1
      %v4038 = vpop.permute.xlu0 %4037
      %4039 = vrot.lane.b32.xlu0 %v3988, 1
      %v4040 = vpop.permute.xlu0 %4039
      %4041 = vrot.lane.b32.xlu0 %v3990, 1
      %v4042 = vpop.permute.xlu0 %4041
      %4043 = vrot.lane.b32.xlu0 %v3992, 1
      %v4044 = vpop.permute.xlu0 %4043
      %4045 = vrot.lane.b32.xlu0 %v3994, 1
      %v4046 = vpop.permute.xlu0 %4045
      %v4047 = vsel %vm556, %v3996, %v4022
      %v4048 = vsel %vm556, %v3998, %v4024
      %v4049 = vsel %vm556, %v4000, %v4026
      %v4050 = vsel %vm556, %v4002, %v4028
      %v4051 = vsel %vm556, %v4004, %v4030
      %v4052 = vsel %vm556, %v4006, %v4032
      %v4053 = vsel %vm556, %v4008, %v4034
      %v4054 = vsel %vm556, %v4010, %v4036
      %v4055 = vsel %vm556, %v4012, %v4038
      %v4056 = vsel %vm556, %v4014, %v4040
      %v4057 = vsel %vm556, %v4016, %v4042
      %v4058 = vsel %vm556, %v4018, %v4044
      %v4059 = vsel %vm556, %v4020, %v4046
      %v4060 = vsel %vm556, %v4022, %v3996
      %v4061 = vsel %vm556, %v4024, %v3998
      %v4062 = vsel %vm556, %v4026, %v4000
      %v4063 = vsel %vm556, %v4028, %v4002
      %v4064 = vsel %vm556, %v4030, %v4004
      %v4065 = vsel %vm556, %v4032, %v4006
      %v4066 = vsel %vm556, %v4034, %v4008
      %v4067 = vsel %vm556, %v4036, %v4010
      %v4068 = vsel %vm556, %v4038, %v4012
      %v4069 = vsel %vm556, %v4040, %v4014
      %v4070 = vsel %vm556, %v4042, %v4016
      %v4071 = vsel %vm556, %v4044, %v4018
      %v4072 = vsel %vm556, %v4046, %v4020
      %v4073 = vsel %vm340, %v4060, 0.0
      %v4074 = vsel %vm341, %v4047, 0.0
      %v4075 = vsel %vm340, %v4061, 0.0
      %v4076 = vsel %vm341, %v4048, 0.0
      %v4077 = vsel %vm340, %v4062, 0.0
      %v4078 = vsel %vm341, %v4049, 0.0
      %v4079 = vsel %vm340, %v4063, 0.0
      %v4080 = vsel %vm341, %v4050, 0.0
      %v4081 = vsel %vm340, %v4064, 0.0
      %v4082 = vsel %vm341, %v4051, 0.0
      %v4083 = vsel %vm340, %v4065, 0.0
      %v4084 = vsel %vm341, %v4052, 0.0
      %v4085 = vsel %vm340, %v4066, 0.0
      %v4086 = vsel %vm341, %v4053, 0.0
      %v4087 = vsel %vm340, %v4067, 0.0
      %v4088 = vsel %vm341, %v4054, 0.0
      %v4089 = vsel %vm340, %v4068, 0.0
      %v4090 = vsel %vm341, %v4055, 0.0
      %v4091 = vsel %vm340, %v4069, 0.0
      %v4092 = vsel %vm341, %v4056, 0.0
      %v4093 = vsel %vm340, %v4070, 0.0
      %v4094 = vsel %vm341, %v4057, 0.0
      %v4095 = vsel %vm340, %v4071, 0.0
      %v4096 = vsel %vm341, %v4058, 0.0
      %v4097 = vsel %vm340, %v4072, 0.0
      %v4098 = vsel %vm341, %v4059, 0.0
      %4099 = vrot.lane.b32.xlu0 %v3969, 127
      %v4100 = vpop.permute.xlu0 %4099
      %4101 = vrot.lane.b32.xlu0 %v3971, 127
      %v4102 = vpop.permute.xlu0 %4101
      %4103 = vrot.lane.b32.xlu0 %v3973, 127
      %v4104 = vpop.permute.xlu0 %4103
      %4105 = vrot.lane.b32.xlu0 %v3975, 127
      %v4106 = vpop.permute.xlu0 %4105
      %4107 = vrot.lane.b32.xlu0 %v3977, 127
      %v4108 = vpop.permute.xlu0 %4107
      %4109 = vrot.lane.b32.xlu0 %v3979, 127
      %v4110 = vpop.permute.xlu0 %4109
      %4111 = vrot.lane.b32.xlu0 %v3981, 127
      %v4112 = vpop.permute.xlu0 %4111
      %4113 = vrot.lane.b32.xlu0 %v3983, 127
      %v4114 = vpop.permute.xlu0 %4113
      %4115 = vrot.lane.b32.xlu0 %v3985, 127
      %v4116 = vpop.permute.xlu0 %4115
      %4117 = vrot.lane.b32.xlu0 %v3987, 127
      %v4118 = vpop.permute.xlu0 %4117
      %4119 = vrot.lane.b32.xlu0 %v3989, 127
      %v4120 = vpop.permute.xlu0 %4119
      %4121 = vrot.lane.b32.xlu0 %v3991, 127
      %v4122 = vpop.permute.xlu0 %4121
      %4123 = vrot.lane.b32.xlu0 %v3993, 127
      %v4124 = vpop.permute.xlu0 %4123
      %4125 = vrot.lane.b32.xlu0 %v3970, 127
      %v4126 = vpop.permute.xlu0 %4125
      %4127 = vrot.lane.b32.xlu0 %v3972, 127
      %v4128 = vpop.permute.xlu0 %4127
      %4129 = vrot.lane.b32.xlu0 %v3974, 127
      %v4130 = vpop.permute.xlu0 %4129
      %4131 = vrot.lane.b32.xlu0 %v3976, 127
      %v4132 = vpop.permute.xlu0 %4131
      %4133 = vrot.lane.b32.xlu0 %v3978, 127
      %v4134 = vpop.permute.xlu0 %4133
      %4135 = vrot.lane.b32.xlu0 %v3980, 127
      %v4136 = vpop.permute.xlu0 %4135
      %4137 = vrot.lane.b32.xlu0 %v3982, 127
      %v4138 = vpop.permute.xlu0 %4137
      %4139 = vrot.lane.b32.xlu0 %v3984, 127
      %v4140 = vpop.permute.xlu0 %4139
      %4141 = vrot.lane.b32.xlu0 %v3986, 127
      %v4142 = vpop.permute.xlu0 %4141
      %4143 = vrot.lane.b32.xlu0 %v3988, 127
      %v4144 = vpop.permute.xlu0 %4143
      %4145 = vrot.lane.b32.xlu0 %v3990, 127
      %v4146 = vpop.permute.xlu0 %4145
      %4147 = vrot.lane.b32.xlu0 %v3992, 127
      %v4148 = vpop.permute.xlu0 %4147
      %4149 = vrot.lane.b32.xlu0 %v3994, 127
      %v4150 = vpop.permute.xlu0 %4149
      %v4151 = vsel %vm661, %v4100, %v4126
      %v4152 = vsel %vm661, %v4102, %v4128
      %v4153 = vsel %vm661, %v4104, %v4130
      %v4154 = vsel %vm661, %v4106, %v4132
      %v4155 = vsel %vm661, %v4108, %v4134
      %v4156 = vsel %vm661, %v4110, %v4136
      %v4157 = vsel %vm661, %v4112, %v4138
      %v4158 = vsel %vm661, %v4114, %v4140
      %v4159 = vsel %vm661, %v4116, %v4142
      %v4160 = vsel %vm661, %v4118, %v4144
      %v4161 = vsel %vm661, %v4120, %v4146
      %v4162 = vsel %vm661, %v4122, %v4148
      %v4163 = vsel %vm661, %v4124, %v4150
      %v4164 = vsel %vm661, %v4126, %v4100
      %v4165 = vsel %vm661, %v4128, %v4102
      %v4166 = vsel %vm661, %v4130, %v4104
      %v4167 = vsel %vm661, %v4132, %v4106
      %v4168 = vsel %vm661, %v4134, %v4108
      %v4169 = vsel %vm661, %v4136, %v4110
      %v4170 = vsel %vm661, %v4138, %v4112
      %v4171 = vsel %vm661, %v4140, %v4114
      %v4172 = vsel %vm661, %v4142, %v4116
      %v4173 = vsel %vm661, %v4144, %v4118
      %v4174 = vsel %vm661, %v4146, %v4120
      %v4175 = vsel %vm661, %v4148, %v4122
      %v4176 = vsel %vm661, %v4150, %v4124
      %v4177 = vsel %vm342, %v4151, 0.0
      %v4178 = vsel %vm343, %v4164, 0.0
      %v4179 = vsel %vm342, %v4152, 0.0
      %v4180 = vsel %vm343, %v4165, 0.0
      %v4181 = vsel %vm342, %v4153, 0.0
      %v4182 = vsel %vm343, %v4166, 0.0
      %v4183 = vsel %vm342, %v4154, 0.0
      %v4184 = vsel %vm343, %v4167, 0.0
      %v4185 = vsel %vm342, %v4155, 0.0
      %v4186 = vsel %vm343, %v4168, 0.0
      %v4187 = vsel %vm342, %v4156, 0.0
      %v4188 = vsel %vm343, %v4169, 0.0
      %v4189 = vsel %vm342, %v4157, 0.0
      %v4190 = vsel %vm343, %v4170, 0.0
      %v4191 = vsel %vm342, %v4158, 0.0
      %v4192 = vsel %vm343, %v4171, 0.0
      %v4193 = vsel %vm342, %v4159, 0.0
      %v4194 = vsel %vm343, %v4172, 0.0
      %v4195 = vsel %vm342, %v4160, 0.0
      %v4196 = vsel %vm343, %v4173, 0.0
      %v4197 = vsel %vm342, %v4161, 0.0
      %v4198 = vsel %vm343, %v4174, 0.0
      %v4199 = vsel %vm342, %v4162, 0.0
      %v4200 = vsel %vm343, %v4175, 0.0
      %v4201 = vsel %vm342, %v4163, 0.0
      %v4202 = vsel %vm343, %v4176, 0.0
      %4204 = vset.pattern.permute.xlu0 101
      %4205 = vperm.xlu0 %4204, %v3915
      %v4206 = vpop.permute.xlu0 %4205
      %4209 = vset.pattern.permute.xlu0 101
      %4210 = vperm.xlu0 %4209, %v3918
      %v4211 = vpop.permute.xlu0 %4210
      %4214 = vset.pattern.permute.xlu0 101
      %4215 = vperm.xlu0 %4214, %v3923
      %v4216 = vpop.permute.xlu0 %4215
      %4219 = vset.pattern.permute.xlu0 101
      %4220 = vperm.xlu0 %4219, %v3926
      %v4221 = vpop.permute.xlu0 %4220
      %4224 = vset.pattern.permute.xlu0 101
      %4225 = vperm.xlu0 %4224, %v3931
      %v4226 = vpop.permute.xlu0 %4225
      %4229 = vset.pattern.permute.xlu0 101
      %4230 = vperm.xlu0 %4229, %v3934
      %v4231 = vpop.permute.xlu0 %4230
      %4234 = vset.pattern.permute.xlu0 101
      %4235 = vperm.xlu0 %4234, %v3939
      %v4236 = vpop.permute.xlu0 %4235
      %4239 = vset.pattern.permute.xlu0 101
      %4240 = vperm.xlu0 %4239, %v3942
      %v4241 = vpop.permute.xlu0 %4240
      %4244 = vset.pattern.permute.xlu0 101
      %4245 = vperm.xlu0 %4244, %v3947
      %v4246 = vpop.permute.xlu0 %4245
      %4249 = vset.pattern.permute.xlu0 101
      %4250 = vperm.xlu0 %4249, %v3950
      %v4251 = vpop.permute.xlu0 %4250
      %4254 = vset.pattern.permute.xlu0 101
      %4255 = vperm.xlu0 %4254, %v3955
      %v4256 = vpop.permute.xlu0 %4255
      %4259 = vset.pattern.permute.xlu0 101
      %4260 = vperm.xlu0 %4259, %v3958
      %v4261 = vpop.permute.xlu0 %4260
      %4264 = vset.pattern.permute.xlu0 101
      %4265 = vperm.xlu0 %4264, %v3963
      %v4266 = vpop.permute.xlu0 %4265
      %v4268 = vmul.f32 %v4206, %v3969
      %v4269 = vmul.f32 %v4206, %v3970
      %v4270 = vmul.f32 %v4211, %v3971
      %v4271 = vmul.f32 %v4211, %v3972
      %v4272 = vmul.f32 %v4216, %v3973
      %v4273 = vmul.f32 %v4216, %v3974
      %v4274 = vmul.f32 %v4221, %v3975
      %v4275 = vmul.f32 %v4221, %v3976
      %v4276 = vmul.f32 %v4226, %v3977
      %v4277 = vmul.f32 %v4226, %v3978
      %v4278 = vmul.f32 %v4231, %v3979
      %v4279 = vmul.f32 %v4231, %v3980
      %v4280 = vmul.f32 %v4236, %v3981
      %v4281 = vmul.f32 %v4236, %v3982
      %v4282 = vmul.f32 %v4241, %v3983
      %v4283 = vmul.f32 %v4241, %v3984
      %v4284 = vmul.f32 %v4246, %v3985
      %v4285 = vmul.f32 %v4246, %v3986
      %v4286 = vmul.f32 %v4251, %v3987
      %v4287 = vmul.f32 %v4251, %v3988
      %v4288 = vmul.f32 %v4256, %v3989
      %v4289 = vmul.f32 %v4256, %v3990
      %v4290 = vmul.f32 %v4261, %v3991
      %v4291 = vmul.f32 %v4261, %v3992
      %v4292 = vmul.f32 %v4266, %v3993
      %v4293 = vmul.f32 %v4266, %v3994
      %4294 = vset.pattern.permute.xlu0 100
      %4295 = vperm.xlu0 %4294, %v3915
      %v4296 = vpop.permute.xlu0 %4295
      %4298 = vset.pattern.permute.xlu0 100
      %4299 = vperm.xlu0 %4298, %v3918
      %v4300 = vpop.permute.xlu0 %4299
      %4302 = vset.pattern.permute.xlu0 100
      %4303 = vperm.xlu0 %4302, %v3923
      %v4304 = vpop.permute.xlu0 %4303
      %4306 = vset.pattern.permute.xlu0 100
      %4307 = vperm.xlu0 %4306, %v3926
      %v4308 = vpop.permute.xlu0 %4307
      %4310 = vset.pattern.permute.xlu0 100
      %4311 = vperm.xlu0 %4310, %v3931
      %v4312 = vpop.permute.xlu0 %4311
      %4314 = vset.pattern.permute.xlu0 100
      %4315 = vperm.xlu0 %4314, %v3934
      %v4316 = vpop.permute.xlu0 %4315
      %4318 = vset.pattern.permute.xlu0 100
      %4319 = vperm.xlu0 %4318, %v3939
      %v4320 = vpop.permute.xlu0 %4319
      %4322 = vset.pattern.permute.xlu0 100
      %4323 = vperm.xlu0 %4322, %v3942
      %v4324 = vpop.permute.xlu0 %4323
      %4326 = vset.pattern.permute.xlu0 100
      %4327 = vperm.xlu0 %4326, %v3947
      %v4328 = vpop.permute.xlu0 %4327
      %4330 = vset.pattern.permute.xlu0 100
      %4331 = vperm.xlu0 %4330, %v3950
      %v4332 = vpop.permute.xlu0 %4331
      %4334 = vset.pattern.permute.xlu0 100
      %4335 = vperm.xlu0 %4334, %v3955
      %v4336 = vpop.permute.xlu0 %4335
      %4338 = vset.pattern.permute.xlu0 100
      %4339 = vperm.xlu0 %4338, %v3958
      %v4340 = vpop.permute.xlu0 %4339
      %4342 = vset.pattern.permute.xlu0 100
      %4343 = vperm.xlu0 %4342, %v3963
      %v4344 = vpop.permute.xlu0 %4343
      %v4346 = vmul.f32 %v4296, %v4073
      %v4347 = vmul.f32 %v4296, %v4074
      %v4348 = vmul.f32 %v4300, %v4075
      %v4349 = vmul.f32 %v4300, %v4076
      %v4350 = vmul.f32 %v4304, %v4077
      %v4351 = vmul.f32 %v4304, %v4078
      %v4352 = vmul.f32 %v4308, %v4079
      %v4353 = vmul.f32 %v4308, %v4080
      %v4354 = vmul.f32 %v4312, %v4081
      %v4355 = vmul.f32 %v4312, %v4082
      %v4356 = vmul.f32 %v4316, %v4083
      %v4357 = vmul.f32 %v4316, %v4084
      %v4358 = vmul.f32 %v4320, %v4085
      %v4359 = vmul.f32 %v4320, %v4086
      %v4360 = vmul.f32 %v4324, %v4087
      %v4361 = vmul.f32 %v4324, %v4088
      %v4362 = vmul.f32 %v4328, %v4089
      %v4363 = vmul.f32 %v4328, %v4090
      %v4364 = vmul.f32 %v4332, %v4091
      %v4365 = vmul.f32 %v4332, %v4092
      %v4366 = vmul.f32 %v4336, %v4093
      %v4367 = vmul.f32 %v4336, %v4094
      %v4368 = vmul.f32 %v4340, %v4095
      %v4369 = vmul.f32 %v4340, %v4096
      %v4370 = vmul.f32 %v4344, %v4097
      %v4371 = vmul.f32 %v4344, %v4098
      %v4372 = vadd.f32 %v4268, %v4346
      %v4373 = vadd.f32 %v4269, %v4347
      %v4374 = vadd.f32 %v4270, %v4348
      %v4375 = vadd.f32 %v4271, %v4349
      %v4376 = vadd.f32 %v4272, %v4350
      %v4377 = vadd.f32 %v4273, %v4351
      %v4378 = vadd.f32 %v4274, %v4352
      %v4379 = vadd.f32 %v4275, %v4353
      %v4380 = vadd.f32 %v4276, %v4354
      %v4381 = vadd.f32 %v4277, %v4355
      %v4382 = vadd.f32 %v4278, %v4356
      %v4383 = vadd.f32 %v4279, %v4357
      %v4384 = vadd.f32 %v4280, %v4358
      %v4385 = vadd.f32 %v4281, %v4359
      %v4386 = vadd.f32 %v4282, %v4360
      %v4387 = vadd.f32 %v4283, %v4361
      %v4388 = vadd.f32 %v4284, %v4362
      %v4389 = vadd.f32 %v4285, %v4363
      %v4390 = vadd.f32 %v4286, %v4364
      %v4391 = vadd.f32 %v4287, %v4365
      %v4392 = vadd.f32 %v4288, %v4366
      %v4393 = vadd.f32 %v4289, %v4367
      %v4394 = vadd.f32 %v4290, %v4368
      %v4395 = vadd.f32 %v4291, %v4369
      %v4396 = vadd.f32 %v4292, %v4370
      %v4397 = vadd.f32 %v4293, %v4371
      %4398 = vset.pattern.permute.xlu0 102
      %4399 = vperm.xlu0 %4398, %v3915
      %v4400 = vpop.permute.xlu0 %4399
      %4402 = vset.pattern.permute.xlu0 102
      %4403 = vperm.xlu0 %4402, %v3918
      %v4404 = vpop.permute.xlu0 %4403
      %4406 = vset.pattern.permute.xlu0 102
      %4407 = vperm.xlu0 %4406, %v3923
      %v4408 = vpop.permute.xlu0 %4407
      %4410 = vset.pattern.permute.xlu0 102
      %4411 = vperm.xlu0 %4410, %v3926
      %v4412 = vpop.permute.xlu0 %4411
      %4414 = vset.pattern.permute.xlu0 102
      %4415 = vperm.xlu0 %4414, %v3931
      %v4416 = vpop.permute.xlu0 %4415
      %4418 = vset.pattern.permute.xlu0 102
      %4419 = vperm.xlu0 %4418, %v3934
      %v4420 = vpop.permute.xlu0 %4419
      %4422 = vset.pattern.permute.xlu0 102
      %4423 = vperm.xlu0 %4422, %v3939
      %v4424 = vpop.permute.xlu0 %4423
      %4426 = vset.pattern.permute.xlu0 102
      %4427 = vperm.xlu0 %4426, %v3942
      %v4428 = vpop.permute.xlu0 %4427
      %4430 = vset.pattern.permute.xlu0 102
      %4431 = vperm.xlu0 %4430, %v3947
      %v4432 = vpop.permute.xlu0 %4431
      %4434 = vset.pattern.permute.xlu0 102
      %4435 = vperm.xlu0 %4434, %v3950
      %v4436 = vpop.permute.xlu0 %4435
      %4438 = vset.pattern.permute.xlu0 102
      %4439 = vperm.xlu0 %4438, %v3955
      %v4440 = vpop.permute.xlu0 %4439
      %4442 = vset.pattern.permute.xlu0 102
      %4443 = vperm.xlu0 %4442, %v3958
      %v4444 = vpop.permute.xlu0 %4443
      %4446 = vset.pattern.permute.xlu0 102
      %4447 = vperm.xlu0 %4446, %v3963
      %v4448 = vpop.permute.xlu0 %4447
      %v4450 = vmul.f32 %v4400, %v4177
      %v4451 = vmul.f32 %v4400, %v4178
      %v4452 = vmul.f32 %v4404, %v4179
      %v4453 = vmul.f32 %v4404, %v4180
      %v4454 = vmul.f32 %v4408, %v4181
      %v4455 = vmul.f32 %v4408, %v4182
      %v4456 = vmul.f32 %v4412, %v4183
      %v4457 = vmul.f32 %v4412, %v4184
      %v4458 = vmul.f32 %v4416, %v4185
      %v4459 = vmul.f32 %v4416, %v4186
      %v4460 = vmul.f32 %v4420, %v4187
      %v4461 = vmul.f32 %v4420, %v4188
      %v4462 = vmul.f32 %v4424, %v4189
      %v4463 = vmul.f32 %v4424, %v4190
      %v4464 = vmul.f32 %v4428, %v4191
      %v4465 = vmul.f32 %v4428, %v4192
      %v4466 = vmul.f32 %v4432, %v4193
      %v4467 = vmul.f32 %v4432, %v4194
      %v4468 = vmul.f32 %v4436, %v4195
      %v4469 = vmul.f32 %v4436, %v4196
      %v4470 = vmul.f32 %v4440, %v4197
      %v4471 = vmul.f32 %v4440, %v4198
      %v4472 = vmul.f32 %v4444, %v4199
      %v4473 = vmul.f32 %v4444, %v4200
      %v4474 = vmul.f32 %v4448, %v4201
      %v4475 = vmul.f32 %v4448, %v4202
      %v4476 = vadd.f32 %v4372, %v4450
      %v4477 = vadd.f32 %v4373, %v4451
      %v4478 = vadd.f32 %v4374, %v4452
      %v4479 = vadd.f32 %v4375, %v4453
      %v4480 = vadd.f32 %v4376, %v4454
      %v4481 = vadd.f32 %v4377, %v4455
      %v4482 = vadd.f32 %v4378, %v4456
      %v4483 = vadd.f32 %v4379, %v4457
      %v4484 = vadd.f32 %v4380, %v4458
      %v4485 = vadd.f32 %v4381, %v4459
      %v4486 = vadd.f32 %v4382, %v4460
      %v4487 = vadd.f32 %v4383, %v4461
      %v4488 = vadd.f32 %v4384, %v4462
      %v4489 = vadd.f32 %v4385, %v4463
      %v4490 = vadd.f32 %v4386, %v4464
      %v4491 = vadd.f32 %v4387, %v4465
      %v4492 = vadd.f32 %v4388, %v4466
      %v4493 = vadd.f32 %v4389, %v4467
      %v4494 = vadd.f32 %v4390, %v4468
      %v4495 = vadd.f32 %v4391, %v4469
      %v4496 = vadd.f32 %v4392, %v4470
      %v4497 = vadd.f32 %v4393, %v4471
      %v4498 = vadd.f32 %v4394, %v4472
      %v4499 = vadd.f32 %v4395, %v4473
      %v4500 = vadd.f32 %v4396, %v4474
      %v4501 = vadd.f32 %v4397, %v4475
      %v4502 = vmax.f32 %v4476, 0.0
      %v4503 = vmax.f32 %v4477, 0.0
      %v4504 = vmax.f32 %v4478, 0.0
      %v4505 = vmax.f32 %v4479, 0.0
      %v4506 = vmax.f32 %v4480, 0.0
      %v4507 = vmax.f32 %v4481, 0.0
      %v4508 = vmax.f32 %v4482, 0.0
      %v4509 = vmax.f32 %v4483, 0.0
      %v4510 = vmax.f32 %v4484, 0.0
      %v4511 = vmax.f32 %v4485, 0.0
      %v4512 = vmax.f32 %v4486, 0.0
      %v4513 = vmax.f32 %v4487, 0.0
      %v4514 = vmax.f32 %v4488, 0.0
      %v4515 = vmax.f32 %v4489, 0.0
      %v4516 = vmax.f32 %v4490, 0.0
      %v4517 = vmax.f32 %v4491, 0.0
      %v4518 = vmax.f32 %v4492, 0.0
      %v4519 = vmax.f32 %v4493, 0.0
      %v4520 = vmax.f32 %v4494, 0.0
      %v4521 = vmax.f32 %v4495, 0.0
      %v4522 = vmax.f32 %v4496, 0.0
      %v4523 = vmax.f32 %v4497, 0.0
      %v4524 = vmax.f32 %v4498, 0.0
      %v4525 = vmax.f32 %v4499, 0.0
      %v4526 = vmax.f32 %v4500, 0.0
      %v4527 = vmax.f32 %v4501, 0.0
      %v4528 = vpack.c.bf16 %v3918, %v3915
      %v4529 = vpack.c.bf16 %v3926, %v3923
      %v4530 = vpack.c.bf16 %v3934, %v3931
      %v4531 = vpack.c.bf16 %v3942, %v3939
      %v4532 = vpack.c.bf16 %v3950, %v3947
      %v4533 = vpack.c.bf16 %v3958, %v3955
      %v4534 = vpack.c.bf16 %v3963, %v3963
      %v4535 = vpack.c.bf16 %v4504, %v4502
      %v4536 = vpack.c.bf16 %v4505, %v4503
      %v4537 = vpack.c.bf16 %v4508, %v4506
      %v4538 = vpack.c.bf16 %v4509, %v4507
      %v4539 = vpack.c.bf16 %v4512, %v4510
      %v4540 = vpack.c.bf16 %v4513, %v4511
      %v4541 = vpack.c.bf16 %v4516, %v4514
      %v4542 = vpack.c.bf16 %v4517, %v4515
      %v4543 = vpack.c.bf16 %v4520, %v4518
      %v4544 = vpack.c.bf16 %v4521, %v4519
      %v4545 = vpack.c.bf16 %v4524, %v4522
      %v4546 = vpack.c.bf16 %v4525, %v4523
      %v4547 = vpack.c.bf16 %v4526, %v4526
      %v4548 = vpack.c.bf16 %v4527, %v4527
      %v4550 = vsel %vm1060, %v4528, 0
      %v4553 = vsel %vm1060, %v4529, 0
      %v4556 = vsel %vm1060, %v4530, 0
      %v4559 = vsel %vm1060, %v4531, 0
      %v4562 = vsel %vm1060, %v4532, 0
      %v4565 = vsel %vm1060, %v4533, 0
      %v4568 = vsel %vm1060, %v4534, 0
      %v4571 = vsel %vm1082, %v4547, 0
      %v4574 = vsel %vm1082, %v4548, 0
      %4576 = vmatprep.subr.bf16.mxu0 0
      %4577 = vmatpush1.bf16.msra.mxu0 0
      %4578 = vmatprep.subr.bf16.mxu0 %v4574
      %4579 = vmatpush1.bf16.msra.mxu0 %v4571
      %4580 = vmatprep.subr.bf16.mxu0 %v4546
      %4581 = vmatpush1.bf16.msra.mxu0 %v4545
      %4582 = vmatprep.subr.bf16.mxu0 %v4544
      %4583 = vmatpush1.bf16.msra.mxu0 %v4543
      %4584 = vmatprep.subr.bf16.mxu0 %v4542
      %4585 = vmatpush1.bf16.msra.mxu0 %v4541
      %4586 = vmatprep.subr.bf16.mxu0 %v4540
      %4587 = vmatpush1.bf16.msra.mxu0 %v4539
      %4588 = vmatprep.subr.bf16.mxu0 %v4538
      %4589 = vmatpush1.bf16.msra.mxu0 %v4537
      %4590 = vmatprep.subr.bf16.mxu0 %v4536
      %4591 = vmatpush1.bf16.msra.mxu0 %v4535
      %4592 = vmatprep.subr.bf16.mxu0 0
      %4593 = vmatpush2.bf16.msra.mxu0 0
      %4594 = vmatprep.subr.bf16.mxu0 0
      %4595 = vmatpush2.bf16.msra.mxu0 0
      %4596 = vmatprep.subr.bf16.mxu0 0
      %4597 = vmatpush2.bf16.msra.mxu0 0
      %4598 = vmatprep.subr.bf16.mxu0 0
      %4599 = vmatpush2.bf16.msra.mxu0 0
      %4600 = vmatprep.subr.bf16.mxu0 0
      %4601 = vmatpush2.bf16.msra.mxu0 0
      %4602 = vmatprep.subr.bf16.mxu0 0
      %4603 = vmatpush2.bf16.msra.mxu0 0
      %4604 = vmatprep.subr.bf16.mxu0 0
      %4605 = vmatpush2.bf16.msra.mxu0 0
      %4606 = vmatprep.subr.bf16.mxu0 0
      %4607 = vmatpush2.bf16.msra.mxu0 0
      %4608 = vmatprep.mubr.bf16.mxu0 0
      %4609 = vmatmul.mubr.bf16.gmra.mxu0 %v4550
      %v4610 = vpop.f32.mrf.mxu0
      %v4611 = vadd.f32 0.0, %v4610
      %v4612 = vpop.f32.mrf.mxu0
      %v4613 = vadd.f32 0.0, %v4612
      %v4614 = vpop.f32.mrf.mxu0
      %v4615 = vadd.f32 0.0, %v4614
      %v4616 = vpop.f32.mrf.mxu0
      %v4617 = vadd.f32 0.0, %v4616
      %4618 = vmatprep.mubr.bf16.mxu0 0
      %4619 = vmatmul.mubr.bf16.gmra.mxu0 %v4553
      %v4620 = vpop.f32.mrf.mxu0
      %v4621 = vadd.f32 0.0, %v4620
      %v4622 = vpop.f32.mrf.mxu0
      %v4623 = vadd.f32 0.0, %v4622
      %v4624 = vpop.f32.mrf.mxu0
      %v4625 = vadd.f32 0.0, %v4624
      %v4626 = vpop.f32.mrf.mxu0
      %v4627 = vadd.f32 0.0, %v4626
      %4628 = vmatprep.mubr.bf16.mxu0 0
      %4629 = vmatmul.mubr.bf16.gmra.mxu0 %v4556
      %v4630 = vpop.f32.mrf.mxu0
      %v4631 = vadd.f32 0.0, %v4630
      %v4632 = vpop.f32.mrf.mxu0
      %v4633 = vadd.f32 0.0, %v4632
      %v4634 = vpop.f32.mrf.mxu0
      %v4635 = vadd.f32 0.0, %v4634
      %v4636 = vpop.f32.mrf.mxu0
      %v4637 = vadd.f32 0.0, %v4636
      %4638 = vmatprep.mubr.bf16.mxu0 0
      %4639 = vmatmul.mubr.bf16.gmra.mxu0 %v4559
      %v4640 = vpop.f32.mrf.mxu0
      %v4641 = vadd.f32 0.0, %v4640
      %v4642 = vpop.f32.mrf.mxu0
      %v4643 = vadd.f32 0.0, %v4642
      %v4644 = vpop.f32.mrf.mxu0
      %v4645 = vadd.f32 0.0, %v4644
      %v4646 = vpop.f32.mrf.mxu0
      %v4647 = vadd.f32 0.0, %v4646
      %4648 = vmatprep.mubr.bf16.mxu0 0
      %4649 = vmatmul.mubr.bf16.gmra.mxu0 %v4562
      %v4650 = vpop.f32.mrf.mxu0
      %v4651 = vadd.f32 0.0, %v4650
      %v4652 = vpop.f32.mrf.mxu0
      %v4653 = vadd.f32 0.0, %v4652
      %v4654 = vpop.f32.mrf.mxu0
      %v4655 = vadd.f32 0.0, %v4654
      %v4656 = vpop.f32.mrf.mxu0
      %v4657 = vadd.f32 0.0, %v4656
      %4658 = vmatprep.mubr.bf16.mxu0 0
      %4659 = vmatmul.mubr.bf16.gmra.mxu0 %v4565
      %v4660 = vpop.f32.mrf.mxu0
      %v4661 = vadd.f32 0.0, %v4660
      %v4662 = vpop.f32.mrf.mxu0
      %v4663 = vadd.f32 0.0, %v4662
      %v4664 = vpop.f32.mrf.mxu0
      %v4665 = vadd.f32 0.0, %v4664
      %v4666 = vpop.f32.mrf.mxu0
      %v4667 = vadd.f32 0.0, %v4666
      %4668 = vmatprep.mubr.bf16.mxu0 0
      %4669 = vmatmul.mubr.bf16.gmra.mxu0 %v4568
      %v4670 = vpop.f32.mrf.mxu0
      %v4671 = vadd.f32 0.0, %v4670
      %v4672 = vpop.f32.mrf.mxu0
      %v4673 = vadd.f32 0.0, %v4672
      %v4674 = vpop.f32.mrf.mxu0
      %v4675 = vpop.f32.mrf.mxu0
      %4676 = vdwg.mxu0
      %v4677 = vadd.f32 %v4611, %v4613
      %4678 = vadd.xlane.f32.xlu0 %v4677
      %v4679 = vpop.xlane.xlu0 %4678
      %v4680 = vadd.f32 %v4615, %v4617
      %4681 = vadd.xlane.f32.xlu0 %v4680
      %v4682 = vpop.xlane.xlu0 %4681
      %v4683 = vadd.f32 %v4621, %v4623
      %4684 = vadd.xlane.f32.xlu0 %v4683
      %v4685 = vpop.xlane.xlu0 %4684
      %v4686 = vadd.f32 %v4625, %v4627
      %4687 = vadd.xlane.f32.xlu0 %v4686
      %v4688 = vpop.xlane.xlu0 %4687
      %v4689 = vadd.f32 %v4631, %v4633
      %4690 = vadd.xlane.f32.xlu0 %v4689
      %v4691 = vpop.xlane.xlu0 %4690
      %v4692 = vadd.f32 %v4635, %v4637
      %4693 = vadd.xlane.f32.xlu0 %v4692
      %v4694 = vpop.xlane.xlu0 %4693
      %v4695 = vadd.f32 %v4641, %v4643
      %4696 = vadd.xlane.f32.xlu0 %v4695
      %v4697 = vpop.xlane.xlu0 %4696
      %v4698 = vadd.f32 %v4645, %v4647
      %4699 = vadd.xlane.f32.xlu0 %v4698
      %v4700 = vpop.xlane.xlu0 %4699
      %v4701 = vadd.f32 %v4651, %v4653
      %4702 = vadd.xlane.f32.xlu0 %v4701
      %v4703 = vpop.xlane.xlu0 %4702
      %v4704 = vadd.f32 %v4655, %v4657
      %4705 = vadd.xlane.f32.xlu0 %v4704
      %v4706 = vpop.xlane.xlu0 %4705
      %v4707 = vadd.f32 %v4661, %v4663
      %4708 = vadd.xlane.f32.xlu0 %v4707
      %v4709 = vpop.xlane.xlu0 %4708
      %v4710 = vadd.f32 %v4665, %v4667
      %4711 = vadd.xlane.f32.xlu0 %v4710
      %v4712 = vpop.xlane.xlu0 %4711
      %v4713 = vsel %vm1226, %v4671, 0.0
      %v4714 = vsel %vm1226, %v4673, 0.0
      %v4715 = vadd.f32 %v4713, %v4714
      %4716 = vadd.xlane.f32.xlu0 %v4715
      %v4717 = vpop.xlane.xlu0 %4716
      %v4718 = vmul.f32 %v4611, %v4611
      %v4719 = vmul.f32 %v4613, %v4613
      %v4720 = vmul.f32 %v4615, %v4615
      %v4721 = vmul.f32 %v4617, %v4617
      %v4722 = vmul.f32 %v4621, %v4621
      %v4723 = vmul.f32 %v4623, %v4623
      %v4724 = vmul.f32 %v4625, %v4625
      %v4725 = vmul.f32 %v4627, %v4627
      %v4726 = vmul.f32 %v4631, %v4631
      %v4727 = vmul.f32 %v4633, %v4633
      %v4728 = vmul.f32 %v4635, %v4635
      %v4729 = vmul.f32 %v4637, %v4637
      %v4730 = vmul.f32 %v4641, %v4641
      %v4731 = vmul.f32 %v4643, %v4643
      %v4732 = vmul.f32 %v4645, %v4645
      %v4733 = vmul.f32 %v4647, %v4647
      %v4734 = vmul.f32 %v4651, %v4651
      %v4735 = vmul.f32 %v4653, %v4653
      %v4736 = vmul.f32 %v4655, %v4655
      %v4737 = vmul.f32 %v4657, %v4657
      %v4738 = vmul.f32 %v4661, %v4661
      %v4739 = vmul.f32 %v4663, %v4663
      %v4740 = vmul.f32 %v4665, %v4665
      %v4741 = vmul.f32 %v4667, %v4667
      %v4742 = vmul.f32 %v4671, %v4671
      %v4743 = vmul.f32 %v4673, %v4673
      %v4744 = vadd.f32 %v4718, %v4719
      %4745 = vadd.xlane.f32.xlu0 %v4744
      %v4746 = vpop.xlane.xlu0 %4745
      %v4747 = vadd.f32 %v4720, %v4721
      %4748 = vadd.xlane.f32.xlu0 %v4747
      %v4749 = vpop.xlane.xlu0 %4748
      %v4750 = vadd.f32 %v4722, %v4723
      %4751 = vadd.xlane.f32.xlu0 %v4750
      %v4752 = vpop.xlane.xlu0 %4751
      %v4753 = vadd.f32 %v4724, %v4725
      %4754 = vadd.xlane.f32.xlu0 %v4753
      %v4755 = vpop.xlane.xlu0 %4754
      %v4756 = vadd.f32 %v4726, %v4727
      %4757 = vadd.xlane.f32.xlu0 %v4756
      %v4758 = vpop.xlane.xlu0 %4757
      %v4759 = vadd.f32 %v4728, %v4729
      %4760 = vadd.xlane.f32.xlu0 %v4759
      %v4761 = vpop.xlane.xlu0 %4760
      %v4762 = vadd.f32 %v4730, %v4731
      %4763 = vadd.xlane.f32.xlu0 %v4762
      %v4764 = vpop.xlane.xlu0 %4763
      %v4765 = vadd.f32 %v4732, %v4733
      %4766 = vadd.xlane.f32.xlu0 %v4765
      %v4767 = vpop.xlane.xlu0 %4766
      %v4768 = vadd.f32 %v4734, %v4735
      %4769 = vadd.xlane.f32.xlu0 %v4768
      %v4770 = vpop.xlane.xlu0 %4769
      %v4771 = vadd.f32 %v4736, %v4737
      %4772 = vadd.xlane.f32.xlu0 %v4771
      %v4773 = vpop.xlane.xlu0 %4772
      %v4774 = vadd.f32 %v4738, %v4739
      %4775 = vadd.xlane.f32.xlu0 %v4774
      %v4776 = vpop.xlane.xlu0 %4775
      %v4777 = vadd.f32 %v4740, %v4741
      %4778 = vadd.xlane.f32.xlu0 %v4777
      %v4779 = vpop.xlane.xlu0 %4778
      %v4780 = vsel %vm1226, %v4742, 0.0
      %v4781 = vsel %vm1226, %v4743, 0.0
      %v4782 = vadd.f32 %v4780, %v4781
      %4783 = vadd.xlane.f32.xlu0 %v4782
      %v4784 = vpop.xlane.xlu0 %4783
      %v4785 = vmul.f32 %v4679, 0.00390625
      %v4786 = vmul.f32 %v4682, 0.00390625
      %v4787 = vmul.f32 %v4685, 0.00390625
      %v4788 = vmul.f32 %v4688, 0.00390625
      %v4789 = vmul.f32 %v4691, 0.00390625
      %v4790 = vmul.f32 %v4694, 0.00390625
      %v4791 = vmul.f32 %v4697, 0.00390625
      %v4792 = vmul.f32 %v4700, 0.00390625
      %v4793 = vmul.f32 %v4703, 0.00390625
      %v4794 = vmul.f32 %v4706, 0.00390625
      %v4795 = vmul.f32 %v4709, 0.00390625
      %v4796 = vmul.f32 %v4712, 0.00390625
      %v4797 = vmul.f32 %v4717, 0.00390625
      %v4798 = vmul.f32 %v4746, 0.00390625
      %v4799 = vmul.f32 %v4749, 0.00390625
      %v4800 = vmul.f32 %v4752, 0.00390625
      %v4801 = vmul.f32 %v4755, 0.00390625
      %v4802 = vmul.f32 %v4758, 0.00390625
      %v4803 = vmul.f32 %v4761, 0.00390625
      %v4804 = vmul.f32 %v4764, 0.00390625
      %v4805 = vmul.f32 %v4767, 0.00390625
      %v4806 = vmul.f32 %v4770, 0.00390625
      %v4807 = vmul.f32 %v4773, 0.00390625
      %v4808 = vmul.f32 %v4776, 0.00390625
      %v4809 = vmul.f32 %v4779, 0.00390625
      %v4810 = vmul.f32 %v4784, 0.00390625
      %v4811 = vmul.f32 %v4785, %v4785
      %v4812 = vmul.f32 %v4786, %v4786
      %v4813 = vmul.f32 %v4787, %v4787
      %v4814 = vmul.f32 %v4788, %v4788
      %v4815 = vmul.f32 %v4789, %v4789
      %v4816 = vmul.f32 %v4790, %v4790
      %v4817 = vmul.f32 %v4791, %v4791
      %v4818 = vmul.f32 %v4792, %v4792
      %v4819 = vmul.f32 %v4793, %v4793
      %v4820 = vmul.f32 %v4794, %v4794
      %v4821 = vmul.f32 %v4795, %v4795
      %v4822 = vmul.f32 %v4796, %v4796
      %v4823 = vmul.f32 %v4797, %v4797
      %v4824 = vsub.f32 %v4798, %v4811
      %v4825 = vsub.f32 %v4799, %v4812
      %v4826 = vsub.f32 %v4800, %v4813
      %v4827 = vsub.f32 %v4801, %v4814
      %v4828 = vsub.f32 %v4802, %v4815
      %v4829 = vsub.f32 %v4803, %v4816
      %v4830 = vsub.f32 %v4804, %v4817
      %v4831 = vsub.f32 %v4805, %v4818
      %v4832 = vsub.f32 %v4806, %v4819
      %v4833 = vsub.f32 %v4807, %v4820
      %v4834 = vsub.f32 %v4808, %v4821
      %v4835 = vsub.f32 %v4809, %v4822
      %v4836 = vsub.f32 %v4810, %v4823
      %v4837 = vadd.f32 %v4824, 1e-05
      %v4838 = vadd.f32 %v4825, 1e-05
      %v4839 = vadd.f32 %v4826, 1e-05
      %v4840 = vadd.f32 %v4827, 1e-05
      %v4841 = vadd.f32 %v4828, 1e-05
      %v4842 = vadd.f32 %v4829, 1e-05
      %v4843 = vadd.f32 %v4830, 1e-05
      %v4844 = vadd.f32 %v4831, 1e-05
      %v4845 = vadd.f32 %v4832, 1e-05
      %v4846 = vadd.f32 %v4833, 1e-05
      %v4847 = vadd.f32 %v4834, 1e-05
      %v4848 = vadd.f32 %v4835, 1e-05
      %v4849 = vadd.f32 %v4836, 1e-05
      %v4850 = vrsqrt.pop %v4837
      %v4851 = vrsqrt.pop %v4838
      %v4852 = vrsqrt.pop %v4839
      %v4853 = vrsqrt.pop %v4840
      %v4854 = vrsqrt.pop %v4841
      %v4855 = vrsqrt.pop %v4842
      %v4856 = vrsqrt.pop %v4843
      %v4857 = vrsqrt.pop %v4844
      %v4858 = vrsqrt.pop %v4845
      %v4859 = vrsqrt.pop %v4846
      %v4860 = vrsqrt.pop %v4847
      %v4861 = vrsqrt.pop %v4848
      %v4862 = vrsqrt.pop %v4849
      %v4863 = vsub.f32 %v4611, %v4785
      %v4864 = vsub.f32 %v4613, %v4785
      %v4865 = vsub.f32 %v4615, %v4786
      %v4866 = vsub.f32 %v4617, %v4786
      %v4867 = vsub.f32 %v4621, %v4787
      %v4868 = vsub.f32 %v4623, %v4787
      %v4869 = vsub.f32 %v4625, %v4788
      %v4870 = vsub.f32 %v4627, %v4788
      %v4871 = vsub.f32 %v4631, %v4789
      %v4872 = vsub.f32 %v4633, %v4789
      %v4873 = vsub.f32 %v4635, %v4790
      %v4874 = vsub.f32 %v4637, %v4790
      %v4875 = vsub.f32 %v4641, %v4791
      %v4876 = vsub.f32 %v4643, %v4791
      %v4877 = vsub.f32 %v4645, %v4792
      %v4878 = vsub.f32 %v4647, %v4792
      %v4879 = vsub.f32 %v4651, %v4793
      %v4880 = vsub.f32 %v4653, %v4793
      %v4881 = vsub.f32 %v4655, %v4794
      %v4882 = vsub.f32 %v4657, %v4794
      %v4883 = vsub.f32 %v4661, %v4795
      %v4884 = vsub.f32 %v4663, %v4795
      %v4885 = vsub.f32 %v4665, %v4796
      %v4886 = vsub.f32 %v4667, %v4796
      %v4887 = vsub.f32 %v4671, %v4797
      %v4888 = vsub.f32 %v4673, %v4797
      %v4889 = vmul.f32 %v4863, %v4850
      %v4890 = vmul.f32 %v4864, %v4850
      %v4891 = vmul.f32 %v4865, %v4851
      %v4892 = vmul.f32 %v4866, %v4851
      %v4893 = vmul.f32 %v4867, %v4852
      %v4894 = vmul.f32 %v4868, %v4852
      %v4895 = vmul.f32 %v4869, %v4853
      %v4896 = vmul.f32 %v4870, %v4853
      %v4897 = vmul.f32 %v4871, %v4854
      %v4898 = vmul.f32 %v4872, %v4854
      %v4899 = vmul.f32 %v4873, %v4855
      %v4900 = vmul.f32 %v4874, %v4855
      %v4901 = vmul.f32 %v4875, %v4856
      %v4902 = vmul.f32 %v4876, %v4856
      %v4903 = vmul.f32 %v4877, %v4857
      %v4904 = vmul.f32 %v4878, %v4857
      %v4905 = vmul.f32 %v4879, %v4858
      %v4906 = vmul.f32 %v4880, %v4858
      %v4907 = vmul.f32 %v4881, %v4859
      %v4908 = vmul.f32 %v4882, %v4859
      %v4909 = vmul.f32 %v4883, %v4860
      %v4910 = vmul.f32 %v4884, %v4860
      %v4911 = vmul.f32 %v4885, %v4861
      %v4912 = vmul.f32 %v4886, %v4861
      %v4913 = vmul.f32 %v4887, %v4862
      %v4914 = vmul.f32 %v4888, %v4862
      %v4915 = vmul.f32 %v4889, %v1433
      %v4916 = vmul.f32 %v4890, %v1437
      %v4917 = vmul.f32 %v4891, %v1433
      %v4918 = vmul.f32 %v4892, %v1437
      %v4919 = vmul.f32 %v4893, %v1433
      %v4920 = vmul.f32 %v4894, %v1437
      %v4921 = vmul.f32 %v4895, %v1433
      %v4922 = vmul.f32 %v4896, %v1437
      %v4923 = vmul.f32 %v4897, %v1433
      %v4924 = vmul.f32 %v4898, %v1437
      %v4925 = vmul.f32 %v4899, %v1433
      %v4926 = vmul.f32 %v4900, %v1437
      %v4927 = vmul.f32 %v4901, %v1433
      %v4928 = vmul.f32 %v4902, %v1437
      %v4929 = vmul.f32 %v4903, %v1433
      %v4930 = vmul.f32 %v4904, %v1437
      %v4931 = vmul.f32 %v4905, %v1433
      %v4932 = vmul.f32 %v4906, %v1437
      %v4933 = vmul.f32 %v4907, %v1433
      %v4934 = vmul.f32 %v4908, %v1437
      %v4935 = vmul.f32 %v4909, %v1433
      %v4936 = vmul.f32 %v4910, %v1437
      %v4937 = vmul.f32 %v4911, %v1433
      %v4938 = vmul.f32 %v4912, %v1437
      %v4939 = vmul.f32 %v4913, %v1433
      %v4940 = vmul.f32 %v4914, %v1437
      %v4941 = vadd.f32 %v4915, %v1470
      %v4942 = vadd.f32 %v4916, %v1474
      %v4943 = vadd.f32 %v4917, %v1470
      %v4944 = vadd.f32 %v4918, %v1474
      %v4945 = vadd.f32 %v4919, %v1470
      %v4946 = vadd.f32 %v4920, %v1474
      %v4947 = vadd.f32 %v4921, %v1470
      %v4948 = vadd.f32 %v4922, %v1474
      %v4949 = vadd.f32 %v4923, %v1470
      %v4950 = vadd.f32 %v4924, %v1474
      %v4951 = vadd.f32 %v4925, %v1470
      %v4952 = vadd.f32 %v4926, %v1474
      %v4953 = vadd.f32 %v4927, %v1470
      %v4954 = vadd.f32 %v4928, %v1474
      %v4955 = vadd.f32 %v4929, %v1470
      %v4956 = vadd.f32 %v4930, %v1474
      %v4957 = vadd.f32 %v4931, %v1470
      %v4958 = vadd.f32 %v4932, %v1474
      %v4959 = vadd.f32 %v4933, %v1470
      %v4960 = vadd.f32 %v4934, %v1474
      %v4961 = vadd.f32 %v4935, %v1470
      %v4962 = vadd.f32 %v4936, %v1474
      %v4963 = vadd.f32 %v4937, %v1470
      %v4964 = vadd.f32 %v4938, %v1474
      %v4965 = vadd.f32 %v4939, %v1470
      %v4966 = vadd.f32 %v4940, %v1474
      %s4967 = scalar_lea.vmem %s283, 624
      %4968 = vst [vmem:[%s4967] sm:$0xff] %v4941
      %4969 = vst [vmem:[%s4967 + $0x8] sm:$0xff] %v4942
      %4970 = vst [vmem:[%s4967 + $0x10] sm:$0xff] %v4943
      %4971 = vst [vmem:[%s4967 + $0x18] sm:$0xff] %v4944
      %4972 = vst [vmem:[%s4967 + $0x20] sm:$0xff] %v4945
      %4973 = vst [vmem:[%s4967 + $0x28] sm:$0xff] %v4946
      %4974 = vst [vmem:[%s4967 + $0x30] sm:$0xff] %v4947
      %4975 = vst [vmem:[%s4967 + $0x38] sm:$0xff] %v4948
      %4976 = vst [vmem:[%s4967 + $0x40] sm:$0xff] %v4949
      %4977 = vst [vmem:[%s4967 + $0x48] sm:$0xff] %v4950
      %4978 = vst [vmem:[%s4967 + $0x50] sm:$0xff] %v4951
      %4979 = vst [vmem:[%s4967 + $0x58] sm:$0xff] %v4952
      %4980 = vst [vmem:[%s4967 + $0x60] sm:$0xff] %v4953
      %4981 = vst [vmem:[%s4967 + $0x68] sm:$0xff] %v4954
      %4982 = vst [vmem:[%s4967 + $0x70] sm:$0xff] %v4955
      %4983 = vst [vmem:[%s4967 + $0x78] sm:$0xff] %v4956
      %4984 = vst [vmem:[%s4967 + $0x80] sm:$0xff] %v4957
      %4985 = vst [vmem:[%s4967 + $0x88] sm:$0xff] %v4958
      %4986 = vst [vmem:[%s4967 + $0x90] sm:$0xff] %v4959
      %4987 = vst [vmem:[%s4967 + $0x98] sm:$0xff] %v4960
      %4988 = vst [vmem:[%s4967 + $0xa0] sm:$0xff] %v4961
      %4989 = vst [vmem:[%s4967 + $0xa8] sm:$0xff] %v4962
      %4990 = vst [vmem:[%s4967 + $0xb0] sm:$0xff] %v4963
      %4991 = vst [vmem:[%s4967 + $0xb8] sm:$0xff] %v4964
      %4992 = vst [vmem:[%s4967 + $0xc0] sm:$0xf] %v4965
      %4993 = vst [vmem:[%s4967 + $0xc8] sm:$0xf] %v4966
      %s4994 = smul.u32 4, %s17
      %p4995 = scmp.lt.s32.totalorder %s4994, 7
      %s4996 = scalar_select %p4995, %s4994, 7
      %s4997 = smul.addr %s4996, 26
      %s4998 = smul.addr %s4997, 8
      %s4999 = scalar_lea.vmem %s6, %s4998
      // Predicated region
      $region45: #{tpu_custom_call.1} parent=43 // pred_check
        %p5000 = pneg %p171
      $region46: #{tpu_custom_call.1} parent=43 // pred_check_branch
        %5002 = sbr.rel (%p5000) target = $region48
      $region47: #{tpu_custom_call.1} parent=43 // pred_region
        %s5003 = smul.u32 4, %s17
      $region48: #{tpu_custom_call.1} parent=43 // pred_fallthru
        _
    $region44: #{tpu_custom_call.1} parent=5 // pred_fallthru
      _
    %p5004 = scmp.le.s32.totalorder 2, %s12
    // Predicated region
    $region49: #{tpu_custom_call.1} parent=5 // pred_check
      %p5005 = pneg %p5004
    $region50: #{tpu_custom_call.1} parent=5 // pred_check_branch
      %5007 = sbr.rel (%p5005) target = $region52
    $region51: #{tpu_custom_call.1} parent=5 // pred_region
      %s5008 = ssub.s32 %s12, 2
      // Predicated region
      $region53: #{tpu_custom_call.1} parent=51 // pred_check
        %p5009 = pneg %p177
      $region54: #{tpu_custom_call.1} parent=51 // pred_check_branch
        %5011 = sbr.rel (%p5009) target = $region56
      $region55: #{tpu_custom_call.1} parent=51 // pred_region
        %s5012 = smul.u32 4, %s18
        %p5013 = scmp.lt.s32.totalorder %s5012, 7
        %s5014 = scalar_select %p5013, %s5012, 7
        %s5015 = smul.addr %s5014, 26
        %s5016 = smul.addr %s5015, 8
        %s5017 = scalar_lea.vmem %s6, %s5016
      $region56: #{tpu_custom_call.1} parent=51 // pred_fallthru
        _
    $region52: #{tpu_custom_call.1} parent=5 // pred_fallthru
      _
  $region6: #{tpu_custom_call.1} parent=0 // loop_footer
    %s16 = sadd.s32 1, %s12
  $region7: #{tpu_custom_call.1} parent=0 // loop_footer_branch
    %11 = sbr.rel target = $region3
  $region8: #{tpu_custom_call.1} parent=0 // loop_exit
    _

</llo_original>
